<compile_context>
chip_gen: v5e
topology: v5e:2x2
jax: 0.10.0
libtpu: 0.0.40
codegen_flags: <defaults>
</compile_context>

<pallas_src>
import functools

import jax
import jax.numpy as jnp
import numpy as np
from jax.experimental import pallas as pl
from jax.experimental.pallas import tpu as pltpu


# ----------------------------------------------------------------------------
# Fused FlowStep kernel: actnorm+invconv (as one matmul), 2-layer LSTM coupling
# network, additive coupling.  One grid step = one (batch, time-chunk) tile.
# ----------------------------------------------------------------------------
def _flowstep_kernel(x_ref, cond_ref, feat_ref,
                     w_ref, b_ref,
                     w1z_ref, w1c_ref, w1f_ref, whh1_ref, b1_ref,
                     wih2_ref, whh2_ref, b2_ref,
                     wout_ref, bout_ref,
                     out_ref,
                     h1_s, c1_s, h2_s, c2_s, pre1_s, hseq_s,
                     *, unroll):
    C = x_ref.shape[1]
    TC = x_ref.shape[2]
    C1 = C // 2
    H = whh1_ref.shape[0]

    # ---- fused ActNorm + InvertibleConv1x1:  z = W' @ x + b'   (C, TC)
    z = (jnp.dot(w_ref[...], x_ref[0], preferred_element_type=jnp.float32)
         + b_ref[...])
    z1 = z[:C1, :]                                        # (C1, TC)
    z2 = z[C1:, :]                                        # (C2, TC)

    # ---- batched layer-1 LSTM input projection for the whole chunk.
    # wih1 is pre-split into z1 / cond / feat column blocks, so the channel concat
    # of cat((z1, cond, feat)) becomes a sum of three matmuls (computed once per
    # chunk, not per timestep).  Bias b1 is folded in here (hoisted out of the loop).
    pre1_s[...] = (
        jnp.dot(z1.T, w1z_ref[...], preferred_element_type=jnp.float32)
        + jnp.dot(cond_ref[0].T, w1c_ref[...], preferred_element_type=jnp.float32)
        + jnp.dot(feat_ref[0].T, w1f_ref[...], preferred_element_type=jnp.float32)
        + b1_ref[...])                                    # (TC, 4H)

    # ---- reset recurrent state at the start of each sequence (time-chunk 0)
    @pl.when(pl.program_id(1) == 0)
    def _():
        h1_s[...] = jnp.zeros_like(h1_s)
        c1_s[...] = jnp.zeros_like(c1_s)
        h2_s[...] = jnp.zeros_like(h2_s)
        c2_s[...] = jnp.zeros_like(c2_s)

    # Hoist weight / bias loads out of the recurrent loop (no in-loop .T, no
    # re-broadcast per iteration).
    whh1 = whh1_ref[...]                                  # (H, 4H)
    wih2 = wih2_ref[...]                                  # (H, 4H)
    whh2 = whh2_ref[...]                                  # (H, 4H)
    b2 = b2_ref[...]                                      # (1, 4H)

    def lstm_gates(g, c_prev):                            # PyTorch gate order i,f,g,o
        i = jax.nn.sigmoid(g[:, 0 * H:1 * H])
        f = jax.nn.sigmoid(g[:, 1 * H:2 * H])
        gg = jnp.tanh(g[:, 2 * H:3 * H])
        o = jax.nn.sigmoid(g[:, 3 * H:4 * H])
        c = f * c_prev + i * gg
        h = o * jnp.tanh(c)
        return h, c

    def step(t, carry):
        h1, c1, h2, c2 = carry
        g1 = pre1_s[pl.ds(t, 1), :] + jnp.dot(
            h1, whh1, preferred_element_type=jnp.float32)          # (1, 4H)
        h1, c1 = lstm_gates(g1, c1)
        g2 = (jnp.dot(h1, wih2, preferred_element_type=jnp.float32)
              + jnp.dot(h2, whh2, preferred_element_type=jnp.float32)
              + b2)                                                 # (1, 4H)
        h2, c2 = lstm_gates(g2, c2)
        hseq_s[pl.ds(t, 1), :] = h2                       # stash h2 in VMEM scratch
        return (h1, c1, h2, c2)

    carry = (h1_s[...], c1_s[...], h2_s[...], c2_s[...])
    carry = jax.lax.fori_loop(0, TC, step, carry, unroll=unroll)
    h1_s[...], c1_s[...], h2_s[...], c2_s[...] = carry    # carry state to next chunk

    # ---- batched output projection + additive coupling, stored once per chunk.
    y = (jnp.dot(hseq_s[...], wout_ref[...], preferred_element_type=jnp.float32)
         + bout_ref[...])                                 # (TC, C2)
    out_ref[0, :C1, :] = z1
    out_ref[0, C1:, :] = z2 + y.T


# ----------------------------------------------------------------------------
# FlowStep.normal_flow wrapper
# ----------------------------------------------------------------------------
def flow_step_forward(params, x, cond, feat, logdet):
    B, C, T = x.shape
    C1 = C // 2
    C2 = C - C1
    Cc = cond.shape[1]
    Cf = feat.shape[1]
    H = params["whh1"].shape[0]

    # Fold ActNorm (center + scale) into the invertible 1x1 conv (parameter-only math):
    #   z = W @ ((x + bias) * exp(logs)) = (W * exp(logs)^T) @ x + W @ (bias * exp(logs))
    scale = jnp.exp(params["an_logs"])                    # (C, 1)
    w_fused = params["inv_w"] * scale[:, 0][None, :]      # scale column j by exp(logs_j)
    b_fused = jnp.dot(params["inv_w"], params["an_bias"] * scale)   # (C, 1)

    # logdet: sum(logs)*T from actnorm + log|det W|*T from invconv (param constants).
    logdet = logdet + T * (jnp.sum(params["an_logs"]) + params["inv_w_logdet"])

    # Pre-split wih1 (already stored pre-transposed as (Din, 4H)) into the column
    # blocks matching cat((z1, cond, feat), dim=1) — avoids any in-kernel concat.
    wih1 = params["wih1"]
    w1z = wih1[:C1]
    w1c = wih1[C1:C1 + Cc]
    w1f = wih1[C1 + Cc:]

    # Time chunking: one chunk at toy sizes; 128-wide chunks (lane width, bounded
    # VMEM residency, pipelined DMA) when T allows it.
    TC = 128 if T % 128 == 0 else T
    n_chunks = T // TC
    unroll = TC if TC <= 32 else 8

    kernel = functools.partial(_flowstep_kernel, unroll=unroll)
    const = lambda b, t: (0, 0)

    grid_spec = pltpu.PrefetchScalarGridSpec(
        num_scalar_prefetch=0,
        grid=(B, n_chunks),
        in_specs=[
            pl.BlockSpec((1, C, TC), lambda b, t: (b, 0, t)),    # x
            pl.BlockSpec((1, Cc, TC), lambda b, t: (b, 0, t)),   # cond
            pl.BlockSpec((1, Cf, TC), lambda b, t: (b, 0, t)),   # feat
            pl.BlockSpec((C, C), const),                         # W' (fused conv)
            pl.BlockSpec((C, 1), const),                         # b' (fused bias)
            pl.BlockSpec((C1, 4 * H), const),                    # wih1[z1 block]
            pl.BlockSpec((Cc, 4 * H), const),                    # wih1[cond block]
            pl.BlockSpec((Cf, 4 * H), const),                    # wih1[feat block]
            pl.BlockSpec((H, 4 * H), const),                     # whh1
            pl.BlockSpec((1, 4 * H), const),                     # b1
            pl.BlockSpec((H, 4 * H), const),                     # wih2
            pl.BlockSpec((H, 4 * H), const),                     # whh2
            pl.BlockSpec((1, 4 * H), const),                     # b2
            pl.BlockSpec((H, C2), const),                        # wout
            pl.BlockSpec((1, C2), const),                        # bout
        ],
        out_specs=pl.BlockSpec((1, C, TC), lambda b, t: (b, 0, t)),
        scratch_shapes=[
            pltpu.VMEM((1, H), jnp.float32),        # h1 (persists across chunks)
            pltpu.VMEM((1, H), jnp.float32),        # c1
            pltpu.VMEM((1, H), jnp.float32),        # h2
            pltpu.VMEM((1, H), jnp.float32),        # c2
            pltpu.VMEM((TC, 4 * H), jnp.float32),   # precomputed layer-1 input proj
            pltpu.VMEM((TC, H), jnp.float32),       # per-chunk h2 sequence
        ],
    )

    z_out = pl.pallas_call(
        kernel,
        out_shape=jax.ShapeDtypeStruct((B, C, T), jnp.float32),
        grid_spec=grid_spec,
        compiler_params=pltpu.CompilerParams(
            dimension_semantics=("parallel", "arbitrary")),
    )(x, cond, feat, w_fused, b_fused, w1z, w1c, w1f,
      params["whh1"], params["b1"], params["wih2"], params["whh2"], params["b2"],
      params["wout"], params["bout"])

    return z_out, cond, logdet


# ----------------------------------------------------------------------------
# Deterministic synthetic parameter initialization (LSTM weights stored
# pre-transposed relative to PyTorch: wih (in,4H), whh (H,4H), wout (H,C2)).
# ----------------------------------------------------------------------------
def init_params(key, C, Cc, Cf, H):
    C1 = C // 2
    C2 = C - C1
    Din = C1 + Cc + Cf
    ks = jax.random.split(key, 11)
    s = 0.1

    an_bias = s * jax.random.normal(ks[0], (C, 1), jnp.float32)
    an_logs = s * jax.random.normal(ks[1], (C, 1), jnp.float32)

    # InvertibleConv1x1: random orthogonal init (QR of gaussian), as in the reference.
    w0 = np.asarray(jax.random.normal(ks[2], (C, C), jnp.float32), dtype=np.float64)
    inv_w = np.linalg.qr(w0)[0].astype(np.float32)
    # TODO(synk): torch.slogdet runs inside forward; W is a frozen parameter here,
    # so its log|det| is precomputed on the host (no in-kernel determinant).
    inv_w_logdet = np.float32(np.linalg.slogdet(inv_w.astype(np.float64))[1])

    wih1 = s * jax.random.normal(ks[3], (Din, 4 * H), jnp.float32)
    whh1 = s * jax.random.normal(ks[4], (H, 4 * H), jnp.float32)
    b1 = s * jax.random.normal(ks[5], (1, 4 * H), jnp.float32)
    wih2 = s * jax.random.normal(ks[6], (H, 4 * H), jnp.float32)
    whh2 = s * jax.random.normal(ks[7], (H, 4 * H), jnp.float32)
    b2 = s * jax.random.normal(ks[8], (1, 4 * H), jnp.float32)

    # Final projection: LinearZeroInit in the reference (zero-init). Small nonzero
    # deterministic values so the coupling network visibly contributes.
    wout = 0.01 * jax.random.normal(ks[9], (H, C2), jnp.float32)
    bout = 0.01 * jax.random.normal(ks[10], (1, C2), jnp.float32)

    return dict(an_bias=an_bias, an_logs=an_logs,
                inv_w=jnp.asarray(inv_w), inv_w_logdet=jnp.asarray(inv_w_logdet),
                wih1=wih1, whh1=whh1, b1=b1,
                wih2=wih2, whh2=whh2, b2=b2,
                wout=wout, bout=bout)


# ----------------------------------------------------------------------------
# Pure-JAX reference (mirrors the PyTorch forward) for a correctness check
# ----------------------------------------------------------------------------
def reference_forward(p, x, cond, feat, logdet):
    B, C, T = x.shape
    C1 = C // 2
    z = (x + p["an_bias"][None]) * jnp.exp(p["an_logs"][None])
    z = jnp.einsum("ij,bjt->bit", p["inv_w"], z)
    logdet = logdet + T * (jnp.sum(p["an_logs"]) + p["inv_w_logdet"])
    z1, z2 = z[:, :C1, :], z[:, C1:, :]
    xt = jnp.transpose(jnp.concatenate([z1, cond, feat], axis=1), (2, 0, 1))  # (T,B,Din)
    H = p["whh1"].shape[0]

    def cell(xt_, h, c, wih, whh, b):
        g = xt_ @ wih + h @ whh + b
        i, f, gg, o = jnp.split(g, 4, axis=-1)
        c = jax.nn.sigmoid(f) * c + jax.nn.sigmoid(i) * jnp.tanh(gg)
        h = jax.nn.sigmoid(o) * jnp.tanh(c)
        return h, c

    def scan_fn(carry, xt_):
        h1, c1, h2, c2 = carry
        h1, c1 = cell(xt_, h1, c1, p["wih1"], p["whh1"], p["b1"])
        h2, c2 = cell(h1, h2, c2, p["wih2"], p["whh2"], p["b2"])
        y = h2 @ p["wout"] + p["bout"]
        return (h1, c1, h2, c2), y

    z0 = jnp.zeros((B, H), jnp.float32)
    _, ys = jax.lax.scan(scan_fn, (z0, z0, z0, z0), xt)        # (T, B, C2)
    z2_new = z2 + jnp.transpose(ys, (1, 2, 0))
    return jnp.concatenate([z1, z2_new], axis=1), logdet


if __name__ == "__main__":
    B, C, T = 2, 8, 16       # batch, in_channels, timesteps
    Cc, Cf, H = 4, 4, 32     # cond channels, feat channels, hidden_channels

    key = jax.random.PRNGKey(0)
    kp, kx, kc, kf = jax.random.split(key, 4)
    params = init_params(kp, C, Cc, Cf, H)

    x = jax.random.normal(kx, (B, C, T), jnp.float32)
    cond = jax.random.normal(kc, (B, Cc, T), jnp.float32)
    feat = jax.random.normal(kf, (B, Cf, T), jnp.float32)
    logdet0 = jnp.zeros((B,), jnp.float32)

    z, cond_out, logdet = jax.jit(flow_step_forward)(params, x, cond, feat, logdet0)
    jax.block_until_ready((z, cond_out, logdet))

    z_ref, logdet_ref = reference_forward(params, x, cond, feat, logdet0)
    np.testing.assert_allclose(np.asarray(z), np.asarray(z_ref), rtol=1e-4, atol=1e-4)
    np.testing.assert_allclose(np.asarray(logdet), np.asarray(logdet_ref),
                               rtol=1e-4, atol=1e-4)

    print("KERNEL_OK")
</pallas_src>

<mosaic_0001>
module attributes {stable_mosaic.version = 11 : i64} {
  func.func @_flowstep_kernel(%arg0: i32, %arg1: i32, %arg2: memref<1x8x16xf32, #tpu.memory_space<vmem>>, %arg3: memref<1x4x16xf32, #tpu.memory_space<vmem>>, %arg4: memref<1x4x16xf32, #tpu.memory_space<vmem>>, %arg5: memref<8x8xf32, #tpu.memory_space<vmem>>, %arg6: memref<8x1xf32, #tpu.memory_space<vmem>>, %arg7: memref<4x128xf32, #tpu.memory_space<vmem>>, %arg8: memref<4x128xf32, #tpu.memory_space<vmem>>, %arg9: memref<4x128xf32, #tpu.memory_space<vmem>>, %arg10: memref<32x128xf32, #tpu.memory_space<vmem>>, %arg11: memref<1x128xf32, #tpu.memory_space<vmem>>, %arg12: memref<32x128xf32, #tpu.memory_space<vmem>>, %arg13: memref<32x128xf32, #tpu.memory_space<vmem>>, %arg14: memref<1x128xf32, #tpu.memory_space<vmem>>, %arg15: memref<32x4xf32, #tpu.memory_space<vmem>>, %arg16: memref<1x4xf32, #tpu.memory_space<vmem>>, %arg17: memref<1x8x16xf32, #tpu.memory_space<vmem>>, %arg18: memref<1x32xf32, #tpu.memory_space<vmem>>, %arg19: memref<1x32xf32, #tpu.memory_space<vmem>>, %arg20: memref<1x32xf32, #tpu.memory_space<vmem>>, %arg21: memref<1x32xf32, #tpu.memory_space<vmem>>, %arg22: memref<16x128xf32, #tpu.memory_space<vmem>>, %arg23: memref<16x32xf32, #tpu.memory_space<vmem>>) attributes {dimension_semantics = [#tpu.dimension_semantics<parallel>, #tpu.dimension_semantics<arbitrary>], iteration_bounds = array<i64: 2, 1>, scalar_prefetch = 0 : i64, scratch_operands = 6 : i64, tpu.core_type = #tpu.core_type<tc>, window_params = [{transform_indices = @transform_0, window_bounds = array<i64: 1, 8, 16>}, {transform_indices = @transform_1, window_bounds = array<i64: 1, 4, 16>}, {transform_indices = @transform_2, window_bounds = array<i64: 1, 4, 16>}, {pipeline_mode = #tpu.pipeline_mode<synchronous>, transform_indices = @transform_3, window_bounds = array<i64: 8, 8>}, {pipeline_mode = #tpu.pipeline_mode<synchronous>, transform_indices = @transform_4, window_bounds = array<i64: 8, 1>}, {pipeline_mode = #tpu.pipeline_mode<synchronous>, transform_indices = @transform_5, window_bounds = array<i64: 4, 128>}, {pipeline_mode = #tpu.pipeline_mode<synchronous>, transform_indices = @transform_6, window_bounds = array<i64: 4, 128>}, {pipeline_mode = #tpu.pipeline_mode<synchronous>, transform_indices = @transform_7, window_bounds = array<i64: 4, 128>}, {pipeline_mode = #tpu.pipeline_mode<synchronous>, transform_indices = @transform_8, window_bounds = array<i64: 32, 128>}, {pipeline_mode = #tpu.pipeline_mode<synchronous>, transform_indices = @transform_9, window_bounds = array<i64: 1, 128>}, {pipeline_mode = #tpu.pipeline_mode<synchronous>, transform_indices = @transform_10, window_bounds = array<i64: 32, 128>}, {pipeline_mode = #tpu.pipeline_mode<synchronous>, transform_indices = @transform_11, window_bounds = array<i64: 32, 128>}, {pipeline_mode = #tpu.pipeline_mode<synchronous>, transform_indices = @transform_12, window_bounds = array<i64: 1, 128>}, {pipeline_mode = #tpu.pipeline_mode<synchronous>, transform_indices = @transform_13, window_bounds = array<i64: 32, 4>}, {pipeline_mode = #tpu.pipeline_mode<synchronous>, transform_indices = @transform_14, window_bounds = array<i64: 1, 4>}, {transform_indices = @transform_15, window_bounds = array<i64: 1, 8, 16>}]} {
    %c0 = arith.constant 0 : index
    %c0_0 = arith.constant 0 : index
    %0 = vector.load %arg5[%c0, %c0_0] : memref<8x8xf32, #tpu.memory_space<vmem>>, vector<8x8xf32>
    %c0_1 = arith.constant 0 : index
    %c0_2 = arith.constant 0 : index
    %c0_3 = arith.constant 0 : index
    %1 = vector.load %arg2[%c0_1, %c0_2, %c0_3] : memref<1x8x16xf32, #tpu.memory_space<vmem>>, vector<1x8x16xf32>
    %2 = vector.shape_cast %1 : vector<1x8x16xf32> to vector<8x16xf32>
    %cst = arith.constant dense<0.000000e+00> : vector<8x16xf32>
    %3 = tpu.matmul %0, %2, %cst {dimension_numbers = #tpu.dot_dimension_numbers<[1], [0], [0], [1], [0, 0, 1, 1], [], []>} : vector<8x8xf32>, vector<8x16xf32>, vector<8x16xf32> -> vector<8x16xf32>
    %c0_4 = arith.constant 0 : index
    %c0_5 = arith.constant 0 : index
    %4 = vector.load %arg6[%c0_4, %c0_5] : memref<8x1xf32, #tpu.memory_space<vmem>>, vector<8x1xf32>
    %5 = vector.broadcast %4 : vector<8x1xf32> to vector<8x16xf32>
    %6 = arith.addf %3, %5 : vector<8x16xf32>
    %7 = vector.extract_strided_slice %6 {offsets = [0, 0], sizes = [4, 16], strides = [1, 1]} : vector<8x16xf32> to vector<4x16xf32>
    %8 = vector.extract_strided_slice %6 {offsets = [4, 0], sizes = [4, 16], strides = [1, 1]} : vector<8x16xf32> to vector<4x16xf32>
    %9 = tpu.transpose %7, [1, 0] : vector<4x16xf32> -> vector<16x4xf32>
    %c0_6 = arith.constant 0 : index
    %c0_7 = arith.constant 0 : index
    %10 = vector.load %arg7[%c0_6, %c0_7] : memref<4x128xf32, #tpu.memory_space<vmem>>, vector<4x128xf32>
    %cst_8 = arith.constant dense<0.000000e+00> : vector<16x128xf32>
    %11 = tpu.matmul %9, %10, %cst_8 {dimension_numbers = #tpu.dot_dimension_numbers<[1], [0], [0], [1], [0, 0, 1, 1], [], []>} : vector<16x4xf32>, vector<4x128xf32>, vector<16x128xf32> -> vector<16x128xf32>
    %c0_9 = arith.constant 0 : index
    %c0_10 = arith.constant 0 : index
    %c0_11 = arith.constant 0 : index
    %12 = vector.load %arg3[%c0_9, %c0_10, %c0_11] : memref<1x4x16xf32, #tpu.memory_space<vmem>>, vector<1x4x16xf32>
    %13 = vector.shape_cast %12 : vector<1x4x16xf32> to vector<4x16xf32>
    %14 = tpu.transpose %13, [1, 0] : vector<4x16xf32> -> vector<16x4xf32>
    %c0_12 = arith.constant 0 : index
    %c0_13 = arith.constant 0 : index
    %15 = vector.load %arg8[%c0_12, %c0_13] : memref<4x128xf32, #tpu.memory_space<vmem>>, vector<4x128xf32>
    %cst_14 = arith.constant dense<0.000000e+00> : vector<16x128xf32>
    %16 = tpu.matmul %14, %15, %cst_14 {dimension_numbers = #tpu.dot_dimension_numbers<[1], [0], [0], [1], [0, 0, 1, 1], [], []>} : vector<16x4xf32>, vector<4x128xf32>, vector<16x128xf32> -> vector<16x128xf32>
    %17 = arith.addf %11, %16 : vector<16x128xf32>
    %c0_15 = arith.constant 0 : index
    %c0_16 = arith.constant 0 : index
    %c0_17 = arith.constant 0 : index
    %18 = vector.load %arg4[%c0_15, %c0_16, %c0_17] : memref<1x4x16xf32, #tpu.memory_space<vmem>>, vector<1x4x16xf32>
    %19 = vector.shape_cast %18 : vector<1x4x16xf32> to vector<4x16xf32>
    %20 = tpu.transpose %19, [1, 0] : vector<4x16xf32> -> vector<16x4xf32>
    %c0_18 = arith.constant 0 : index
    %c0_19 = arith.constant 0 : index
    %21 = vector.load %arg9[%c0_18, %c0_19] : memref<4x128xf32, #tpu.memory_space<vmem>>, vector<4x128xf32>
    %cst_20 = arith.constant dense<0.000000e+00> : vector<16x128xf32>
    %22 = tpu.matmul %20, %21, %cst_20 {dimension_numbers = #tpu.dot_dimension_numbers<[1], [0], [0], [1], [0, 0, 1, 1], [], []>} : vector<16x4xf32>, vector<4x128xf32>, vector<16x128xf32> -> vector<16x128xf32>
    %23 = arith.addf %17, %22 : vector<16x128xf32>
    %c0_21 = arith.constant 0 : index
    %c0_22 = arith.constant 0 : index
    %24 = vector.load %arg11[%c0_21, %c0_22] : memref<1x128xf32, #tpu.memory_space<vmem>>, vector<1x128xf32>
    %25 = vector.broadcast %24 : vector<1x128xf32> to vector<16x128xf32>
    %26 = arith.addf %23, %25 : vector<16x128xf32>
    %c0_23 = arith.constant 0 : index
    %c0_24 = arith.constant 0 : index
    %27 = vector.load %arg22[%c0_23, %c0_24] : memref<16x128xf32, #tpu.memory_space<vmem>>, vector<16x128xf32>
    tpu.vector_store %arg22[%c0_23, %c0_24], %26 {strides = array<i32>} : memref<16x128xf32, #tpu.memory_space<vmem>>, vector<16x128xf32>,
    %c0_i32 = arith.constant 0 : i32
    %28 = arith.cmpi eq, %arg1, %c0_i32 : i32
    %29 = arith.extui %28 : i1 to i32
    %c0_i32_25 = arith.constant 0 : i32
    %30 = arith.cmpi ne, %29, %c0_i32_25 : i32
    scf.if %30 {
      %cst_239 = arith.constant 0.000000e+00 : f32
      %1017 = vector.broadcast %cst_239 : f32 to vector<1x32xf32>
      %c0_240 = arith.constant 0 : index
      %c0_241 = arith.constant 0 : index
      %1018 = vector.load %arg18[%c0_240, %c0_241] : memref<1x32xf32, #tpu.memory_space<vmem>>, vector<1x32xf32>
      tpu.vector_store %arg18[%c0_240, %c0_241], %1017 {strides = array<i32>} : memref<1x32xf32, #tpu.memory_space<vmem>>, vector<1x32xf32>,
      %cst_242 = arith.constant 0.000000e+00 : f32
      %1019 = vector.broadcast %cst_242 : f32 to vector<1x32xf32>
      %c0_243 = arith.constant 0 : index
      %c0_244 = arith.constant 0 : index
      %1020 = vector.load %arg19[%c0_243, %c0_244] : memref<1x32xf32, #tpu.memory_space<vmem>>, vector<1x32xf32>
      tpu.vector_store %arg19[%c0_243, %c0_244], %1019 {strides = array<i32>} : memref<1x32xf32, #tpu.memory_space<vmem>>, vector<1x32xf32>,
      %cst_245 = arith.constant 0.000000e+00 : f32
      %1021 = vector.broadcast %cst_245 : f32 to vector<1x32xf32>
      %c0_246 = arith.constant 0 : index
      %c0_247 = arith.constant 0 : index
      %1022 = vector.load %arg20[%c0_246, %c0_247] : memref<1x32xf32, #tpu.memory_space<vmem>>, vector<1x32xf32>
      tpu.vector_store %arg20[%c0_246, %c0_247], %1021 {strides = array<i32>} : memref<1x32xf32, #tpu.memory_space<vmem>>, vector<1x32xf32>,
      %cst_248 = arith.constant 0.000000e+00 : f32
      %1023 = vector.broadcast %cst_248 : f32 to vector<1x32xf32>
      %c0_249 = arith.constant 0 : index
      %c0_250 = arith.constant 0 : index
      %1024 = vector.load %arg21[%c0_249, %c0_250] : memref<1x32xf32, #tpu.memory_space<vmem>>, vector<1x32xf32>
      tpu.vector_store %arg21[%c0_249, %c0_250], %1023 {strides = array<i32>} : memref<1x32xf32, #tpu.memory_space<vmem>>, vector<1x32xf32>,
    } else {
    }
    %c0_26 = arith.constant 0 : index
    %c0_27 = arith.constant 0 : index
    %31 = vector.load %arg10[%c0_26, %c0_27] : memref<32x128xf32, #tpu.memory_space<vmem>>, vector<32x128xf32>
    %c0_28 = arith.constant 0 : index
    %c0_29 = arith.constant 0 : index
    %32 = vector.load %arg12[%c0_28, %c0_29] : memref<32x128xf32, #tpu.memory_space<vmem>>, vector<32x128xf32>
    %c0_30 = arith.constant 0 : index
    %c0_31 = arith.constant 0 : index
    %33 = vector.load %arg13[%c0_30, %c0_31] : memref<32x128xf32, #tpu.memory_space<vmem>>, vector<32x128xf32>
    %c0_32 = arith.constant 0 : index
    %c0_33 = arith.constant 0 : index
    %34 = vector.load %arg14[%c0_32, %c0_33] : memref<1x128xf32, #tpu.memory_space<vmem>>, vector<1x128xf32>
    %c0_34 = arith.constant 0 : index
    %c0_35 = arith.constant 0 : index
    %35 = vector.load %arg18[%c0_34, %c0_35] : memref<1x32xf32, #tpu.memory_space<vmem>>, vector<1x32xf32>
    %c0_36 = arith.constant 0 : index
    %c0_37 = arith.constant 0 : index
    %36 = vector.load %arg19[%c0_36, %c0_37] : memref<1x32xf32, #tpu.memory_space<vmem>>, vector<1x32xf32>
    %c0_38 = arith.constant 0 : index
    %c0_39 = arith.constant 0 : index
    %37 = vector.load %arg20[%c0_38, %c0_39] : memref<1x32xf32, #tpu.memory_space<vmem>>, vector<1x32xf32>
    %c0_40 = arith.constant 0 : index
    %c0_41 = arith.constant 0 : index
    %38 = vector.load %arg21[%c0_40, %c0_41] : memref<1x32xf32, #tpu.memory_space<vmem>>, vector<1x32xf32>
    %c0_i32_42 = arith.constant 0 : i32
    %39 = arith.index_cast %c0_i32_42 : i32 to index
    %c0_43 = arith.constant 0 : index
    %40 = vector.load %arg22[%39, %c0_43] : memref<16x128xf32, #tpu.memory_space<vmem>>, vector<1x128xf32>
    %cst_44 = arith.constant dense<0.000000e+00> : vector<1x128xf32>
    %41 = tpu.matmul %35, %31, %cst_44 {dimension_numbers = #tpu.dot_dimension_numbers<[1], [0], [0], [1], [0, 0, 1, 1], [], []>} : vector<1x32xf32>, vector<32x128xf32>, vector<1x128xf32> -> vector<1x128xf32>
    %42 = arith.addf %40, %41 : vector<1x128xf32>
    %43 = vector.extract_strided_slice %42 {offsets = [0, 0], sizes = [1, 32], strides = [1, 1]} : vector<1x128xf32> to vector<1x32xf32>
    %44 = arith.negf %43 : vector<1x32xf32>
    %45 = math.exp %44 : vector<1x32xf32>
    %cst_45 = arith.constant 1.000000e+00 : f32
    %46 = vector.broadcast %cst_45 : f32 to vector<1x32xf32>
    %47 = arith.addf %46, %45 : vector<1x32xf32>
    %48 = arith.divf %46, %47 : vector<1x32xf32>
    %49 = vector.extract_strided_slice %42 {offsets = [0, 32], sizes = [1, 32], strides = [1, 1]} : vector<1x128xf32> to vector<1x32xf32>
    %50 = arith.negf %49 : vector<1x32xf32>
    %51 = math.exp %50 : vector<1x32xf32>
    %cst_46 = arith.constant 1.000000e+00 : f32
    %52 = vector.broadcast %cst_46 : f32 to vector<1x32xf32>
    %53 = arith.addf %52, %51 : vector<1x32xf32>
    %54 = arith.divf %52, %53 : vector<1x32xf32>
    %55 = vector.extract_strided_slice %42 {offsets = [0, 64], sizes = [1, 32], strides = [1, 1]} : vector<1x128xf32> to vector<1x32xf32>
    %56 = math.tanh %55 : vector<1x32xf32>
    %57 = vector.extract_strided_slice %42 {offsets = [0, 96], sizes = [1, 32], strides = [1, 1]} : vector<1x128xf32> to vector<1x32xf32>
    %58 = arith.negf %57 : vector<1x32xf32>
    %59 = math.exp %58 : vector<1x32xf32>
    %cst_47 = arith.constant 1.000000e+00 : f32
    %60 = vector.broadcast %cst_47 : f32 to vector<1x32xf32>
    %61 = arith.addf %60, %59 : vector<1x32xf32>
    %62 = arith.divf %60, %61 : vector<1x32xf32>
    %63 = arith.mulf %54, %36 : vector<1x32xf32>
    %64 = arith.mulf %48, %56 : vector<1x32xf32>
    %65 = arith.addf %63, %64 : vector<1x32xf32>
    %66 = math.tanh %65 : vector<1x32xf32>
    %67 = arith.mulf %62, %66 : vector<1x32xf32>
    %cst_48 = arith.constant dense<0.000000e+00> : vector<1x128xf32>
    %68 = tpu.matmul %67, %32, %cst_48 {dimension_numbers = #tpu.dot_dimension_numbers<[1], [0], [0], [1], [0, 0, 1, 1], [], []>} : vector<1x32xf32>, vector<32x128xf32>, vector<1x128xf32> -> vector<1x128xf32>
    %cst_49 = arith.constant dense<0.000000e+00> : vector<1x128xf32>
    %69 = tpu.matmul %37, %33, %cst_49 {dimension_numbers = #tpu.dot_dimension_numbers<[1], [0], [0], [1], [0, 0, 1, 1], [], []>} : vector<1x32xf32>, vector<32x128xf32>, vector<1x128xf32> -> vector<1x128xf32>
    %70 = arith.addf %68, %69 : vector<1x128xf32>
    %71 = arith.addf %70, %34 : vector<1x128xf32>
    %72 = vector.extract_strided_slice %71 {offsets = [0, 0], sizes = [1, 32], strides = [1, 1]} : vector<1x128xf32> to vector<1x32xf32>
    %73 = arith.negf %72 : vector<1x32xf32>
    %74 = math.exp %73 : vector<1x32xf32>
    %cst_50 = arith.constant 1.000000e+00 : f32
    %75 = vector.broadcast %cst_50 : f32 to vector<1x32xf32>
    %76 = arith.addf %75, %74 : vector<1x32xf32>
    %77 = arith.divf %75, %76 : vector<1x32xf32>
    %78 = vector.extract_strided_slice %71 {offsets = [0, 32], sizes = [1, 32], strides = [1, 1]} : vector<1x128xf32> to vector<1x32xf32>
    %79 = arith.negf %78 : vector<1x32xf32>
    %80 = math.exp %79 : vector<1x32xf32>
    %cst_51 = arith.constant 1.000000e+00 : f32
    %81 = vector.broadcast %cst_51 : f32 to vector<1x32xf32>
    %82 = arith.addf %81, %80 : vector<1x32xf32>
    %83 = arith.divf %81, %82 : vector<1x32xf32>
    %84 = vector.extract_strided_slice %71 {offsets = [0, 64], sizes = [1, 32], strides = [1, 1]} : vector<1x128xf32> to vector<1x32xf32>
    %85 = math.tanh %84 : vector<1x32xf32>
    %86 = vector.extract_strided_slice %71 {offsets = [0, 96], sizes = [1, 32], strides = [1, 1]} : vector<1x128xf32> to vector<1x32xf32>
    %87 = arith.negf %86 : vector<1x32xf32>
    %88 = math.exp %87 : vector<1x32xf32>
    %cst_52 = arith.constant 1.000000e+00 : f32
    %89 = vector.broadcast %cst_52 : f32 to vector<1x32xf32>
    %90 = arith.addf %89, %88 : vector<1x32xf32>
    %91 = arith.divf %89, %90 : vector<1x32xf32>
    %92 = arith.mulf %83, %38 : vector<1x32xf32>
    %93 = arith.mulf %77, %85 : vector<1x32xf32>
    %94 = arith.addf %92, %93 : vector<1x32xf32>
    %95 = math.tanh %94 : vector<1x32xf32>
    %96 = arith.mulf %91, %95 : vector<1x32xf32>
    %97 = arith.index_cast %c0_i32_42 : i32 to index
    %c0_53 = arith.constant 0 : index
    %98 = vector.load %arg23[%97, %c0_53] : memref<16x32xf32, #tpu.memory_space<vmem>>, vector<1x32xf32>
    tpu.vector_store %arg23[%97, %c0_53], %96 {strides = array<i32>} : memref<16x32xf32, #tpu.memory_space<vmem>>, vector<1x32xf32>,
    %c1_i32 = arith.constant 1 : i32
    %99 = arith.index_cast %c1_i32 : i32 to index
    %c0_54 = arith.constant 0 : index
    %100 = vector.load %arg22[%99, %c0_54] : memref<16x128xf32, #tpu.memory_space<vmem>>, vector<1x128xf32>
    %cst_55 = arith.constant dense<0.000000e+00> : vector<1x128xf32>
    %101 = tpu.matmul %67, %31, %cst_55 {dimension_numbers = #tpu.dot_dimension_numbers<[1], [0], [0], [1], [0, 0, 1, 1], [], []>} : vector<1x32xf32>, vector<32x128xf32>, vector<1x128xf32> -> vector<1x128xf32>
    %102 = arith.addf %100, %101 : vector<1x128xf32>
    %103 = vector.extract_strided_slice %102 {offsets = [0, 0], sizes = [1, 32], strides = [1, 1]} : vector<1x128xf32> to vector<1x32xf32>
    %104 = arith.negf %103 : vector<1x32xf32>
    %105 = math.exp %104 : vector<1x32xf32>
    %cst_56 = arith.constant 1.000000e+00 : f32
    %106 = vector.broadcast %cst_56 : f32 to vector<1x32xf32>
    %107 = arith.addf %106, %105 : vector<1x32xf32>
    %108 = arith.divf %106, %107 : vector<1x32xf32>
    %109 = vector.extract_strided_slice %102 {offsets = [0, 32], sizes = [1, 32], strides = [1, 1]} : vector<1x128xf32> to vector<1x32xf32>
    %110 = arith.negf %109 : vector<1x32xf32>
    %111 = math.exp %110 : vector<1x32xf32>
    %cst_57 = arith.constant 1.000000e+00 : f32
    %112 = vector.broadcast %cst_57 : f32 to vector<1x32xf32>
    %113 = arith.addf %112, %111 : vector<1x32xf32>
    %114 = arith.divf %112, %113 : vector<1x32xf32>
    %115 = vector.extract_strided_slice %102 {offsets = [0, 64], sizes = [1, 32], strides = [1, 1]} : vector<1x128xf32> to vector<1x32xf32>
    %116 = math.tanh %115 : vector<1x32xf32>
    %117 = vector.extract_strided_slice %102 {offsets = [0, 96], sizes = [1, 32], strides = [1, 1]} : vector<1x128xf32> to vector<1x32xf32>
    %118 = arith.negf %117 : vector<1x32xf32>
    %119 = math.exp %118 : vector<1x32xf32>
    %cst_58 = arith.constant 1.000000e+00 : f32
    %120 = vector.broadcast %cst_58 : f32 to vector<1x32xf32>
    %121 = arith.addf %120, %119 : vector<1x32xf32>
    %122 = arith.divf %120, %121 : vector<1x32xf32>
    %123 = arith.mulf %114, %65 : vector<1x32xf32>
    %124 = arith.mulf %108, %116 : vector<1x32xf32>
    %125 = arith.addf %123, %124 : vector<1x32xf32>
    %126 = math.tanh %125 : vector<1x32xf32>
    %127 = arith.mulf %122, %126 : vector<1x32xf32>
    %cst_59 = arith.constant dense<0.000000e+00> : vector<1x128xf32>
    %128 = tpu.matmul %127, %32, %cst_59 {dimension_numbers = #tpu.dot_dimension_numbers<[1], [0], [0], [1], [0, 0, 1, 1], [], []>} : vector<1x32xf32>, vector<32x128xf32>, vector<1x128xf32> -> vector<1x128xf32>
    %cst_60 = arith.constant dense<0.000000e+00> : vector<1x128xf32>
    %129 = tpu.matmul %96, %33, %cst_60 {dimension_numbers = #tpu.dot_dimension_numbers<[1], [0], [0], [1], [0, 0, 1, 1], [], []>} : vector<1x32xf32>, vector<32x128xf32>, vector<1x128xf32> -> vector<1x128xf32>
    %130 = arith.addf %128, %129 : vector<1x128xf32>
    %131 = arith.addf %130, %34 : vector<1x128xf32>
    %132 = vector.extract_strided_slice %131 {offsets = [0, 0], sizes = [1, 32], strides = [1, 1]} : vector<1x128xf32> to vector<1x32xf32>
    %133 = arith.negf %132 : vector<1x32xf32>
    %134 = math.exp %133 : vector<1x32xf32>
    %cst_61 = arith.constant 1.000000e+00 : f32
    %135 = vector.broadcast %cst_61 : f32 to vector<1x32xf32>
    %136 = arith.addf %135, %134 : vector<1x32xf32>
    %137 = arith.divf %135, %136 : vector<1x32xf32>
    %138 = vector.extract_strided_slice %131 {offsets = [0, 32], sizes = [1, 32], strides = [1, 1]} : vector<1x128xf32> to vector<1x32xf32>
    %139 = arith.negf %138 : vector<1x32xf32>
    %140 = math.exp %139 : vector<1x32xf32>
    %cst_62 = arith.constant 1.000000e+00 : f32
    %141 = vector.broadcast %cst_62 : f32 to vector<1x32xf32>
    %142 = arith.addf %141, %140 : vector<1x32xf32>
    %143 = arith.divf %141, %142 : vector<1x32xf32>
    %144 = vector.extract_strided_slice %131 {offsets = [0, 64], sizes = [1, 32], strides = [1, 1]} : vector<1x128xf32> to vector<1x32xf32>
    %145 = math.tanh %144 : vector<1x32xf32>
    %146 = vector.extract_strided_slice %131 {offsets = [0, 96], sizes = [1, 32], strides = [1, 1]} : vector<1x128xf32> to vector<1x32xf32>
    %147 = arith.negf %146 : vector<1x32xf32>
    %148 = math.exp %147 : vector<1x32xf32>
    %cst_63 = arith.constant 1.000000e+00 : f32
    %149 = vector.broadcast %cst_63 : f32 to vector<1x32xf32>
    %150 = arith.addf %149, %148 : vector<1x32xf32>
    %151 = arith.divf %149, %150 : vector<1x32xf32>
    %152 = arith.mulf %143, %94 : vector<1x32xf32>
    %153 = arith.mulf %137, %145 : vector<1x32xf32>
    %154 = arith.addf %152, %153 : vector<1x32xf32>
    %155 = math.tanh %154 : vector<1x32xf32>
    %156 = arith.mulf %151, %155 : vector<1x32xf32>
    %157 = arith.index_cast %c1_i32 : i32 to index
    %c0_64 = arith.constant 0 : index
    %158 = vector.load %arg23[%157, %c0_64] : memref<16x32xf32, #tpu.memory_space<vmem>>, vector<1x32xf32>
    tpu.vector_store %arg23[%157, %c0_64], %156 {strides = array<i32>} : memref<16x32xf32, #tpu.memory_space<vmem>>, vector<1x32xf32>,
    %c2_i32 = arith.constant 2 : i32
    %159 = arith.index_cast %c2_i32 : i32 to index
    %c0_65 = arith.constant 0 : index
    %160 = vector.load %arg22[%159, %c0_65] : memref<16x128xf32, #tpu.memory_space<vmem>>, vector<1x128xf32>
    %cst_66 = arith.constant dense<0.000000e+00> : vector<1x128xf32>
    %161 = tpu.matmul %127, %31, %cst_66 {dimension_numbers = #tpu.dot_dimension_numbers<[1], [0], [0], [1], [0, 0, 1, 1], [], []>} : vector<1x32xf32>, vector<32x128xf32>, vector<1x128xf32> -> vector<1x128xf32>
    %162 = arith.addf %160, %161 : vector<1x128xf32>
    %163 = vector.extract_strided_slice %162 {offsets = [0, 0], sizes = [1, 32], strides = [1, 1]} : vector<1x128xf32> to vector<1x32xf32>
    %164 = arith.negf %163 : vector<1x32xf32>
    %165 = math.exp %164 : vector<1x32xf32>
    %cst_67 = arith.constant 1.000000e+00 : f32
    %166 = vector.broadcast %cst_67 : f32 to vector<1x32xf32>
    %167 = arith.addf %166, %165 : vector<1x32xf32>
    %168 = arith.divf %166, %167 : vector<1x32xf32>
    %169 = vector.extract_strided_slice %162 {offsets = [0, 32], sizes = [1, 32], strides = [1, 1]} : vector<1x128xf32> to vector<1x32xf32>
    %170 = arith.negf %169 : vector<1x32xf32>
    %171 = math.exp %170 : vector<1x32xf32>
    %cst_68 = arith.constant 1.000000e+00 : f32
    %172 = vector.broadcast %cst_68 : f32 to vector<1x32xf32>
    %173 = arith.addf %172, %171 : vector<1x32xf32>
    %174 = arith.divf %172, %173 : vector<1x32xf32>
    %175 = vector.extract_strided_slice %162 {offsets = [0, 64], sizes = [1, 32], strides = [1, 1]} : vector<1x128xf32> to vector<1x32xf32>
    %176 = math.tanh %175 : vector<1x32xf32>
    %177 = vector.extract_strided_slice %162 {offsets = [0, 96], sizes = [1, 32], strides = [1, 1]} : vector<1x128xf32> to vector<1x32xf32>
    %178 = arith.negf %177 : vector<1x32xf32>
    %179 = math.exp %178 : vector<1x32xf32>
    %cst_69 = arith.constant 1.000000e+00 : f32
    %180 = vector.broadcast %cst_69 : f32 to vector<1x32xf32>
    %181 = arith.addf %180, %179 : vector<1x32xf32>
    %182 = arith.divf %180, %181 : vector<1x32xf32>
    %183 = arith.mulf %174, %125 : vector<1x32xf32>
    %184 = arith.mulf %168, %176 : vector<1x32xf32>
    %185 = arith.addf %183, %184 : vector<1x32xf32>
    %186 = math.tanh %185 : vector<1x32xf32>
    %187 = arith.mulf %182, %186 : vector<1x32xf32>
    %cst_70 = arith.constant dense<0.000000e+00> : vector<1x128xf32>
    %188 = tpu.matmul %187, %32, %cst_70 {dimension_numbers = #tpu.dot_dimension_numbers<[1], [0], [0], [1], [0, 0, 1, 1], [], []>} : vector<1x32xf32>, vector<32x128xf32>, vector<1x128xf32> -> vector<1x128xf32>
    %cst_71 = arith.constant dense<0.000000e+00> : vector<1x128xf32>
    %189 = tpu.matmul %156, %33, %cst_71 {dimension_numbers = #tpu.dot_dimension_numbers<[1], [0], [0], [1], [0, 0, 1, 1], [], []>} : vector<1x32xf32>, vector<32x128xf32>, vector<1x128xf32> -> vector<1x128xf32>
    %190 = arith.addf %188, %189 : vector<1x128xf32>
    %191 = arith.addf %190, %34 : vector<1x128xf32>
    %192 = vector.extract_strided_slice %191 {offsets = [0, 0], sizes = [1, 32], strides = [1, 1]} : vector<1x128xf32> to vector<1x32xf32>
    %193 = arith.negf %192 : vector<1x32xf32>
    %194 = math.exp %193 : vector<1x32xf32>
    %cst_72 = arith.constant 1.000000e+00 : f32
    %195 = vector.broadcast %cst_72 : f32 to vector<1x32xf32>
    %196 = arith.addf %195, %194 : vector<1x32xf32>
    %197 = arith.divf %195, %196 : vector<1x32xf32>
    %198 = vector.extract_strided_slice %191 {offsets = [0, 32], sizes = [1, 32], strides = [1, 1]} : vector<1x128xf32> to vector<1x32xf32>
    %199 = arith.negf %198 : vector<1x32xf32>
    %200 = math.exp %199 : vector<1x32xf32>
    %cst_73 = arith.constant 1.000000e+00 : f32
    %201 = vector.broadcast %cst_73 : f32 to vector<1x32xf32>
    %202 = arith.addf %201, %200 : vector<1x32xf32>
    %203 = arith.divf %201, %202 : vector<1x32xf32>
    %204 = vector.extract_strided_slice %191 {offsets = [0, 64], sizes = [1, 32], strides = [1, 1]} : vector<1x128xf32> to vector<1x32xf32>
    %205 = math.tanh %204 : vector<1x32xf32>
    %206 = vector.extract_strided_slice %191 {offsets = [0, 96], sizes = [1, 32], strides = [1, 1]} : vector<1x128xf32> to vector<1x32xf32>
    %207 = arith.negf %206 : vector<1x32xf32>
    %208 = math.exp %207 : vector<1x32xf32>
    %cst_74 = arith.constant 1.000000e+00 : f32
    %209 = vector.broadcast %cst_74 : f32 to vector<1x32xf32>
    %210 = arith.addf %209, %208 : vector<1x32xf32>
    %211 = arith.divf %209, %210 : vector<1x32xf32>
    %212 = arith.mulf %203, %154 : vector<1x32xf32>
    %213 = arith.mulf %197, %205 : vector<1x32xf32>
    %214 = arith.addf %212, %213 : vector<1x32xf32>
    %215 = math.tanh %214 : vector<1x32xf32>
    %216 = arith.mulf %211, %215 : vector<1x32xf32>
    %217 = arith.index_cast %c2_i32 : i32 to index
    %c0_75 = arith.constant 0 : index
    %218 = vector.load %arg23[%217, %c0_75] : memref<16x32xf32, #tpu.memory_space<vmem>>, vector<1x32xf32>
    tpu.vector_store %arg23[%217, %c0_75], %216 {strides = array<i32>} : memref<16x32xf32, #tpu.memory_space<vmem>>, vector<1x32xf32>,
    %c3_i32 = arith.constant 3 : i32
    %219 = arith.index_cast %c3_i32 : i32 to index
    %c0_76 = arith.constant 0 : index
    %220 = vector.load %arg22[%219, %c0_76] : memref<16x128xf32, #tpu.memory_space<vmem>>, vector<1x128xf32>
    %cst_77 = arith.constant dense<0.000000e+00> : vector<1x128xf32>
    %221 = tpu.matmul %187, %31, %cst_77 {dimension_numbers = #tpu.dot_dimension_numbers<[1], [0], [0], [1], [0, 0, 1, 1], [], []>} : vector<1x32xf32>, vector<32x128xf32>, vector<1x128xf32> -> vector<1x128xf32>
    %222 = arith.addf %220, %221 : vector<1x128xf32>
    %223 = vector.extract_strided_slice %222 {offsets = [0, 0], sizes = [1, 32], strides = [1, 1]} : vector<1x128xf32> to vector<1x32xf32>
    %224 = arith.negf %223 : vector<1x32xf32>
    %225 = math.exp %224 : vector<1x32xf32>
    %cst_78 = arith.constant 1.000000e+00 : f32
    %226 = vector.broadcast %cst_78 : f32 to vector<1x32xf32>
    %227 = arith.addf %226, %225 : vector<1x32xf32>
    %228 = arith.divf %226, %227 : vector<1x32xf32>
    %229 = vector.extract_strided_slice %222 {offsets = [0, 32], sizes = [1, 32], strides = [1, 1]} : vector<1x128xf32> to vector<1x32xf32>
    %230 = arith.negf %229 : vector<1x32xf32>
    %231 = math.exp %230 : vector<1x32xf32>
    %cst_79 = arith.constant 1.000000e+00 : f32
    %232 = vector.broadcast %cst_79 : f32 to vector<1x32xf32>
    %233 = arith.addf %232, %231 : vector<1x32xf32>
    %234 = arith.divf %232, %233 : vector<1x32xf32>
    %235 = vector.extract_strided_slice %222 {offsets = [0, 64], sizes = [1, 32], strides = [1, 1]} : vector<1x128xf32> to vector<1x32xf32>
    %236 = math.tanh %235 : vector<1x32xf32>
    %237 = vector.extract_strided_slice %222 {offsets = [0, 96], sizes = [1, 32], strides = [1, 1]} : vector<1x128xf32> to vector<1x32xf32>
    %238 = arith.negf %237 : vector<1x32xf32>
    %239 = math.exp %238 : vector<1x32xf32>
    %cst_80 = arith.constant 1.000000e+00 : f32
    %240 = vector.broadcast %cst_80 : f32 to vector<1x32xf32>
    %241 = arith.addf %240, %239 : vector<1x32xf32>
    %242 = arith.divf %240, %241 : vector<1x32xf32>
    %243 = arith.mulf %234, %185 : vector<1x32xf32>
    %244 = arith.mulf %228, %236 : vector<1x32xf32>
    %245 = arith.addf %243, %244 : vector<1x32xf32>
    %246 = math.tanh %245 : vector<1x32xf32>
    %247 = arith.mulf %242, %246 : vector<1x32xf32>
    %cst_81 = arith.constant dense<0.000000e+00> : vector<1x128xf32>
    %248 = tpu.matmul %247, %32, %cst_81 {dimension_numbers = #tpu.dot_dimension_numbers<[1], [0], [0], [1], [0, 0, 1, 1], [], []>} : vector<1x32xf32>, vector<32x128xf32>, vector<1x128xf32> -> vector<1x128xf32>
    %cst_82 = arith.constant dense<0.000000e+00> : vector<1x128xf32>
    %249 = tpu.matmul %216, %33, %cst_82 {dimension_numbers = #tpu.dot_dimension_numbers<[1], [0], [0], [1], [0, 0, 1, 1], [], []>} : vector<1x32xf32>, vector<32x128xf32>, vector<1x128xf32> -> vector<1x128xf32>
    %250 = arith.addf %248, %249 : vector<1x128xf32>
    %251 = arith.addf %250, %34 : vector<1x128xf32>
    %252 = vector.extract_strided_slice %251 {offsets = [0, 0], sizes = [1, 32], strides = [1, 1]} : vector<1x128xf32> to vector<1x32xf32>
    %253 = arith.negf %252 : vector<1x32xf32>
    %254 = math.exp %253 : vector<1x32xf32>
    %cst_83 = arith.constant 1.000000e+00 : f32
    %255 = vector.broadcast %cst_83 : f32 to vector<1x32xf32>
    %256 = arith.addf %255, %254 : vector<1x32xf32>
    %257 = arith.divf %255, %256 : vector<1x32xf32>
    %258 = vector.extract_strided_slice %251 {offsets = [0, 32], sizes = [1, 32], strides = [1, 1]} : vector<1x128xf32> to vector<1x32xf32>
    %259 = arith.negf %258 : vector<1x32xf32>
    %260 = math.exp %259 : vector<1x32xf32>
    %cst_84 = arith.constant 1.000000e+00 : f32
    %261 = vector.broadcast %cst_84 : f32 to vector<1x32xf32>
    %262 = arith.addf %261, %260 : vector<1x32xf32>
    %263 = arith.divf %261, %262 : vector<1x32xf32>
    %264 = vector.extract_strided_slice %251 {offsets = [0, 64], sizes = [1, 32], strides = [1, 1]} : vector<1x128xf32> to vector<1x32xf32>
    %265 = math.tanh %264 : vector<1x32xf32>
    %266 = vector.extract_strided_slice %251 {offsets = [0, 96], sizes = [1, 32], strides = [1, 1]} : vector<1x128xf32> to vector<1x32xf32>
    %267 = arith.negf %266 : vector<1x32xf32>
    %268 = math.exp %267 : vector<1x32xf32>
    %cst_85 = arith.constant 1.000000e+00 : f32
    %269 = vector.broadcast %cst_85 : f32 to vector<1x32xf32>
    %270 = arith.addf %269, %268 : vector<1x32xf32>
    %271 = arith.divf %269, %270 : vector<1x32xf32>
    %272 = arith.mulf %263, %214 : vector<1x32xf32>
    %273 = arith.mulf %257, %265 : vector<1x32xf32>
    %274 = arith.addf %272, %273 : vector<1x32xf32>
    %275 = math.tanh %274 : vector<1x32xf32>
    %276 = arith.mulf %271, %275 : vector<1x32xf32>
    %277 = arith.index_cast %c3_i32 : i32 to index
    %c0_86 = arith.constant 0 : index
    %278 = vector.load %arg23[%277, %c0_86] : memref<16x32xf32, #tpu.memory_space<vmem>>, vector<1x32xf32>
    tpu.vector_store %arg23[%277, %c0_86], %276 {strides = array<i32>} : memref<16x32xf32, #tpu.memory_space<vmem>>, vector<1x32xf32>,
    %c4_i32 = arith.constant 4 : i32
    %279 = arith.index_cast %c4_i32 : i32 to index
    %c0_87 = arith.constant 0 : index
    %280 = vector.load %arg22[%279, %c0_87] : memref<16x128xf32, #tpu.memory_space<vmem>>, vector<1x128xf32>
    %cst_88 = arith.constant dense<0.000000e+00> : vector<1x128xf32>
    %281 = tpu.matmul %247, %31, %cst_88 {dimension_numbers = #tpu.dot_dimension_numbers<[1], [0], [0], [1], [0, 0, 1, 1], [], []>} : vector<1x32xf32>, vector<32x128xf32>, vector<1x128xf32> -> vector<1x128xf32>
    %282 = arith.addf %280, %281 : vector<1x128xf32>
    %283 = vector.extract_strided_slice %282 {offsets = [0, 0], sizes = [1, 32], strides = [1, 1]} : vector<1x128xf32> to vector<1x32xf32>
    %284 = arith.negf %283 : vector<1x32xf32>
    %285 = math.exp %284 : vector<1x32xf32>
    %cst_89 = arith.constant 1.000000e+00 : f32
    %286 = vector.broadcast %cst_89 : f32 to vector<1x32xf32>
    %287 = arith.addf %286, %285 : vector<1x32xf32>
    %288 = arith.divf %286, %287 : vector<1x32xf32>
    %289 = vector.extract_strided_slice %282 {offsets = [0, 32], sizes = [1, 32], strides = [1, 1]} : vector<1x128xf32> to vector<1x32xf32>
    %290 = arith.negf %289 : vector<1x32xf32>
    %291 = math.exp %290 : vector<1x32xf32>
    %cst_90 = arith.constant 1.000000e+00 : f32
    %292 = vector.broadcast %cst_90 : f32 to vector<1x32xf32>
    %293 = arith.addf %292, %291 : vector<1x32xf32>
    %294 = arith.divf %292, %293 : vector<1x32xf32>
    %295 = vector.extract_strided_slice %282 {offsets = [0, 64], sizes = [1, 32], strides = [1, 1]} : vector<1x128xf32> to vector<1x32xf32>
    %296 = math.tanh %295 : vector<1x32xf32>
    %297 = vector.extract_strided_slice %282 {offsets = [0, 96], sizes = [1, 32], strides = [1, 1]} : vector<1x128xf32> to vector<1x32xf32>
    %298 = arith.negf %297 : vector<1x32xf32>
    %299 = math.exp %298 : vector<1x32xf32>
    %cst_91 = arith.constant 1.000000e+00 : f32
    %300 = vector.broadcast %cst_91 : f32 to vector<1x32xf32>
    %301 = arith.addf %300, %299 : vector<1x32xf32>
    %302 = arith.divf %300, %301 : vector<1x32xf32>
    %303 = arith.mulf %294, %245 : vector<1x32xf32>
    %304 = arith.mulf %288, %296 : vector<1x32xf32>
    %305 = arith.addf %303, %304 : vector<1x32xf32>
    %306 = math.tanh %305 : vector<1x32xf32>
    %307 = arith.mulf %302, %306 : vector<1x32xf32>
    %cst_92 = arith.constant dense<0.000000e+00> : vector<1x128xf32>
    %308 = tpu.matmul %307, %32, %cst_92 {dimension_numbers = #tpu.dot_dimension_numbers<[1], [0], [0], [1], [0, 0, 1, 1], [], []>} : vector<1x32xf32>, vector<32x128xf32>, vector<1x128xf32> -> vector<1x128xf32>
    %cst_93 = arith.constant dense<0.000000e+00> : vector<1x128xf32>
    %309 = tpu.matmul %276, %33, %cst_93 {dimension_numbers = #tpu.dot_dimension_numbers<[1], [0], [0], [1], [0, 0, 1, 1], [], []>} : vector<1x32xf32>, vector<32x128xf32>, vector<1x128xf32> -> vector<1x128xf32>
    %310 = arith.addf %308, %309 : vector<1x128xf32>
    %311 = arith.addf %310, %34 : vector<1x128xf32>
    %312 = vector.extract_strided_slice %311 {offsets = [0, 0], sizes = [1, 32], strides = [1, 1]} : vector<1x128xf32> to vector<1x32xf32>
    %313 = arith.negf %312 : vector<1x32xf32>
    %314 = math.exp %313 : vector<1x32xf32>
    %cst_94 = arith.constant 1.000000e+00 : f32
    %315 = vector.broadcast %cst_94 : f32 to vector<1x32xf32>
    %316 = arith.addf %315, %314 : vector<1x32xf32>
    %317 = arith.divf %315, %316 : vector<1x32xf32>
    %318 = vector.extract_strided_slice %311 {offsets = [0, 32], sizes = [1, 32], strides = [1, 1]} : vector<1x128xf32> to vector<1x32xf32>
    %319 = arith.negf %318 : vector<1x32xf32>
    %320 = math.exp %319 : vector<1x32xf32>
    %cst_95 = arith.constant 1.000000e+00 : f32
    %321 = vector.broadcast %cst_95 : f32 to vector<1x32xf32>
    %322 = arith.addf %321, %320 : vector<1x32xf32>
    %323 = arith.divf %321, %322 : vector<1x32xf32>
    %324 = vector.extract_strided_slice %311 {offsets = [0, 64], sizes = [1, 32], strides = [1, 1]} : vector<1x128xf32> to vector<1x32xf32>
    %325 = math.tanh %324 : vector<1x32xf32>
    %326 = vector.extract_strided_slice %311 {offsets = [0, 96], sizes = [1, 32], strides = [1, 1]} : vector<1x128xf32> to vector<1x32xf32>
    %327 = arith.negf %326 : vector<1x32xf32>
    %328 = math.exp %327 : vector<1x32xf32>
    %cst_96 = arith.constant 1.000000e+00 : f32
    %329 = vector.broadcast %cst_96 : f32 to vector<1x32xf32>
    %330 = arith.addf %329, %328 : vector<1x32xf32>
    %331 = arith.divf %329, %330 : vector<1x32xf32>
    %332 = arith.mulf %323, %274 : vector<1x32xf32>
    %333 = arith.mulf %317, %325 : vector<1x32xf32>
    %334 = arith.addf %332, %333 : vector<1x32xf32>
    %335 = math.tanh %334 : vector<1x32xf32>
    %336 = arith.mulf %331, %335 : vector<1x32xf32>
    %337 = arith.index_cast %c4_i32 : i32 to index
    %c0_97 = arith.constant 0 : index
    %338 = vector.load %arg23[%337, %c0_97] : memref<16x32xf32, #tpu.memory_space<vmem>>, vector<1x32xf32>
    tpu.vector_store %arg23[%337, %c0_97], %336 {strides = array<i32>} : memref<16x32xf32, #tpu.memory_space<vmem>>, vector<1x32xf32>,
    %c5_i32 = arith.constant 5 : i32
    %339 = arith.index_cast %c5_i32 : i32 to index
    %c0_98 = arith.constant 0 : index
    %340 = vector.load %arg22[%339, %c0_98] : memref<16x128xf32, #tpu.memory_space<vmem>>, vector<1x128xf32>
    %cst_99 = arith.constant dense<0.000000e+00> : vector<1x128xf32>
    %341 = tpu.matmul %307, %31, %cst_99 {dimension_numbers = #tpu.dot_dimension_numbers<[1], [0], [0], [1], [0, 0, 1, 1], [], []>} : vector<1x32xf32>, vector<32x128xf32>, vector<1x128xf32> -> vector<1x128xf32>
    %342 = arith.addf %340, %341 : vector<1x128xf32>
    %343 = vector.extract_strided_slice %342 {offsets = [0, 0], sizes = [1, 32], strides = [1, 1]} : vector<1x128xf32> to vector<1x32xf32>
    %344 = arith.negf %343 : vector<1x32xf32>
    %345 = math.exp %344 : vector<1x32xf32>
    %cst_100 = arith.constant 1.000000e+00 : f32
    %346 = vector.broadcast %cst_100 : f32 to vector<1x32xf32>
    %347 = arith.addf %346, %345 : vector<1x32xf32>
    %348 = arith.divf %346, %347 : vector<1x32xf32>
    %349 = vector.extract_strided_slice %342 {offsets = [0, 32], sizes = [1, 32], strides = [1, 1]} : vector<1x128xf32> to vector<1x32xf32>
    %350 = arith.negf %349 : vector<1x32xf32>
    %351 = math.exp %350 : vector<1x32xf32>
    %cst_101 = arith.constant 1.000000e+00 : f32
    %352 = vector.broadcast %cst_101 : f32 to vector<1x32xf32>
    %353 = arith.addf %352, %351 : vector<1x32xf32>
    %354 = arith.divf %352, %353 : vector<1x32xf32>
    %355 = vector.extract_strided_slice %342 {offsets = [0, 64], sizes = [1, 32], strides = [1, 1]} : vector<1x128xf32> to vector<1x32xf32>
    %356 = math.tanh %355 : vector<1x32xf32>
    %357 = vector.extract_strided_slice %342 {offsets = [0, 96], sizes = [1, 32], strides = [1, 1]} : vector<1x128xf32> to vector<1x32xf32>
    %358 = arith.negf %357 : vector<1x32xf32>
    %359 = math.exp %358 : vector<1x32xf32>
    %cst_102 = arith.constant 1.000000e+00 : f32
    %360 = vector.broadcast %cst_102 : f32 to vector<1x32xf32>
    %361 = arith.addf %360, %359 : vector<1x32xf32>
    %362 = arith.divf %360, %361 : vector<1x32xf32>
    %363 = arith.mulf %354, %305 : vector<1x32xf32>
    %364 = arith.mulf %348, %356 : vector<1x32xf32>
    %365 = arith.addf %363, %364 : vector<1x32xf32>
    %366 = math.tanh %365 : vector<1x32xf32>
    %367 = arith.mulf %362, %366 : vector<1x32xf32>
    %cst_103 = arith.constant dense<0.000000e+00> : vector<1x128xf32>
    %368 = tpu.matmul %367, %32, %cst_103 {dimension_numbers = #tpu.dot_dimension_numbers<[1], [0], [0], [1], [0, 0, 1, 1], [], []>} : vector<1x32xf32>, vector<32x128xf32>, vector<1x128xf32> -> vector<1x128xf32>
    %cst_104 = arith.constant dense<0.000000e+00> : vector<1x128xf32>
    %369 = tpu.matmul %336, %33, %cst_104 {dimension_numbers = #tpu.dot_dimension_numbers<[1], [0], [0], [1], [0, 0, 1, 1], [], []>} : vector<1x32xf32>, vector<32x128xf32>, vector<1x128xf32> -> vector<1x128xf32>
    %370 = arith.addf %368, %369 : vector<1x128xf32>
    %371 = arith.addf %370, %34 : vector<1x128xf32>
    %372 = vector.extract_strided_slice %371 {offsets = [0, 0], sizes = [1, 32], strides = [1, 1]} : vector<1x128xf32> to vector<1x32xf32>
    %373 = arith.negf %372 : vector<1x32xf32>
    %374 = math.exp %373 : vector<1x32xf32>
    %cst_105 = arith.constant 1.000000e+00 : f32
    %375 = vector.broadcast %cst_105 : f32 to vector<1x32xf32>
    %376 = arith.addf %375, %374 : vector<1x32xf32>
    %377 = arith.divf %375, %376 : vector<1x32xf32>
    %378 = vector.extract_strided_slice %371 {offsets = [0, 32], sizes = [1, 32], strides = [1, 1]} : vector<1x128xf32> to vector<1x32xf32>
    %379 = arith.negf %378 : vector<1x32xf32>
    %380 = math.exp %379 : vector<1x32xf32>
    %cst_106 = arith.constant 1.000000e+00 : f32
    %381 = vector.broadcast %cst_106 : f32 to vector<1x32xf32>
    %382 = arith.addf %381, %380 : vector<1x32xf32>
    %383 = arith.divf %381, %382 : vector<1x32xf32>
    %384 = vector.extract_strided_slice %371 {offsets = [0, 64], sizes = [1, 32], strides = [1, 1]} : vector<1x128xf32> to vector<1x32xf32>
    %385 = math.tanh %384 : vector<1x32xf32>
    %386 = vector.extract_strided_slice %371 {offsets = [0, 96], sizes = [1, 32], strides = [1, 1]} : vector<1x128xf32> to vector<1x32xf32>
    %387 = arith.negf %386 : vector<1x32xf32>
    %388 = math.exp %387 : vector<1x32xf32>
    %cst_107 = arith.constant 1.000000e+00 : f32
    %389 = vector.broadcast %cst_107 : f32 to vector<1x32xf32>
    %390 = arith.addf %389, %388 : vector<1x32xf32>
    %391 = arith.divf %389, %390 : vector<1x32xf32>
    %392 = arith.mulf %383, %334 : vector<1x32xf32>
    %393 = arith.mulf %377, %385 : vector<1x32xf32>
    %394 = arith.addf %392, %393 : vector<1x32xf32>
    %395 = math.tanh %394 : vector<1x32xf32>
    %396 = arith.mulf %391, %395 : vector<1x32xf32>
    %397 = arith.index_cast %c5_i32 : i32 to index
    %c0_108 = arith.constant 0 : index
    %398 = vector.load %arg23[%397, %c0_108] : memref<16x32xf32, #tpu.memory_space<vmem>>, vector<1x32xf32>
    tpu.vector_store %arg23[%397, %c0_108], %396 {strides = array<i32>} : memref<16x32xf32, #tpu.memory_space<vmem>>, vector<1x32xf32>,
    %c6_i32 = arith.constant 6 : i32
    %399 = arith.index_cast %c6_i32 : i32 to index
    %c0_109 = arith.constant 0 : index
    %400 = vector.load %arg22[%399, %c0_109] : memref<16x128xf32, #tpu.memory_space<vmem>>, vector<1x128xf32>
    %cst_110 = arith.constant dense<0.000000e+00> : vector<1x128xf32>
    %401 = tpu.matmul %367, %31, %cst_110 {dimension_numbers = #tpu.dot_dimension_numbers<[1], [0], [0], [1], [0, 0, 1, 1], [], []>} : vector<1x32xf32>, vector<32x128xf32>, vector<1x128xf32> -> vector<1x128xf32>
    %402 = arith.addf %400, %401 : vector<1x128xf32>
    %403 = vector.extract_strided_slice %402 {offsets = [0, 0], sizes = [1, 32], strides = [1, 1]} : vector<1x128xf32> to vector<1x32xf32>
    %404 = arith.negf %403 : vector<1x32xf32>
    %405 = math.exp %404 : vector<1x32xf32>
    %cst_111 = arith.constant 1.000000e+00 : f32
    %406 = vector.broadcast %cst_111 : f32 to vector<1x32xf32>
    %407 = arith.addf %406, %405 : vector<1x32xf32>
    %408 = arith.divf %406, %407 : vector<1x32xf32>
    %409 = vector.extract_strided_slice %402 {offsets = [0, 32], sizes = [1, 32], strides = [1, 1]} : vector<1x128xf32> to vector<1x32xf32>
    %410 = arith.negf %409 : vector<1x32xf32>
    %411 = math.exp %410 : vector<1x32xf32>
    %cst_112 = arith.constant 1.000000e+00 : f32
    %412 = vector.broadcast %cst_112 : f32 to vector<1x32xf32>
    %413 = arith.addf %412, %411 : vector<1x32xf32>
    %414 = arith.divf %412, %413 : vector<1x32xf32>
    %415 = vector.extract_strided_slice %402 {offsets = [0, 64], sizes = [1, 32], strides = [1, 1]} : vector<1x128xf32> to vector<1x32xf32>
    %416 = math.tanh %415 : vector<1x32xf32>
    %417 = vector.extract_strided_slice %402 {offsets = [0, 96], sizes = [1, 32], strides = [1, 1]} : vector<1x128xf32> to vector<1x32xf32>
    %418 = arith.negf %417 : vector<1x32xf32>
    %419 = math.exp %418 : vector<1x32xf32>
    %cst_113 = arith.constant 1.000000e+00 : f32
    %420 = vector.broadcast %cst_113 : f32 to vector<1x32xf32>
    %421 = arith.addf %420, %419 : vector<1x32xf32>
    %422 = arith.divf %420, %421 : vector<1x32xf32>
    %423 = arith.mulf %414, %365 : vector<1x32xf32>
    %424 = arith.mulf %408, %416 : vector<1x32xf32>
    %425 = arith.addf %423, %424 : vector<1x32xf32>
    %426 = math.tanh %425 : vector<1x32xf32>
    %427 = arith.mulf %422, %426 : vector<1x32xf32>
    %cst_114 = arith.constant dense<0.000000e+00> : vector<1x128xf32>
    %428 = tpu.matmul %427, %32, %cst_114 {dimension_numbers = #tpu.dot_dimension_numbers<[1], [0], [0], [1], [0, 0, 1, 1], [], []>} : vector<1x32xf32>, vector<32x128xf32>, vector<1x128xf32> -> vector<1x128xf32>
    %cst_115 = arith.constant dense<0.000000e+00> : vector<1x128xf32>
    %429 = tpu.matmul %396, %33, %cst_115 {dimension_numbers = #tpu.dot_dimension_numbers<[1], [0], [0], [1], [0, 0, 1, 1], [], []>} : vector<1x32xf32>, vector<32x128xf32>, vector<1x128xf32> -> vector<1x128xf32>
    %430 = arith.addf %428, %429 : vector<1x128xf32>
    %431 = arith.addf %430, %34 : vector<1x128xf32>
    %432 = vector.extract_strided_slice %431 {offsets = [0, 0], sizes = [1, 32], strides = [1, 1]} : vector<1x128xf32> to vector<1x32xf32>
    %433 = arith.negf %432 : vector<1x32xf32>
    %434 = math.exp %433 : vector<1x32xf32>
    %cst_116 = arith.constant 1.000000e+00 : f32
    %435 = vector.broadcast %cst_116 : f32 to vector<1x32xf32>
    %436 = arith.addf %435, %434 : vector<1x32xf32>
    %437 = arith.divf %435, %436 : vector<1x32xf32>
    %438 = vector.extract_strided_slice %431 {offsets = [0, 32], sizes = [1, 32], strides = [1, 1]} : vector<1x128xf32> to vector<1x32xf32>
    %439 = arith.negf %438 : vector<1x32xf32>
    %440 = math.exp %439 : vector<1x32xf32>
    %cst_117 = arith.constant 1.000000e+00 : f32
    %441 = vector.broadcast %cst_117 : f32 to vector<1x32xf32>
    %442 = arith.addf %441, %440 : vector<1x32xf32>
    %443 = arith.divf %441, %442 : vector<1x32xf32>
    %444 = vector.extract_strided_slice %431 {offsets = [0, 64], sizes = [1, 32], strides = [1, 1]} : vector<1x128xf32> to vector<1x32xf32>
    %445 = math.tanh %444 : vector<1x32xf32>
    %446 = vector.extract_strided_slice %431 {offsets = [0, 96], sizes = [1, 32], strides = [1, 1]} : vector<1x128xf32> to vector<1x32xf32>
    %447 = arith.negf %446 : vector<1x32xf32>
    %448 = math.exp %447 : vector<1x32xf32>
    %cst_118 = arith.constant 1.000000e+00 : f32
    %449 = vector.broadcast %cst_118 : f32 to vector<1x32xf32>
    %450 = arith.addf %449, %448 : vector<1x32xf32>
    %451 = arith.divf %449, %450 : vector<1x32xf32>
    %452 = arith.mulf %443, %394 : vector<1x32xf32>
    %453 = arith.mulf %437, %445 : vector<1x32xf32>
    %454 = arith.addf %452, %453 : vector<1x32xf32>
    %455 = math.tanh %454 : vector<1x32xf32>
    %456 = arith.mulf %451, %455 : vector<1x32xf32>
    %457 = arith.index_cast %c6_i32 : i32 to index
    %c0_119 = arith.constant 0 : index
    %458 = vector.load %arg23[%457, %c0_119] : memref<16x32xf32, #tpu.memory_space<vmem>>, vector<1x32xf32>
    tpu.vector_store %arg23[%457, %c0_119], %456 {strides = array<i32>} : memref<16x32xf32, #tpu.memory_space<vmem>>, vector<1x32xf32>,
    %c7_i32 = arith.constant 7 : i32
    %459 = arith.index_cast %c7_i32 : i32 to index
    %c0_120 = arith.constant 0 : index
    %460 = vector.load %arg22[%459, %c0_120] : memref<16x128xf32, #tpu.memory_space<vmem>>, vector<1x128xf32>
    %cst_121 = arith.constant dense<0.000000e+00> : vector<1x128xf32>
    %461 = tpu.matmul %427, %31, %cst_121 {dimension_numbers = #tpu.dot_dimension_numbers<[1], [0], [0], [1], [0, 0, 1, 1], [], []>} : vector<1x32xf32>, vector<32x128xf32>, vector<1x128xf32> -> vector<1x128xf32>
    %462 = arith.addf %460, %461 : vector<1x128xf32>
    %463 = vector.extract_strided_slice %462 {offsets = [0, 0], sizes = [1, 32], strides = [1, 1]} : vector<1x128xf32> to vector<1x32xf32>
    %464 = arith.negf %463 : vector<1x32xf32>
    %465 = math.exp %464 : vector<1x32xf32>
    %cst_122 = arith.constant 1.000000e+00 : f32
    %466 = vector.broadcast %cst_122 : f32 to vector<1x32xf32>
    %467 = arith.addf %466, %465 : vector<1x32xf32>
    %468 = arith.divf %466, %467 : vector<1x32xf32>
    %469 = vector.extract_strided_slice %462 {offsets = [0, 32], sizes = [1, 32], strides = [1, 1]} : vector<1x128xf32> to vector<1x32xf32>
    %470 = arith.negf %469 : vector<1x32xf32>
    %471 = math.exp %470 : vector<1x32xf32>
    %cst_123 = arith.constant 1.000000e+00 : f32
    %472 = vector.broadcast %cst_123 : f32 to vector<1x32xf32>
    %473 = arith.addf %472, %471 : vector<1x32xf32>
    %474 = arith.divf %472, %473 : vector<1x32xf32>
    %475 = vector.extract_strided_slice %462 {offsets = [0, 64], sizes = [1, 32], strides = [1, 1]} : vector<1x128xf32> to vector<1x32xf32>
    %476 = math.tanh %475 : vector<1x32xf32>
    %477 = vector.extract_strided_slice %462 {offsets = [0, 96], sizes = [1, 32], strides = [1, 1]} : vector<1x128xf32> to vector<1x32xf32>
    %478 = arith.negf %477 : vector<1x32xf32>
    %479 = math.exp %478 : vector<1x32xf32>
    %cst_124 = arith.constant 1.000000e+00 : f32
    %480 = vector.broadcast %cst_124 : f32 to vector<1x32xf32>
    %481 = arith.addf %480, %479 : vector<1x32xf32>
    %482 = arith.divf %480, %481 : vector<1x32xf32>
    %483 = arith.mulf %474, %425 : vector<1x32xf32>
    %484 = arith.mulf %468, %476 : vector<1x32xf32>
    %485 = arith.addf %483, %484 : vector<1x32xf32>
    %486 = math.tanh %485 : vector<1x32xf32>
    %487 = arith.mulf %482, %486 : vector<1x32xf32>
    %cst_125 = arith.constant dense<0.000000e+00> : vector<1x128xf32>
    %488 = tpu.matmul %487, %32, %cst_125 {dimension_numbers = #tpu.dot_dimension_numbers<[1], [0], [0], [1], [0, 0, 1, 1], [], []>} : vector<1x32xf32>, vector<32x128xf32>, vector<1x128xf32> -> vector<1x128xf32>
    %cst_126 = arith.constant dense<0.000000e+00> : vector<1x128xf32>
    %489 = tpu.matmul %456, %33, %cst_126 {dimension_numbers = #tpu.dot_dimension_numbers<[1], [0], [0], [1], [0, 0, 1, 1], [], []>} : vector<1x32xf32>, vector<32x128xf32>, vector<1x128xf32> -> vector<1x128xf32>
    %490 = arith.addf %488, %489 : vector<1x128xf32>
    %491 = arith.addf %490, %34 : vector<1x128xf32>
    %492 = vector.extract_strided_slice %491 {offsets = [0, 0], sizes = [1, 32], strides = [1, 1]} : vector<1x128xf32> to vector<1x32xf32>
    %493 = arith.negf %492 : vector<1x32xf32>
    %494 = math.exp %493 : vector<1x32xf32>
    %cst_127 = arith.constant 1.000000e+00 : f32
    %495 = vector.broadcast %cst_127 : f32 to vector<1x32xf32>
    %496 = arith.addf %495, %494 : vector<1x32xf32>
    %497 = arith.divf %495, %496 : vector<1x32xf32>
    %498 = vector.extract_strided_slice %491 {offsets = [0, 32], sizes = [1, 32], strides = [1, 1]} : vector<1x128xf32> to vector<1x32xf32>
    %499 = arith.negf %498 : vector<1x32xf32>
    %500 = math.exp %499 : vector<1x32xf32>
    %cst_128 = arith.constant 1.000000e+00 : f32
    %501 = vector.broadcast %cst_128 : f32 to vector<1x32xf32>
    %502 = arith.addf %501, %500 : vector<1x32xf32>
    %503 = arith.divf %501, %502 : vector<1x32xf32>
    %504 = vector.extract_strided_slice %491 {offsets = [0, 64], sizes = [1, 32], strides = [1, 1]} : vector<1x128xf32> to vector<1x32xf32>
    %505 = math.tanh %504 : vector<1x32xf32>
    %506 = vector.extract_strided_slice %491 {offsets = [0, 96], sizes = [1, 32], strides = [1, 1]} : vector<1x128xf32> to vector<1x32xf32>
    %507 = arith.negf %506 : vector<1x32xf32>
    %508 = math.exp %507 : vector<1x32xf32>
    %cst_129 = arith.constant 1.000000e+00 : f32
    %509 = vector.broadcast %cst_129 : f32 to vector<1x32xf32>
    %510 = arith.addf %509, %508 : vector<1x32xf32>
    %511 = arith.divf %509, %510 : vector<1x32xf32>
    %512 = arith.mulf %503, %454 : vector<1x32xf32>
    %513 = arith.mulf %497, %505 : vector<1x32xf32>
    %514 = arith.addf %512, %513 : vector<1x32xf32>
    %515 = math.tanh %514 : vector<1x32xf32>
    %516 = arith.mulf %511, %515 : vector<1x32xf32>
    %517 = arith.index_cast %c7_i32 : i32 to index
    %c0_130 = arith.constant 0 : index
    %518 = vector.load %arg23[%517, %c0_130] : memref<16x32xf32, #tpu.memory_space<vmem>>, vector<1x32xf32>
    tpu.vector_store %arg23[%517, %c0_130], %516 {strides = array<i32>} : memref<16x32xf32, #tpu.memory_space<vmem>>, vector<1x32xf32>,
    %c8_i32 = arith.constant 8 : i32
    %519 = arith.index_cast %c8_i32 : i32 to index
    %c0_131 = arith.constant 0 : index
    %520 = vector.load %arg22[%519, %c0_131] : memref<16x128xf32, #tpu.memory_space<vmem>>, vector<1x128xf32>
    %cst_132 = arith.constant dense<0.000000e+00> : vector<1x128xf32>
    %521 = tpu.matmul %487, %31, %cst_132 {dimension_numbers = #tpu.dot_dimension_numbers<[1], [0], [0], [1], [0, 0, 1, 1], [], []>} : vector<1x32xf32>, vector<32x128xf32>, vector<1x128xf32> -> vector<1x128xf32>
    %522 = arith.addf %520, %521 : vector<1x128xf32>
    %523 = vector.extract_strided_slice %522 {offsets = [0, 0], sizes = [1, 32], strides = [1, 1]} : vector<1x128xf32> to vector<1x32xf32>
    %524 = arith.negf %523 : vector<1x32xf32>
    %525 = math.exp %524 : vector<1x32xf32>
    %cst_133 = arith.constant 1.000000e+00 : f32
    %526 = vector.broadcast %cst_133 : f32 to vector<1x32xf32>
    %527 = arith.addf %526, %525 : vector<1x32xf32>
    %528 = arith.divf %526, %527 : vector<1x32xf32>
    %529 = vector.extract_strided_slice %522 {offsets = [0, 32], sizes = [1, 32], strides = [1, 1]} : vector<1x128xf32> to vector<1x32xf32>
    %530 = arith.negf %529 : vector<1x32xf32>
    %531 = math.exp %530 : vector<1x32xf32>
    %cst_134 = arith.constant 1.000000e+00 : f32
    %532 = vector.broadcast %cst_134 : f32 to vector<1x32xf32>
    %533 = arith.addf %532, %531 : vector<1x32xf32>
    %534 = arith.divf %532, %533 : vector<1x32xf32>
    %535 = vector.extract_strided_slice %522 {offsets = [0, 64], sizes = [1, 32], strides = [1, 1]} : vector<1x128xf32> to vector<1x32xf32>
    %536 = math.tanh %535 : vector<1x32xf32>
    %537 = vector.extract_strided_slice %522 {offsets = [0, 96], sizes = [1, 32], strides = [1, 1]} : vector<1x128xf32> to vector<1x32xf32>
    %538 = arith.negf %537 : vector<1x32xf32>
    %539 = math.exp %538 : vector<1x32xf32>
    %cst_135 = arith.constant 1.000000e+00 : f32
    %540 = vector.broadcast %cst_135 : f32 to vector<1x32xf32>
    %541 = arith.addf %540, %539 : vector<1x32xf32>
    %542 = arith.divf %540, %541 : vector<1x32xf32>
    %543 = arith.mulf %534, %485 : vector<1x32xf32>
    %544 = arith.mulf %528, %536 : vector<1x32xf32>
    %545 = arith.addf %543, %544 : vector<1x32xf32>
    %546 = math.tanh %545 : vector<1x32xf32>
    %547 = arith.mulf %542, %546 : vector<1x32xf32>
    %cst_136 = arith.constant dense<0.000000e+00> : vector<1x128xf32>
    %548 = tpu.matmul %547, %32, %cst_136 {dimension_numbers = #tpu.dot_dimension_numbers<[1], [0], [0], [1], [0, 0, 1, 1], [], []>} : vector<1x32xf32>, vector<32x128xf32>, vector<1x128xf32> -> vector<1x128xf32>
    %cst_137 = arith.constant dense<0.000000e+00> : vector<1x128xf32>
    %549 = tpu.matmul %516, %33, %cst_137 {dimension_numbers = #tpu.dot_dimension_numbers<[1], [0], [0], [1], [0, 0, 1, 1], [], []>} : vector<1x32xf32>, vector<32x128xf32>, vector<1x128xf32> -> vector<1x128xf32>
    %550 = arith.addf %548, %549 : vector<1x128xf32>
    %551 = arith.addf %550, %34 : vector<1x128xf32>
    %552 = vector.extract_strided_slice %551 {offsets = [0, 0], sizes = [1, 32], strides = [1, 1]} : vector<1x128xf32> to vector<1x32xf32>
    %553 = arith.negf %552 : vector<1x32xf32>
    %554 = math.exp %553 : vector<1x32xf32>
    %cst_138 = arith.constant 1.000000e+00 : f32
    %555 = vector.broadcast %cst_138 : f32 to vector<1x32xf32>
    %556 = arith.addf %555, %554 : vector<1x32xf32>
    %557 = arith.divf %555, %556 : vector<1x32xf32>
    %558 = vector.extract_strided_slice %551 {offsets = [0, 32], sizes = [1, 32], strides = [1, 1]} : vector<1x128xf32> to vector<1x32xf32>
    %559 = arith.negf %558 : vector<1x32xf32>
    %560 = math.exp %559 : vector<1x32xf32>
    %cst_139 = arith.constant 1.000000e+00 : f32
    %561 = vector.broadcast %cst_139 : f32 to vector<1x32xf32>
    %562 = arith.addf %561, %560 : vector<1x32xf32>
    %563 = arith.divf %561, %562 : vector<1x32xf32>
    %564 = vector.extract_strided_slice %551 {offsets = [0, 64], sizes = [1, 32], strides = [1, 1]} : vector<1x128xf32> to vector<1x32xf32>
    %565 = math.tanh %564 : vector<1x32xf32>
    %566 = vector.extract_strided_slice %551 {offsets = [0, 96], sizes = [1, 32], strides = [1, 1]} : vector<1x128xf32> to vector<1x32xf32>
    %567 = arith.negf %566 : vector<1x32xf32>
    %568 = math.exp %567 : vector<1x32xf32>
    %cst_140 = arith.constant 1.000000e+00 : f32
    %569 = vector.broadcast %cst_140 : f32 to vector<1x32xf32>
    %570 = arith.addf %569, %568 : vector<1x32xf32>
    %571 = arith.divf %569, %570 : vector<1x32xf32>
    %572 = arith.mulf %563, %514 : vector<1x32xf32>
    %573 = arith.mulf %557, %565 : vector<1x32xf32>
    %574 = arith.addf %572, %573 : vector<1x32xf32>
    %575 = math.tanh %574 : vector<1x32xf32>
    %576 = arith.mulf %571, %575 : vector<1x32xf32>
    %577 = arith.index_cast %c8_i32 : i32 to index
    %c0_141 = arith.constant 0 : index
    %578 = vector.load %arg23[%577, %c0_141] : memref<16x32xf32, #tpu.memory_space<vmem>>, vector<1x32xf32>
    tpu.vector_store %arg23[%577, %c0_141], %576 {strides = array<i32>} : memref<16x32xf32, #tpu.memory_space<vmem>>, vector<1x32xf32>,
    %c9_i32 = arith.constant 9 : i32
    %579 = arith.index_cast %c9_i32 : i32 to index
    %c0_142 = arith.constant 0 : index
    %580 = vector.load %arg22[%579, %c0_142] : memref<16x128xf32, #tpu.memory_space<vmem>>, vector<1x128xf32>
    %cst_143 = arith.constant dense<0.000000e+00> : vector<1x128xf32>
    %581 = tpu.matmul %547, %31, %cst_143 {dimension_numbers = #tpu.dot_dimension_numbers<[1], [0], [0], [1], [0, 0, 1, 1], [], []>} : vector<1x32xf32>, vector<32x128xf32>, vector<1x128xf32> -> vector<1x128xf32>
    %582 = arith.addf %580, %581 : vector<1x128xf32>
    %583 = vector.extract_strided_slice %582 {offsets = [0, 0], sizes = [1, 32], strides = [1, 1]} : vector<1x128xf32> to vector<1x32xf32>
    %584 = arith.negf %583 : vector<1x32xf32>
    %585 = math.exp %584 : vector<1x32xf32>
    %cst_144 = arith.constant 1.000000e+00 : f32
    %586 = vector.broadcast %cst_144 : f32 to vector<1x32xf32>
    %587 = arith.addf %586, %585 : vector<1x32xf32>
    %588 = arith.divf %586, %587 : vector<1x32xf32>
    %589 = vector.extract_strided_slice %582 {offsets = [0, 32], sizes = [1, 32], strides = [1, 1]} : vector<1x128xf32> to vector<1x32xf32>
    %590 = arith.negf %589 : vector<1x32xf32>
    %591 = math.exp %590 : vector<1x32xf32>
    %cst_145 = arith.constant 1.000000e+00 : f32
    %592 = vector.broadcast %cst_145 : f32 to vector<1x32xf32>
    %593 = arith.addf %592, %591 : vector<1x32xf32>
    %594 = arith.divf %592, %593 : vector<1x32xf32>
    %595 = vector.extract_strided_slice %582 {offsets = [0, 64], sizes = [1, 32], strides = [1, 1]} : vector<1x128xf32> to vector<1x32xf32>
    %596 = math.tanh %595 : vector<1x32xf32>
    %597 = vector.extract_strided_slice %582 {offsets = [0, 96], sizes = [1, 32], strides = [1, 1]} : vector<1x128xf32> to vector<1x32xf32>
    %598 = arith.negf %597 : vector<1x32xf32>
    %599 = math.exp %598 : vector<1x32xf32>
    %cst_146 = arith.constant 1.000000e+00 : f32
    %600 = vector.broadcast %cst_146 : f32 to vector<1x32xf32>
    %601 = arith.addf %600, %599 : vector<1x32xf32>
    %602 = arith.divf %600, %601 : vector<1x32xf32>
    %603 = arith.mulf %594, %545 : vector<1x32xf32>
    %604 = arith.mulf %588, %596 : vector<1x32xf32>
    %605 = arith.addf %603, %604 : vector<1x32xf32>
    %606 = math.tanh %605 : vector<1x32xf32>
    %607 = arith.mulf %602, %606 : vector<1x32xf32>
    %cst_147 = arith.constant dense<0.000000e+00> : vector<1x128xf32>
    %608 = tpu.matmul %607, %32, %cst_147 {dimension_numbers = #tpu.dot_dimension_numbers<[1], [0], [0], [1], [0, 0, 1, 1], [], []>} : vector<1x32xf32>, vector<32x128xf32>, vector<1x128xf32> -> vector<1x128xf32>
    %cst_148 = arith.constant dense<0.000000e+00> : vector<1x128xf32>
    %609 = tpu.matmul %576, %33, %cst_148 {dimension_numbers = #tpu.dot_dimension_numbers<[1], [0], [0], [1], [0, 0, 1, 1], [], []>} : vector<1x32xf32>, vector<32x128xf32>, vector<1x128xf32> -> vector<1x128xf32>
    %610 = arith.addf %608, %609 : vector<1x128xf32>
    %611 = arith.addf %610, %34 : vector<1x128xf32>
    %612 = vector.extract_strided_slice %611 {offsets = [0, 0], sizes = [1, 32], strides = [1, 1]} : vector<1x128xf32> to vector<1x32xf32>
    %613 = arith.negf %612 : vector<1x32xf32>
    %614 = math.exp %613 : vector<1x32xf32>
    %cst_149 = arith.constant 1.000000e+00 : f32
    %615 = vector.broadcast %cst_149 : f32 to vector<1x32xf32>
    %616 = arith.addf %615, %614 : vector<1x32xf32>
    %617 = arith.divf %615, %616 : vector<1x32xf32>
    %618 = vector.extract_strided_slice %611 {offsets = [0, 32], sizes = [1, 32], strides = [1, 1]} : vector<1x128xf32> to vector<1x32xf32>
    %619 = arith.negf %618 : vector<1x32xf32>
    %620 = math.exp %619 : vector<1x32xf32>
    %cst_150 = arith.constant 1.000000e+00 : f32
    %621 = vector.broadcast %cst_150 : f32 to vector<1x32xf32>
    %622 = arith.addf %621, %620 : vector<1x32xf32>
    %623 = arith.divf %621, %622 : vector<1x32xf32>
    %624 = vector.extract_strided_slice %611 {offsets = [0, 64], sizes = [1, 32], strides = [1, 1]} : vector<1x128xf32> to vector<1x32xf32>
    %625 = math.tanh %624 : vector<1x32xf32>
    %626 = vector.extract_strided_slice %611 {offsets = [0, 96], sizes = [1, 32], strides = [1, 1]} : vector<1x128xf32> to vector<1x32xf32>
    %627 = arith.negf %626 : vector<1x32xf32>
    %628 = math.exp %627 : vector<1x32xf32>
    %cst_151 = arith.constant 1.000000e+00 : f32
    %629 = vector.broadcast %cst_151 : f32 to vector<1x32xf32>
    %630 = arith.addf %629, %628 : vector<1x32xf32>
    %631 = arith.divf %629, %630 : vector<1x32xf32>
    %632 = arith.mulf %623, %574 : vector<1x32xf32>
    %633 = arith.mulf %617, %625 : vector<1x32xf32>
    %634 = arith.addf %632, %633 : vector<1x32xf32>
    %635 = math.tanh %634 : vector<1x32xf32>
    %636 = arith.mulf %631, %635 : vector<1x32xf32>
    %637 = arith.index_cast %c9_i32 : i32 to index
    %c0_152 = arith.constant 0 : index
    %638 = vector.load %arg23[%637, %c0_152] : memref<16x32xf32, #tpu.memory_space<vmem>>, vector<1x32xf32>
    tpu.vector_store %arg23[%637, %c0_152], %636 {strides = array<i32>} : memref<16x32xf32, #tpu.memory_space<vmem>>, vector<1x32xf32>,
    %c10_i32 = arith.constant 10 : i32
    %639 = arith.index_cast %c10_i32 : i32 to index
    %c0_153 = arith.constant 0 : index
    %640 = vector.load %arg22[%639, %c0_153] : memref<16x128xf32, #tpu.memory_space<vmem>>, vector<1x128xf32>
    %cst_154 = arith.constant dense<0.000000e+00> : vector<1x128xf32>
    %641 = tpu.matmul %607, %31, %cst_154 {dimension_numbers = #tpu.dot_dimension_numbers<[1], [0], [0], [1], [0, 0, 1, 1], [], []>} : vector<1x32xf32>, vector<32x128xf32>, vector<1x128xf32> -> vector<1x128xf32>
    %642 = arith.addf %640, %641 : vector<1x128xf32>
    %643 = vector.extract_strided_slice %642 {offsets = [0, 0], sizes = [1, 32], strides = [1, 1]} : vector<1x128xf32> to vector<1x32xf32>
    %644 = arith.negf %643 : vector<1x32xf32>
    %645 = math.exp %644 : vector<1x32xf32>
    %cst_155 = arith.constant 1.000000e+00 : f32
    %646 = vector.broadcast %cst_155 : f32 to vector<1x32xf32>
    %647 = arith.addf %646, %645 : vector<1x32xf32>
    %648 = arith.divf %646, %647 : vector<1x32xf32>
    %649 = vector.extract_strided_slice %642 {offsets = [0, 32], sizes = [1, 32], strides = [1, 1]} : vector<1x128xf32> to vector<1x32xf32>
    %650 = arith.negf %649 : vector<1x32xf32>
    %651 = math.exp %650 : vector<1x32xf32>
    %cst_156 = arith.constant 1.000000e+00 : f32
    %652 = vector.broadcast %cst_156 : f32 to vector<1x32xf32>
    %653 = arith.addf %652, %651 : vector<1x32xf32>
    %654 = arith.divf %652, %653 : vector<1x32xf32>
    %655 = vector.extract_strided_slice %642 {offsets = [0, 64], sizes = [1, 32], strides = [1, 1]} : vector<1x128xf32> to vector<1x32xf32>
    %656 = math.tanh %655 : vector<1x32xf32>
    %657 = vector.extract_strided_slice %642 {offsets = [0, 96], sizes = [1, 32], strides = [1, 1]} : vector<1x128xf32> to vector<1x32xf32>
    %658 = arith.negf %657 : vector<1x32xf32>
    %659 = math.exp %658 : vector<1x32xf32>
    %cst_157 = arith.constant 1.000000e+00 : f32
    %660 = vector.broadcast %cst_157 : f32 to vector<1x32xf32>
    %661 = arith.addf %660, %659 : vector<1x32xf32>
    %662 = arith.divf %660, %661 : vector<1x32xf32>
    %663 = arith.mulf %654, %605 : vector<1x32xf32>
    %664 = arith.mulf %648, %656 : vector<1x32xf32>
    %665 = arith.addf %663, %664 : vector<1x32xf32>
    %666 = math.tanh %665 : vector<1x32xf32>
    %667 = arith.mulf %662, %666 : vector<1x32xf32>
    %cst_158 = arith.constant dense<0.000000e+00> : vector<1x128xf32>
    %668 = tpu.matmul %667, %32, %cst_158 {dimension_numbers = #tpu.dot_dimension_numbers<[1], [0], [0], [1], [0, 0, 1, 1], [], []>} : vector<1x32xf32>, vector<32x128xf32>, vector<1x128xf32> -> vector<1x128xf32>
    %cst_159 = arith.constant dense<0.000000e+00> : vector<1x128xf32>
    %669 = tpu.matmul %636, %33, %cst_159 {dimension_numbers = #tpu.dot_dimension_numbers<[1], [0], [0], [1], [0, 0, 1, 1], [], []>} : vector<1x32xf32>, vector<32x128xf32>, vector<1x128xf32> -> vector<1x128xf32>
    %670 = arith.addf %668, %669 : vector<1x128xf32>
    %671 = arith.addf %670, %34 : vector<1x128xf32>
    %672 = vector.extract_strided_slice %671 {offsets = [0, 0], sizes = [1, 32], strides = [1, 1]} : vector<1x128xf32> to vector<1x32xf32>
    %673 = arith.negf %672 : vector<1x32xf32>
    %674 = math.exp %673 : vector<1x32xf32>
    %cst_160 = arith.constant 1.000000e+00 : f32
    %675 = vector.broadcast %cst_160 : f32 to vector<1x32xf32>
    %676 = arith.addf %675, %674 : vector<1x32xf32>
    %677 = arith.divf %675, %676 : vector<1x32xf32>
    %678 = vector.extract_strided_slice %671 {offsets = [0, 32], sizes = [1, 32], strides = [1, 1]} : vector<1x128xf32> to vector<1x32xf32>
    %679 = arith.negf %678 : vector<1x32xf32>
    %680 = math.exp %679 : vector<1x32xf32>
    %cst_161 = arith.constant 1.000000e+00 : f32
    %681 = vector.broadcast %cst_161 : f32 to vector<1x32xf32>
    %682 = arith.addf %681, %680 : vector<1x32xf32>
    %683 = arith.divf %681, %682 : vector<1x32xf32>
    %684 = vector.extract_strided_slice %671 {offsets = [0, 64], sizes = [1, 32], strides = [1, 1]} : vector<1x128xf32> to vector<1x32xf32>
    %685 = math.tanh %684 : vector<1x32xf32>
    %686 = vector.extract_strided_slice %671 {offsets = [0, 96], sizes = [1, 32], strides = [1, 1]} : vector<1x128xf32> to vector<1x32xf32>
    %687 = arith.negf %686 : vector<1x32xf32>
    %688 = math.exp %687 : vector<1x32xf32>
    %cst_162 = arith.constant 1.000000e+00 : f32
    %689 = vector.broadcast %cst_162 : f32 to vector<1x32xf32>
    %690 = arith.addf %689, %688 : vector<1x32xf32>
    %691 = arith.divf %689, %690 : vector<1x32xf32>
    %692 = arith.mulf %683, %634 : vector<1x32xf32>
    %693 = arith.mulf %677, %685 : vector<1x32xf32>
    %694 = arith.addf %692, %693 : vector<1x32xf32>
    %695 = math.tanh %694 : vector<1x32xf32>
    %696 = arith.mulf %691, %695 : vector<1x32xf32>
    %697 = arith.index_cast %c10_i32 : i32 to index
    %c0_163 = arith.constant 0 : index
    %698 = vector.load %arg23[%697, %c0_163] : memref<16x32xf32, #tpu.memory_space<vmem>>, vector<1x32xf32>
    tpu.vector_store %arg23[%697, %c0_163], %696 {strides = array<i32>} : memref<16x32xf32, #tpu.memory_space<vmem>>, vector<1x32xf32>,
    %c11_i32 = arith.constant 11 : i32
    %699 = arith.index_cast %c11_i32 : i32 to index
    %c0_164 = arith.constant 0 : index
    %700 = vector.load %arg22[%699, %c0_164] : memref<16x128xf32, #tpu.memory_space<vmem>>, vector<1x128xf32>
    %cst_165 = arith.constant dense<0.000000e+00> : vector<1x128xf32>
    %701 = tpu.matmul %667, %31, %cst_165 {dimension_numbers = #tpu.dot_dimension_numbers<[1], [0], [0], [1], [0, 0, 1, 1], [], []>} : vector<1x32xf32>, vector<32x128xf32>, vector<1x128xf32> -> vector<1x128xf32>
    %702 = arith.addf %700, %701 : vector<1x128xf32>
    %703 = vector.extract_strided_slice %702 {offsets = [0, 0], sizes = [1, 32], strides = [1, 1]} : vector<1x128xf32> to vector<1x32xf32>
    %704 = arith.negf %703 : vector<1x32xf32>
    %705 = math.exp %704 : vector<1x32xf32>
    %cst_166 = arith.constant 1.000000e+00 : f32
    %706 = vector.broadcast %cst_166 : f32 to vector<1x32xf32>
    %707 = arith.addf %706, %705 : vector<1x32xf32>
    %708 = arith.divf %706, %707 : vector<1x32xf32>
    %709 = vector.extract_strided_slice %702 {offsets = [0, 32], sizes = [1, 32], strides = [1, 1]} : vector<1x128xf32> to vector<1x32xf32>
    %710 = arith.negf %709 : vector<1x32xf32>
    %711 = math.exp %710 : vector<1x32xf32>
    %cst_167 = arith.constant 1.000000e+00 : f32
    %712 = vector.broadcast %cst_167 : f32 to vector<1x32xf32>
    %713 = arith.addf %712, %711 : vector<1x32xf32>
    %714 = arith.divf %712, %713 : vector<1x32xf32>
    %715 = vector.extract_strided_slice %702 {offsets = [0, 64], sizes = [1, 32], strides = [1, 1]} : vector<1x128xf32> to vector<1x32xf32>
    %716 = math.tanh %715 : vector<1x32xf32>
    %717 = vector.extract_strided_slice %702 {offsets = [0, 96], sizes = [1, 32], strides = [1, 1]} : vector<1x128xf32> to vector<1x32xf32>
    %718 = arith.negf %717 : vector<1x32xf32>
    %719 = math.exp %718 : vector<1x32xf32>
    %cst_168 = arith.constant 1.000000e+00 : f32
    %720 = vector.broadcast %cst_168 : f32 to vector<1x32xf32>
    %721 = arith.addf %720, %719 : vector<1x32xf32>
    %722 = arith.divf %720, %721 : vector<1x32xf32>
    %723 = arith.mulf %714, %665 : vector<1x32xf32>
    %724 = arith.mulf %708, %716 : vector<1x32xf32>
    %725 = arith.addf %723, %724 : vector<1x32xf32>
    %726 = math.tanh %725 : vector<1x32xf32>
    %727 = arith.mulf %722, %726 : vector<1x32xf32>
    %cst_169 = arith.constant dense<0.000000e+00> : vector<1x128xf32>
    %728 = tpu.matmul %727, %32, %cst_169 {dimension_numbers = #tpu.dot_dimension_numbers<[1], [0], [0], [1], [0, 0, 1, 1], [], []>} : vector<1x32xf32>, vector<32x128xf32>, vector<1x128xf32> -> vector<1x128xf32>
    %cst_170 = arith.constant dense<0.000000e+00> : vector<1x128xf32>
    %729 = tpu.matmul %696, %33, %cst_170 {dimension_numbers = #tpu.dot_dimension_numbers<[1], [0], [0], [1], [0, 0, 1, 1], [], []>} : vector<1x32xf32>, vector<32x128xf32>, vector<1x128xf32> -> vector<1x128xf32>
    %730 = arith.addf %728, %729 : vector<1x128xf32>
    %731 = arith.addf %730, %34 : vector<1x128xf32>
    %732 = vector.extract_strided_slice %731 {offsets = [0, 0], sizes = [1, 32], strides = [1, 1]} : vector<1x128xf32> to vector<1x32xf32>
    %733 = arith.negf %732 : vector<1x32xf32>
    %734 = math.exp %733 : vector<1x32xf32>
    %cst_171 = arith.constant 1.000000e+00 : f32
    %735 = vector.broadcast %cst_171 : f32 to vector<1x32xf32>
    %736 = arith.addf %735, %734 : vector<1x32xf32>
    %737 = arith.divf %735, %736 : vector<1x32xf32>
    %738 = vector.extract_strided_slice %731 {offsets = [0, 32], sizes = [1, 32], strides = [1, 1]} : vector<1x128xf32> to vector<1x32xf32>
    %739 = arith.negf %738 : vector<1x32xf32>
    %740 = math.exp %739 : vector<1x32xf32>
    %cst_172 = arith.constant 1.000000e+00 : f32
    %741 = vector.broadcast %cst_172 : f32 to vector<1x32xf32>
    %742 = arith.addf %741, %740 : vector<1x32xf32>
    %743 = arith.divf %741, %742 : vector<1x32xf32>
    %744 = vector.extract_strided_slice %731 {offsets = [0, 64], sizes = [1, 32], strides = [1, 1]} : vector<1x128xf32> to vector<1x32xf32>
    %745 = math.tanh %744 : vector<1x32xf32>
    %746 = vector.extract_strided_slice %731 {offsets = [0, 96], sizes = [1, 32], strides = [1, 1]} : vector<1x128xf32> to vector<1x32xf32>
    %747 = arith.negf %746 : vector<1x32xf32>
    %748 = math.exp %747 : vector<1x32xf32>
    %cst_173 = arith.constant 1.000000e+00 : f32
    %749 = vector.broadcast %cst_173 : f32 to vector<1x32xf32>
    %750 = arith.addf %749, %748 : vector<1x32xf32>
    %751 = arith.divf %749, %750 : vector<1x32xf32>
    %752 = arith.mulf %743, %694 : vector<1x32xf32>
    %753 = arith.mulf %737, %745 : vector<1x32xf32>
    %754 = arith.addf %752, %753 : vector<1x32xf32>
    %755 = math.tanh %754 : vector<1x32xf32>
    %756 = arith.mulf %751, %755 : vector<1x32xf32>
    %757 = arith.index_cast %c11_i32 : i32 to index
    %c0_174 = arith.constant 0 : index
    %758 = vector.load %arg23[%757, %c0_174] : memref<16x32xf32, #tpu.memory_space<vmem>>, vector<1x32xf32>
    tpu.vector_store %arg23[%757, %c0_174], %756 {strides = array<i32>} : memref<16x32xf32, #tpu.memory_space<vmem>>, vector<1x32xf32>,
    %c12_i32 = arith.constant 12 : i32
    %759 = arith.index_cast %c12_i32 : i32 to index
    %c0_175 = arith.constant 0 : index
    %760 = vector.load %arg22[%759, %c0_175] : memref<16x128xf32, #tpu.memory_space<vmem>>, vector<1x128xf32>
    %cst_176 = arith.constant dense<0.000000e+00> : vector<1x128xf32>
    %761 = tpu.matmul %727, %31, %cst_176 {dimension_numbers = #tpu.dot_dimension_numbers<[1], [0], [0], [1], [0, 0, 1, 1], [], []>} : vector<1x32xf32>, vector<32x128xf32>, vector<1x128xf32> -> vector<1x128xf32>
    %762 = arith.addf %760, %761 : vector<1x128xf32>
    %763 = vector.extract_strided_slice %762 {offsets = [0, 0], sizes = [1, 32], strides = [1, 1]} : vector<1x128xf32> to vector<1x32xf32>
    %764 = arith.negf %763 : vector<1x32xf32>
    %765 = math.exp %764 : vector<1x32xf32>
    %cst_177 = arith.constant 1.000000e+00 : f32
    %766 = vector.broadcast %cst_177 : f32 to vector<1x32xf32>
    %767 = arith.addf %766, %765 : vector<1x32xf32>
    %768 = arith.divf %766, %767 : vector<1x32xf32>
    %769 = vector.extract_strided_slice %762 {offsets = [0, 32], sizes = [1, 32], strides = [1, 1]} : vector<1x128xf32> to vector<1x32xf32>
    %770 = arith.negf %769 : vector<1x32xf32>
    %771 = math.exp %770 : vector<1x32xf32>
    %cst_178 = arith.constant 1.000000e+00 : f32
    %772 = vector.broadcast %cst_178 : f32 to vector<1x32xf32>
    %773 = arith.addf %772, %771 : vector<1x32xf32>
    %774 = arith.divf %772, %773 : vector<1x32xf32>
    %775 = vector.extract_strided_slice %762 {offsets = [0, 64], sizes = [1, 32], strides = [1, 1]} : vector<1x128xf32> to vector<1x32xf32>
    %776 = math.tanh %775 : vector<1x32xf32>
    %777 = vector.extract_strided_slice %762 {offsets = [0, 96], sizes = [1, 32], strides = [1, 1]} : vector<1x128xf32> to vector<1x32xf32>
    %778 = arith.negf %777 : vector<1x32xf32>
    %779 = math.exp %778 : vector<1x32xf32>
    %cst_179 = arith.constant 1.000000e+00 : f32
    %780 = vector.broadcast %cst_179 : f32 to vector<1x32xf32>
    %781 = arith.addf %780, %779 : vector<1x32xf32>
    %782 = arith.divf %780, %781 : vector<1x32xf32>
    %783 = arith.mulf %774, %725 : vector<1x32xf32>
    %784 = arith.mulf %768, %776 : vector<1x32xf32>
    %785 = arith.addf %783, %784 : vector<1x32xf32>
    %786 = math.tanh %785 : vector<1x32xf32>
    %787 = arith.mulf %782, %786 : vector<1x32xf32>
    %cst_180 = arith.constant dense<0.000000e+00> : vector<1x128xf32>
    %788 = tpu.matmul %787, %32, %cst_180 {dimension_numbers = #tpu.dot_dimension_numbers<[1], [0], [0], [1], [0, 0, 1, 1], [], []>} : vector<1x32xf32>, vector<32x128xf32>, vector<1x128xf32> -> vector<1x128xf32>
    %cst_181 = arith.constant dense<0.000000e+00> : vector<1x128xf32>
    %789 = tpu.matmul %756, %33, %cst_181 {dimension_numbers = #tpu.dot_dimension_numbers<[1], [0], [0], [1], [0, 0, 1, 1], [], []>} : vector<1x32xf32>, vector<32x128xf32>, vector<1x128xf32> -> vector<1x128xf32>
    %790 = arith.addf %788, %789 : vector<1x128xf32>
    %791 = arith.addf %790, %34 : vector<1x128xf32>
    %792 = vector.extract_strided_slice %791 {offsets = [0, 0], sizes = [1, 32], strides = [1, 1]} : vector<1x128xf32> to vector<1x32xf32>
    %793 = arith.negf %792 : vector<1x32xf32>
    %794 = math.exp %793 : vector<1x32xf32>
    %cst_182 = arith.constant 1.000000e+00 : f32
    %795 = vector.broadcast %cst_182 : f32 to vector<1x32xf32>
    %796 = arith.addf %795, %794 : vector<1x32xf32>
    %797 = arith.divf %795, %796 : vector<1x32xf32>
    %798 = vector.extract_strided_slice %791 {offsets = [0, 32], sizes = [1, 32], strides = [1, 1]} : vector<1x128xf32> to vector<1x32xf32>
    %799 = arith.negf %798 : vector<1x32xf32>
    %800 = math.exp %799 : vector<1x32xf32>
    %cst_183 = arith.constant 1.000000e+00 : f32
    %801 = vector.broadcast %cst_183 : f32 to vector<1x32xf32>
    %802 = arith.addf %801, %800 : vector<1x32xf32>
    %803 = arith.divf %801, %802 : vector<1x32xf32>
    %804 = vector.extract_strided_slice %791 {offsets = [0, 64], sizes = [1, 32], strides = [1, 1]} : vector<1x128xf32> to vector<1x32xf32>
    %805 = math.tanh %804 : vector<1x32xf32>
    %806 = vector.extract_strided_slice %791 {offsets = [0, 96], sizes = [1, 32], strides = [1, 1]} : vector<1x128xf32> to vector<1x32xf32>
    %807 = arith.negf %806 : vector<1x32xf32>
    %808 = math.exp %807 : vector<1x32xf32>
    %cst_184 = arith.constant 1.000000e+00 : f32
    %809 = vector.broadcast %cst_184 : f32 to vector<1x32xf32>
    %810 = arith.addf %809, %808 : vector<1x32xf32>
    %811 = arith.divf %809, %810 : vector<1x32xf32>
    %812 = arith.mulf %803, %754 : vector<1x32xf32>
    %813 = arith.mulf %797, %805 : vector<1x32xf32>
    %814 = arith.addf %812, %813 : vector<1x32xf32>
    %815 = math.tanh %814 : vector<1x32xf32>
    %816 = arith.mulf %811, %815 : vector<1x32xf32>
    %817 = arith.index_cast %c12_i32 : i32 to index
    %c0_185 = arith.constant 0 : index
    %818 = vector.load %arg23[%817, %c0_185] : memref<16x32xf32, #tpu.memory_space<vmem>>, vector<1x32xf32>
    tpu.vector_store %arg23[%817, %c0_185], %816 {strides = array<i32>} : memref<16x32xf32, #tpu.memory_space<vmem>>, vector<1x32xf32>,
    %c13_i32 = arith.constant 13 : i32
    %819 = arith.index_cast %c13_i32 : i32 to index
    %c0_186 = arith.constant 0 : index
    %820 = vector.load %arg22[%819, %c0_186] : memref<16x128xf32, #tpu.memory_space<vmem>>, vector<1x128xf32>
    %cst_187 = arith.constant dense<0.000000e+00> : vector<1x128xf32>
    %821 = tpu.matmul %787, %31, %cst_187 {dimension_numbers = #tpu.dot_dimension_numbers<[1], [0], [0], [1], [0, 0, 1, 1], [], []>} : vector<1x32xf32>, vector<32x128xf32>, vector<1x128xf32> -> vector<1x128xf32>
    %822 = arith.addf %820, %821 : vector<1x128xf32>
    %823 = vector.extract_strided_slice %822 {offsets = [0, 0], sizes = [1, 32], strides = [1, 1]} : vector<1x128xf32> to vector<1x32xf32>
    %824 = arith.negf %823 : vector<1x32xf32>
    %825 = math.exp %824 : vector<1x32xf32>
    %cst_188 = arith.constant 1.000000e+00 : f32
    %826 = vector.broadcast %cst_188 : f32 to vector<1x32xf32>
    %827 = arith.addf %826, %825 : vector<1x32xf32>
    %828 = arith.divf %826, %827 : vector<1x32xf32>
    %829 = vector.extract_strided_slice %822 {offsets = [0, 32], sizes = [1, 32], strides = [1, 1]} : vector<1x128xf32> to vector<1x32xf32>
    %830 = arith.negf %829 : vector<1x32xf32>
    %831 = math.exp %830 : vector<1x32xf32>
    %cst_189 = arith.constant 1.000000e+00 : f32
    %832 = vector.broadcast %cst_189 : f32 to vector<1x32xf32>
    %833 = arith.addf %832, %831 : vector<1x32xf32>
    %834 = arith.divf %832, %833 : vector<1x32xf32>
    %835 = vector.extract_strided_slice %822 {offsets = [0, 64], sizes = [1, 32], strides = [1, 1]} : vector<1x128xf32> to vector<1x32xf32>
    %836 = math.tanh %835 : vector<1x32xf32>
    %837 = vector.extract_strided_slice %822 {offsets = [0, 96], sizes = [1, 32], strides = [1, 1]} : vector<1x128xf32> to vector<1x32xf32>
    %838 = arith.negf %837 : vector<1x32xf32>
    %839 = math.exp %838 : vector<1x32xf32>
    %cst_190 = arith.constant 1.000000e+00 : f32
    %840 = vector.broadcast %cst_190 : f32 to vector<1x32xf32>
    %841 = arith.addf %840, %839 : vector<1x32xf32>
    %842 = arith.divf %840, %841 : vector<1x32xf32>
    %843 = arith.mulf %834, %785 : vector<1x32xf32>
    %844 = arith.mulf %828, %836 : vector<1x32xf32>
    %845 = arith.addf %843, %844 : vector<1x32xf32>
    %846 = math.tanh %845 : vector<1x32xf32>
    %847 = arith.mulf %842, %846 : vector<1x32xf32>
    %cst_191 = arith.constant dense<0.000000e+00> : vector<1x128xf32>
    %848 = tpu.matmul %847, %32, %cst_191 {dimension_numbers = #tpu.dot_dimension_numbers<[1], [0], [0], [1], [0, 0, 1, 1], [], []>} : vector<1x32xf32>, vector<32x128xf32>, vector<1x128xf32> -> vector<1x128xf32>
    %cst_192 = arith.constant dense<0.000000e+00> : vector<1x128xf32>
    %849 = tpu.matmul %816, %33, %cst_192 {dimension_numbers = #tpu.dot_dimension_numbers<[1], [0], [0], [1], [0, 0, 1, 1], [], []>} : vector<1x32xf32>, vector<32x128xf32>, vector<1x128xf32> -> vector<1x128xf32>
    %850 = arith.addf %848, %849 : vector<1x128xf32>
    %851 = arith.addf %850, %34 : vector<1x128xf32>
    %852 = vector.extract_strided_slice %851 {offsets = [0, 0], sizes = [1, 32], strides = [1, 1]} : vector<1x128xf32> to vector<1x32xf32>
    %853 = arith.negf %852 : vector<1x32xf32>
    %854 = math.exp %853 : vector<1x32xf32>
    %cst_193 = arith.constant 1.000000e+00 : f32
    %855 = vector.broadcast %cst_193 : f32 to vector<1x32xf32>
    %856 = arith.addf %855, %854 : vector<1x32xf32>
    %857 = arith.divf %855, %856 : vector<1x32xf32>
    %858 = vector.extract_strided_slice %851 {offsets = [0, 32], sizes = [1, 32], strides = [1, 1]} : vector<1x128xf32> to vector<1x32xf32>
    %859 = arith.negf %858 : vector<1x32xf32>
    %860 = math.exp %859 : vector<1x32xf32>
    %cst_194 = arith.constant 1.000000e+00 : f32
    %861 = vector.broadcast %cst_194 : f32 to vector<1x32xf32>
    %862 = arith.addf %861, %860 : vector<1x32xf32>
    %863 = arith.divf %861, %862 : vector<1x32xf32>
    %864 = vector.extract_strided_slice %851 {offsets = [0, 64], sizes = [1, 32], strides = [1, 1]} : vector<1x128xf32> to vector<1x32xf32>
    %865 = math.tanh %864 : vector<1x32xf32>
    %866 = vector.extract_strided_slice %851 {offsets = [0, 96], sizes = [1, 32], strides = [1, 1]} : vector<1x128xf32> to vector<1x32xf32>
    %867 = arith.negf %866 : vector<1x32xf32>
    %868 = math.exp %867 : vector<1x32xf32>
    %cst_195 = arith.constant 1.000000e+00 : f32
    %869 = vector.broadcast %cst_195 : f32 to vector<1x32xf32>
    %870 = arith.addf %869, %868 : vector<1x32xf32>
    %871 = arith.divf %869, %870 : vector<1x32xf32>
    %872 = arith.mulf %863, %814 : vector<1x32xf32>
    %873 = arith.mulf %857, %865 : vector<1x32xf32>
    %874 = arith.addf %872, %873 : vector<1x32xf32>
    %875 = math.tanh %874 : vector<1x32xf32>
    %876 = arith.mulf %871, %875 : vector<1x32xf32>
    %877 = arith.index_cast %c13_i32 : i32 to index
    %c0_196 = arith.constant 0 : index
    %878 = vector.load %arg23[%877, %c0_196] : memref<16x32xf32, #tpu.memory_space<vmem>>, vector<1x32xf32>
    tpu.vector_store %arg23[%877, %c0_196], %876 {strides = array<i32>} : memref<16x32xf32, #tpu.memory_space<vmem>>, vector<1x32xf32>,
    %c14_i32 = arith.constant 14 : i32
    %879 = arith.index_cast %c14_i32 : i32 to index
    %c0_197 = arith.constant 0 : index
    %880 = vector.load %arg22[%879, %c0_197] : memref<16x128xf32, #tpu.memory_space<vmem>>, vector<1x128xf32>
    %cst_198 = arith.constant dense<0.000000e+00> : vector<1x128xf32>
    %881 = tpu.matmul %847, %31, %cst_198 {dimension_numbers = #tpu.dot_dimension_numbers<[1], [0], [0], [1], [0, 0, 1, 1], [], []>} : vector<1x32xf32>, vector<32x128xf32>, vector<1x128xf32> -> vector<1x128xf32>
    %882 = arith.addf %880, %881 : vector<1x128xf32>
    %883 = vector.extract_strided_slice %882 {offsets = [0, 0], sizes = [1, 32], strides = [1, 1]} : vector<1x128xf32> to vector<1x32xf32>
    %884 = arith.negf %883 : vector<1x32xf32>
    %885 = math.exp %884 : vector<1x32xf32>
    %cst_199 = arith.constant 1.000000e+00 : f32
    %886 = vector.broadcast %cst_199 : f32 to vector<1x32xf32>
    %887 = arith.addf %886, %885 : vector<1x32xf32>
    %888 = arith.divf %886, %887 : vector<1x32xf32>
    %889 = vector.extract_strided_slice %882 {offsets = [0, 32], sizes = [1, 32], strides = [1, 1]} : vector<1x128xf32> to vector<1x32xf32>
    %890 = arith.negf %889 : vector<1x32xf32>
    %891 = math.exp %890 : vector<1x32xf32>
    %cst_200 = arith.constant 1.000000e+00 : f32
    %892 = vector.broadcast %cst_200 : f32 to vector<1x32xf32>
    %893 = arith.addf %892, %891 : vector<1x32xf32>
    %894 = arith.divf %892, %893 : vector<1x32xf32>
    %895 = vector.extract_strided_slice %882 {offsets = [0, 64], sizes = [1, 32], strides = [1, 1]} : vector<1x128xf32> to vector<1x32xf32>
    %896 = math.tanh %895 : vector<1x32xf32>
    %897 = vector.extract_strided_slice %882 {offsets = [0, 96], sizes = [1, 32], strides = [1, 1]} : vector<1x128xf32> to vector<1x32xf32>
    %898 = arith.negf %897 : vector<1x32xf32>
    %899 = math.exp %898 : vector<1x32xf32>
    %cst_201 = arith.constant 1.000000e+00 : f32
    %900 = vector.broadcast %cst_201 : f32 to vector<1x32xf32>
    %901 = arith.addf %900, %899 : vector<1x32xf32>
    %902 = arith.divf %900, %901 : vector<1x32xf32>
    %903 = arith.mulf %894, %845 : vector<1x32xf32>
    %904 = arith.mulf %888, %896 : vector<1x32xf32>
    %905 = arith.addf %903, %904 : vector<1x32xf32>
    %906 = math.tanh %905 : vector<1x32xf32>
    %907 = arith.mulf %902, %906 : vector<1x32xf32>
    %cst_202 = arith.constant dense<0.000000e+00> : vector<1x128xf32>
    %908 = tpu.matmul %907, %32, %cst_202 {dimension_numbers = #tpu.dot_dimension_numbers<[1], [0], [0], [1], [0, 0, 1, 1], [], []>} : vector<1x32xf32>, vector<32x128xf32>, vector<1x128xf32> -> vector<1x128xf32>
    %cst_203 = arith.constant dense<0.000000e+00> : vector<1x128xf32>
    %909 = tpu.matmul %876, %33, %cst_203 {dimension_numbers = #tpu.dot_dimension_numbers<[1], [0], [0], [1], [0, 0, 1, 1], [], []>} : vector<1x32xf32>, vector<32x128xf32>, vector<1x128xf32> -> vector<1x128xf32>
    %910 = arith.addf %908, %909 : vector<1x128xf32>
    %911 = arith.addf %910, %34 : vector<1x128xf32>
    %912 = vector.extract_strided_slice %911 {offsets = [0, 0], sizes = [1, 32], strides = [1, 1]} : vector<1x128xf32> to vector<1x32xf32>
    %913 = arith.negf %912 : vector<1x32xf32>
    %914 = math.exp %913 : vector<1x32xf32>
    %cst_204 = arith.constant 1.000000e+00 : f32
    %915 = vector.broadcast %cst_204 : f32 to vector<1x32xf32>
    %916 = arith.addf %915, %914 : vector<1x32xf32>
    %917 = arith.divf %915, %916 : vector<1x32xf32>
    %918 = vector.extract_strided_slice %911 {offsets = [0, 32], sizes = [1, 32], strides = [1, 1]} : vector<1x128xf32> to vector<1x32xf32>
    %919 = arith.negf %918 : vector<1x32xf32>
    %920 = math.exp %919 : vector<1x32xf32>
    %cst_205 = arith.constant 1.000000e+00 : f32
    %921 = vector.broadcast %cst_205 : f32 to vector<1x32xf32>
    %922 = arith.addf %921, %920 : vector<1x32xf32>
    %923 = arith.divf %921, %922 : vector<1x32xf32>
    %924 = vector.extract_strided_slice %911 {offsets = [0, 64], sizes = [1, 32], strides = [1, 1]} : vector<1x128xf32> to vector<1x32xf32>
    %925 = math.tanh %924 : vector<1x32xf32>
    %926 = vector.extract_strided_slice %911 {offsets = [0, 96], sizes = [1, 32], strides = [1, 1]} : vector<1x128xf32> to vector<1x32xf32>
    %927 = arith.negf %926 : vector<1x32xf32>
    %928 = math.exp %927 : vector<1x32xf32>
    %cst_206 = arith.constant 1.000000e+00 : f32
    %929 = vector.broadcast %cst_206 : f32 to vector<1x32xf32>
    %930 = arith.addf %929, %928 : vector<1x32xf32>
    %931 = arith.divf %929, %930 : vector<1x32xf32>
    %932 = arith.mulf %923, %874 : vector<1x32xf32>
    %933 = arith.mulf %917, %925 : vector<1x32xf32>
    %934 = arith.addf %932, %933 : vector<1x32xf32>
    %935 = math.tanh %934 : vector<1x32xf32>
    %936 = arith.mulf %931, %935 : vector<1x32xf32>
    %937 = arith.index_cast %c14_i32 : i32 to index
    %c0_207 = arith.constant 0 : index
    %938 = vector.load %arg23[%937, %c0_207] : memref<16x32xf32, #tpu.memory_space<vmem>>, vector<1x32xf32>
    tpu.vector_store %arg23[%937, %c0_207], %936 {strides = array<i32>} : memref<16x32xf32, #tpu.memory_space<vmem>>, vector<1x32xf32>,
    %c15_i32 = arith.constant 15 : i32
    %939 = arith.index_cast %c15_i32 : i32 to index
    %c0_208 = arith.constant 0 : index
    %940 = vector.load %arg22[%939, %c0_208] : memref<16x128xf32, #tpu.memory_space<vmem>>, vector<1x128xf32>
    %cst_209 = arith.constant dense<0.000000e+00> : vector<1x128xf32>
    %941 = tpu.matmul %907, %31, %cst_209 {dimension_numbers = #tpu.dot_dimension_numbers<[1], [0], [0], [1], [0, 0, 1, 1], [], []>} : vector<1x32xf32>, vector<32x128xf32>, vector<1x128xf32> -> vector<1x128xf32>
    %942 = arith.addf %940, %941 : vector<1x128xf32>
    %943 = vector.extract_strided_slice %942 {offsets = [0, 0], sizes = [1, 32], strides = [1, 1]} : vector<1x128xf32> to vector<1x32xf32>
    %944 = arith.negf %943 : vector<1x32xf32>
    %945 = math.exp %944 : vector<1x32xf32>
    %cst_210 = arith.constant 1.000000e+00 : f32
    %946 = vector.broadcast %cst_210 : f32 to vector<1x32xf32>
    %947 = arith.addf %946, %945 : vector<1x32xf32>
    %948 = arith.divf %946, %947 : vector<1x32xf32>
    %949 = vector.extract_strided_slice %942 {offsets = [0, 32], sizes = [1, 32], strides = [1, 1]} : vector<1x128xf32> to vector<1x32xf32>
    %950 = arith.negf %949 : vector<1x32xf32>
    %951 = math.exp %950 : vector<1x32xf32>
    %cst_211 = arith.constant 1.000000e+00 : f32
    %952 = vector.broadcast %cst_211 : f32 to vector<1x32xf32>
    %953 = arith.addf %952, %951 : vector<1x32xf32>
    %954 = arith.divf %952, %953 : vector<1x32xf32>
    %955 = vector.extract_strided_slice %942 {offsets = [0, 64], sizes = [1, 32], strides = [1, 1]} : vector<1x128xf32> to vector<1x32xf32>
    %956 = math.tanh %955 : vector<1x32xf32>
    %957 = vector.extract_strided_slice %942 {offsets = [0, 96], sizes = [1, 32], strides = [1, 1]} : vector<1x128xf32> to vector<1x32xf32>
    %958 = arith.negf %957 : vector<1x32xf32>
    %959 = math.exp %958 : vector<1x32xf32>
    %cst_212 = arith.constant 1.000000e+00 : f32
    %960 = vector.broadcast %cst_212 : f32 to vector<1x32xf32>
    %961 = arith.addf %960, %959 : vector<1x32xf32>
    %962 = arith.divf %960, %961 : vector<1x32xf32>
    %963 = arith.mulf %954, %905 : vector<1x32xf32>
    %964 = arith.mulf %948, %956 : vector<1x32xf32>
    %965 = arith.addf %963, %964 : vector<1x32xf32>
    %966 = math.tanh %965 : vector<1x32xf32>
    %967 = arith.mulf %962, %966 : vector<1x32xf32>
    %cst_213 = arith.constant dense<0.000000e+00> : vector<1x128xf32>
    %968 = tpu.matmul %967, %32, %cst_213 {dimension_numbers = #tpu.dot_dimension_numbers<[1], [0], [0], [1], [0, 0, 1, 1], [], []>} : vector<1x32xf32>, vector<32x128xf32>, vector<1x128xf32> -> vector<1x128xf32>
    %cst_214 = arith.constant dense<0.000000e+00> : vector<1x128xf32>
    %969 = tpu.matmul %936, %33, %cst_214 {dimension_numbers = #tpu.dot_dimension_numbers<[1], [0], [0], [1], [0, 0, 1, 1], [], []>} : vector<1x32xf32>, vector<32x128xf32>, vector<1x128xf32> -> vector<1x128xf32>
    %970 = arith.addf %968, %969 : vector<1x128xf32>
    %971 = arith.addf %970, %34 : vector<1x128xf32>
    %972 = vector.extract_strided_slice %971 {offsets = [0, 0], sizes = [1, 32], strides = [1, 1]} : vector<1x128xf32> to vector<1x32xf32>
    %973 = arith.negf %972 : vector<1x32xf32>
    %974 = math.exp %973 : vector<1x32xf32>
    %cst_215 = arith.constant 1.000000e+00 : f32
    %975 = vector.broadcast %cst_215 : f32 to vector<1x32xf32>
    %976 = arith.addf %975, %974 : vector<1x32xf32>
    %977 = arith.divf %975, %976 : vector<1x32xf32>
    %978 = vector.extract_strided_slice %971 {offsets = [0, 32], sizes = [1, 32], strides = [1, 1]} : vector<1x128xf32> to vector<1x32xf32>
    %979 = arith.negf %978 : vector<1x32xf32>
    %980 = math.exp %979 : vector<1x32xf32>
    %cst_216 = arith.constant 1.000000e+00 : f32
    %981 = vector.broadcast %cst_216 : f32 to vector<1x32xf32>
    %982 = arith.addf %981, %980 : vector<1x32xf32>
    %983 = arith.divf %981, %982 : vector<1x32xf32>
    %984 = vector.extract_strided_slice %971 {offsets = [0, 64], sizes = [1, 32], strides = [1, 1]} : vector<1x128xf32> to vector<1x32xf32>
    %985 = math.tanh %984 : vector<1x32xf32>
    %986 = vector.extract_strided_slice %971 {offsets = [0, 96], sizes = [1, 32], strides = [1, 1]} : vector<1x128xf32> to vector<1x32xf32>
    %987 = arith.negf %986 : vector<1x32xf32>
    %988 = math.exp %987 : vector<1x32xf32>
    %cst_217 = arith.constant 1.000000e+00 : f32
    %989 = vector.broadcast %cst_217 : f32 to vector<1x32xf32>
    %990 = arith.addf %989, %988 : vector<1x32xf32>
    %991 = arith.divf %989, %990 : vector<1x32xf32>
    %992 = arith.mulf %983, %934 : vector<1x32xf32>
    %993 = arith.mulf %977, %985 : vector<1x32xf32>
    %994 = arith.addf %992, %993 : vector<1x32xf32>
    %995 = math.tanh %994 : vector<1x32xf32>
    %996 = arith.mulf %991, %995 : vector<1x32xf32>
    %997 = arith.index_cast %c15_i32 : i32 to index
    %c0_218 = arith.constant 0 : index
    %998 = vector.load %arg23[%997, %c0_218] : memref<16x32xf32, #tpu.memory_space<vmem>>, vector<1x32xf32>
    tpu.vector_store %arg23[%997, %c0_218], %996 {strides = array<i32>} : memref<16x32xf32, #tpu.memory_space<vmem>>, vector<1x32xf32>,
    %c16_i32 = arith.constant 16 : i32
    %c0_219 = arith.constant 0 : index
    %c0_220 = arith.constant 0 : index
    %999 = vector.load %arg18[%c0_219, %c0_220] : memref<1x32xf32, #tpu.memory_space<vmem>>, vector<1x32xf32>
    tpu.vector_store %arg18[%c0_219, %c0_220], %967 {strides = array<i32>} : memref<1x32xf32, #tpu.memory_space<vmem>>, vector<1x32xf32>,
    %c0_221 = arith.constant 0 : index
    %c0_222 = arith.constant 0 : index
    %1000 = vector.load %arg19[%c0_221, %c0_222] : memref<1x32xf32, #tpu.memory_space<vmem>>, vector<1x32xf32>
    tpu.vector_store %arg19[%c0_221, %c0_222], %965 {strides = array<i32>} : memref<1x32xf32, #tpu.memory_space<vmem>>, vector<1x32xf32>,
    %c0_223 = arith.constant 0 : index
    %c0_224 = arith.constant 0 : index
    %1001 = vector.load %arg20[%c0_223, %c0_224] : memref<1x32xf32, #tpu.memory_space<vmem>>, vector<1x32xf32>
    tpu.vector_store %arg20[%c0_223, %c0_224], %996 {strides = array<i32>} : memref<1x32xf32, #tpu.memory_space<vmem>>, vector<1x32xf32>,
    %c0_225 = arith.constant 0 : index
    %c0_226 = arith.constant 0 : index
    %1002 = vector.load %arg21[%c0_225, %c0_226] : memref<1x32xf32, #tpu.memory_space<vmem>>, vector<1x32xf32>
    tpu.vector_store %arg21[%c0_225, %c0_226], %994 {strides = array<i32>} : memref<1x32xf32, #tpu.memory_space<vmem>>, vector<1x32xf32>,
    %c0_227 = arith.constant 0 : index
    %c0_228 = arith.constant 0 : index
    %1003 = vector.load %arg23[%c0_227, %c0_228] : memref<16x32xf32, #tpu.memory_space<vmem>>, vector<16x32xf32>
    %c0_229 = arith.constant 0 : index
    %c0_230 = arith.constant 0 : index
    %1004 = vector.load %arg15[%c0_229, %c0_230] : memref<32x4xf32, #tpu.memory_space<vmem>>, vector<32x4xf32>
    %cst_231 = arith.constant dense<0.000000e+00> : vector<16x4xf32>
    %1005 = tpu.matmul %1003, %1004, %cst_231 {dimension_numbers = #tpu.dot_dimension_numbers<[1], [0], [0], [1], [0, 0, 1, 1], [], []>} : vector<16x32xf32>, vector<32x4xf32>, vector<16x4xf32> -> vector<16x4xf32>
    %c0_232 = arith.constant 0 : index
    %c0_233 = arith.constant 0 : index
    %1006 = vector.load %arg16[%c0_232, %c0_233] : memref<1x4xf32, #tpu.memory_space<vmem>>, vector<1x4xf32>
    %1007 = vector.broadcast %1006 : vector<1x4xf32> to vector<16x4xf32>
    %1008 = arith.addf %1005, %1007 : vector<16x4xf32>
    %c0_234 = arith.constant 0 : index
    %c0_235 = arith.constant 0 : index
    %c0_236 = arith.constant 0 : index
    %1009 = vector.load %arg17[%c0_234, %c0_235, %c0_236] : memref<1x8x16xf32, #tpu.memory_space<vmem>>, vector<1x4x16xf32>
    %1010 = vector.shape_cast %1009 : vector<1x4x16xf32> to vector<4x16xf32>
    %1011 = vector.shape_cast %7 : vector<4x16xf32> to vector<1x4x16xf32>
    tpu.vector_store %arg17[%c0_234, %c0_235, %c0_236], %1011 {strides = array<i32>} : memref<1x8x16xf32, #tpu.memory_space<vmem>>, vector<1x4x16xf32>,
    %1012 = tpu.transpose %1008, [1, 0] : vector<16x4xf32> -> vector<4x16xf32>
    %1013 = arith.addf %8, %1012 : vector<4x16xf32>
    %c0_237 = arith.constant 0 : index
    %c4 = arith.constant 4 : index
    %c0_238 = arith.constant 0 : index
    %1014 = vector.load %arg17[%c0_237, %c4, %c0_238] : memref<1x8x16xf32, #tpu.memory_space<vmem>>, vector<1x4x16xf32>
    %1015 = vector.shape_cast %1014 : vector<1x4x16xf32> to vector<4x16xf32>
    %1016 = vector.shape_cast %1013 : vector<4x16xf32> to vector<1x4x16xf32>
    tpu.vector_store %arg17[%c0_237, %c4, %c0_238], %1016 {strides = array<i32>} : memref<1x8x16xf32, #tpu.memory_space<vmem>>, vector<1x4x16xf32>,
    return
  }
  func.func @transform_0(%arg0: i32, %arg1: i32) -> (i32, i32, i32) {
    %c0_i32 = arith.constant 0 : i32
    %c0_i32_0 = arith.constant 0 : i32
    return %arg0, %c0_i32, %arg1 : i32, i32, i32
  }
  func.func @transform_1(%arg0: i32, %arg1: i32) -> (i32, i32, i32) {
    %c0_i32 = arith.constant 0 : i32
    %c0_i32_0 = arith.constant 0 : i32
    return %arg0, %c0_i32, %arg1 : i32, i32, i32
  }
  func.func @transform_2(%arg0: i32, %arg1: i32) -> (i32, i32, i32) {
    %c0_i32 = arith.constant 0 : i32
    %c0_i32_0 = arith.constant 0 : i32
    return %arg0, %c0_i32, %arg1 : i32, i32, i32
  }
  func.func @transform_3(%arg0: i32, %arg1: i32) -> (i32, i32) {
    %c0_i32 = arith.constant 0 : i32
    %c0_i32_0 = arith.constant 0 : i32
    %c0_i32_1 = arith.constant 0 : i32
    return %c0_i32, %c0_i32_0 : i32, i32
  }
  func.func @transform_4(%arg0: i32, %arg1: i32) -> (i32, i32) {
    %c0_i32 = arith.constant 0 : i32
    %c0_i32_0 = arith.constant 0 : i32
    %c0_i32_1 = arith.constant 0 : i32
    return %c0_i32, %c0_i32_0 : i32, i32
  }
  func.func @transform_5(%arg0: i32, %arg1: i32) -> (i32, i32) {
    %c0_i32 = arith.constant 0 : i32
    %c0_i32_0 = arith.constant 0 : i32
    %c0_i32_1 = arith.constant 0 : i32
    return %c0_i32, %c0_i32_0 : i32, i32
  }
  func.func @transform_6(%arg0: i32, %arg1: i32) -> (i32, i32) {
    %c0_i32 = arith.constant 0 : i32
    %c0_i32_0 = arith.constant 0 : i32
    %c0_i32_1 = arith.constant 0 : i32
    return %c0_i32, %c0_i32_0 : i32, i32
  }
  func.func @transform_7(%arg0: i32, %arg1: i32) -> (i32, i32) {
    %c0_i32 = arith.constant 0 : i32
    %c0_i32_0 = arith.constant 0 : i32
    %c0_i32_1 = arith.constant 0 : i32
    return %c0_i32, %c0_i32_0 : i32, i32
  }
  func.func @transform_8(%arg0: i32, %arg1: i32) -> (i32, i32) {
    %c0_i32 = arith.constant 0 : i32
    %c0_i32_0 = arith.constant 0 : i32
    %c0_i32_1 = arith.constant 0 : i32
    return %c0_i32, %c0_i32_0 : i32, i32
  }
  func.func @transform_9(%arg0: i32, %arg1: i32) -> (i32, i32) {
    %c0_i32 = arith.constant 0 : i32
    %c0_i32_0 = arith.constant 0 : i32
    %c0_i32_1 = arith.constant 0 : i32
    return %c0_i32, %c0_i32_0 : i32, i32
  }
  func.func @transform_10(%arg0: i32, %arg1: i32) -> (i32, i32) {
    %c0_i32 = arith.constant 0 : i32
    %c0_i32_0 = arith.constant 0 : i32
    %c0_i32_1 = arith.constant 0 : i32
    return %c0_i32, %c0_i32_0 : i32, i32
  }
  func.func @transform_11(%arg0: i32, %arg1: i32) -> (i32, i32) {
    %c0_i32 = arith.constant 0 : i32
    %c0_i32_0 = arith.constant 0 : i32
    %c0_i32_1 = arith.constant 0 : i32
    return %c0_i32, %c0_i32_0 : i32, i32
  }
  func.func @transform_12(%arg0: i32, %arg1: i32) -> (i32, i32) {
    %c0_i32 = arith.constant 0 : i32
    %c0_i32_0 = arith.constant 0 : i32
    %c0_i32_1 = arith.constant 0 : i32
    return %c0_i32, %c0_i32_0 : i32, i32
  }
  func.func @transform_13(%arg0: i32, %arg1: i32) -> (i32, i32) {
    %c0_i32 = arith.constant 0 : i32
    %c0_i32_0 = arith.constant 0 : i32
    %c0_i32_1 = arith.constant 0 : i32
    return %c0_i32, %c0_i32_0 : i32, i32
  }
  func.func @transform_14(%arg0: i32, %arg1: i32) -> (i32, i32) {
    %c0_i32 = arith.constant 0 : i32
    %c0_i32_0 = arith.constant 0 : i32
    %c0_i32_1 = arith.constant 0 : i32
    return %c0_i32, %c0_i32_0 : i32, i32
  }
  func.func @transform_15(%arg0: i32, %arg1: i32) -> (i32, i32, i32) {
    %c0_i32 = arith.constant 0 : i32
    %c0_i32_0 = arith.constant 0 : i32
    return %arg0, %c0_i32, %arg1 : i32, i32, i32
  }
}

</mosaic_0001>

<llo_original>
// kernel: flow_step_forward.1
$region0: #{flow_step_forward.1}
  #allocation0 [shape = 'u32[]', space=smem, size = 0x4, offset = 0x4, fixed_abs, tag = 'smem constant byte address 0x4 - core index']
  #allocation1 [shape = 'u32[72,128]{1,0:T(1,128)}', space=vmem, size = 0x9000, scoped, tag = 'internal scratch']
  #allocation2 [shape = 'f32[1,32]{1,0:T(1,128)}', space=vmem, size = 0x200, scoped, tag = 'scratch operand']
  #allocation3 [shape = 'f32[1,32]{1,0:T(1,128)}', space=vmem, size = 0x200, scoped, tag = 'scratch operand']
  #allocation4 [shape = 'f32[1,32]{1,0:T(1,128)}', space=vmem, size = 0x200, scoped, tag = 'scratch operand']
  #allocation5 [shape = 'f32[1,32]{1,0:T(1,128)}', space=vmem, size = 0x200, scoped, tag = 'scratch operand']
  #allocation6 [shape = 'f32[16,128]{1,0:T(8,128)}', space=vmem, size = 0x2000, scoped, tag = 'scratch operand']
  #allocation7 [shape = 'f32[16,32]{1,0:T(8,128)}', space=vmem, size = 0x2000, scoped, tag = 'scratch operand']
  %s0 = inlined_call_operand.hbm [shape: f32[2,8,16], index: 0, kind: input, shape index: {}]
  %s1 = inlined_call_operand.vmem [shape: f32[2,4,16], index: 1, kind: input, shape index: {}]
  %s2 = inlined_call_operand.vmem [shape: f32[2,4,16], index: 2, kind: input, shape index: {}]
  %s3 = inlined_call_operand.vmem [shape: f32[8,8], index: 3, kind: input, shape index: {}]
  %s4 = inlined_call_operand.vmem [shape: f32[8,1], index: 4, kind: input, shape index: {}]
  %s5 = inlined_call_operand.vmem [shape: f32[4,128], index: 5, kind: input, shape index: {}]
  %s6 = inlined_call_operand.vmem [shape: f32[4,128], index: 6, kind: input, shape index: {}]
  %s7 = inlined_call_operand.vmem [shape: f32[4,128], index: 7, kind: input, shape index: {}]
  %s8 = inlined_call_operand.vmem [shape: f32[32,128], index: 8, kind: input, shape index: {}]
  %s9 = inlined_call_operand.hbm [shape: f32[1,128], index: 9, kind: input, shape index: {}]
  %s10 = inlined_call_operand.vmem [shape: f32[32,128], index: 10, kind: input, shape index: {}]
  %s11 = inlined_call_operand.hbm [shape: f32[32,128], index: 11, kind: input, shape index: {}]
  %s12 = inlined_call_operand.hbm [shape: f32[1,128], index: 12, kind: input, shape index: {}]
  %s13 = inlined_call_operand.vmem [shape: f32[32,4], index: 13, kind: input, shape index: {}]
  %s14 = inlined_call_operand.hbm [shape: f32[1,4], index: 14, kind: input, shape index: {}]
  %s15 = inlined_call_operand.hbm [shape: f32[2,8,16], index: 15, kind: output, shape index: {}]
  %s16 = sld [smem:[#allocation0]]
  $region117: #{flow_step_forward.1} parent=0
    _
  %s18 = ssub.s32 1, %s16
  %s19 = scalar_select 0, %s18, %s16
  $region1: #{flow_step_forward.1} parent=0
    #allocation8 [shape = 'u8[8192]{0}', space=vmem, size = 0x2000, scoped, tag = 'input window, operand 0']
    #allocation9 [shape = 's32[2]{0}', space=sflag, size = 0x8, scoped, tag = 'scoped memory for flow_step_forward.1']
    #allocation10 [shape = 's32[2]{0}', space=sflag, size = 0x8, scoped, tag = 'scoped memory for flow_step_forward.1']
    #allocation11 [shape = 'u8[512]{0}', space=vmem, size = 0x400, scoped, tag = 'input window, operand 9, single buffered']
    #allocation12 [shape = 's32[1]{0}', space=sflag, size = 0x4, scoped, tag = 'scoped memory for flow_step_forward.1']
    #allocation13 [shape = 'u8[16384]{0}', space=vmem, size = 0x4000, scoped, tag = 'input window, operand 11, single buffered']
    #allocation14 [shape = 'u8[512]{0}', space=vmem, size = 0x400, scoped, tag = 'input window, operand 12, single buffered']
    #allocation15 [shape = 's32[1]{0}', space=sflag, size = 0x4, scoped, tag = 'scoped memory for flow_step_forward.1']
    #allocation16 [shape = 'u8[512]{0}', space=vmem, size = 0x400, scoped, tag = 'input window, operand 14, single buffered']
    #allocation17 [shape = 'u8[8192]{0}', space=vmem, size = 0x2000, scoped, tag = 'output window, operand 0']
    %20 = vsyncpa [#allocation9], 0
    %s21 = scalar_lea.sflag [#allocation9], 1
    %22 = vsyncpa %s21, 0
    %23 = vsyncpa [#allocation12], 0
    %24 = vsyncpa [#allocation15], 0
    %25 = vsyncpa [#allocation10], 0
    %s26 = scalar_lea.sflag [#allocation10], 1
    %27 = vsyncpa %s26, 0
    loop: start=0, step=1, limit=4
    $region2: #{flow_step_forward.1} parent=1 // loop_pre_header
      _
    $region3: #{flow_step_forward.1} parent=1 // loop_header
      %s29 = sphi 0, %s33
      %p30 = scmp.ge.s32.totalorder %s29, 4
      %s36 = sphi 0, %s48
      %s37 = sphi 0, %s44
      %s38 = sphi 0, %s36
      %s39 = sphi 0, %s37
      %s40 = sphi 0, %s38
      %s41 = sphi 0, %s39
      %s53 = sphi 0, %s55
      %s56 = sphi 0, %s53
      %s57 = sphi 0, %s56
      %s73 = sphi 0, %s57
      %s81 = sphi 0, %s83
      %s84 = sphi 0, %s81
      %s85 = sphi 0, %s84
      %s101 = sphi 0, %s85
      %s109 = sphi 0, %s111
      %s112 = sphi 0, %s109
      %s113 = sphi 0, %s112
      %s129 = sphi 0, %s113
      %s133 = sphi 0, %s133
      %s135 = sphi 0, %s133
      %s136 = sphi 0, %s135
      %s150 = sphi 0, %s136
      %s154 = sphi 0, %s154
      %s156 = sphi 0, %s154
      %s157 = sphi 0, %s156
      %s171 = sphi 0, %s157
      %s175 = sphi 0, %s175
      %s177 = sphi 0, %s175
      %s178 = sphi 0, %s177
      %s192 = sphi 0, %s178
      %s196 = sphi 0, %s196
      %s198 = sphi 0, %s196
      %s199 = sphi 0, %s198
      %s213 = sphi 0, %s199
      %s217 = sphi 0, %s217
      %s219 = sphi 0, %s217
      %s220 = sphi 0, %s219
      %s234 = sphi 0, %s220
      %s238 = sphi 0, %s238
      %s240 = sphi 0, %s238
      %s241 = sphi 0, %s240
      %s255 = sphi 0, %s241
      %s259 = sphi 0, %s259
      %s261 = sphi 0, %s259
      %s262 = sphi 0, %s261
      %s276 = sphi 0, %s262
      %s280 = sphi 0, %s280
      %s282 = sphi 0, %s280
      %s283 = sphi 0, %s282
      %s297 = sphi 0, %s283
      %s301 = sphi 0, %s301
      %s303 = sphi 0, %s301
      %s304 = sphi 0, %s303
      %s318 = sphi 0, %s304
      %s322 = sphi 0, %s322
      %s324 = sphi 0, %s322
      %s325 = sphi 0, %s324
      %s339 = sphi 0, %s325
      %s343 = sphi 0, %s343
      %s345 = sphi 0, %s343
      %s346 = sphi 0, %s345
      %s360 = sphi 0, %s346
      %s364 = sphi 0, %s364
      %s366 = sphi 0, %s364
      %s367 = sphi 0, %s366
      %s381 = sphi 0, %s367
      %s389 = sphi 0, %s391
      %s392 = sphi 0, %s389
      %s393 = sphi 0, %s392
      %s409 = sphi 0, %s393
    $region4: #{flow_step_forward.1} parent=1 // loop_header_branch
      %32 = sbr.rel (%p30) target = $region8
    $region5: #{flow_step_forward.1} parent=1 // loop_body
      %s34 = ssub.s32 %s29, 1
      %s35 = ssub.s32 %s29, 2
      %s42 = sadd.s32 1, %s37
      %p43 = scmp.ge.s32.totalorder %s42, 1
      %s44 = scalar_select %p43, 0, %s42
      %s45 = sadd.s32 1, %s36
      %s46 = scalar_select %p43, %s45, %s36
      %p47 = scmp.ge.s32.totalorder %s46, 2
      %s48 = scalar_select %p47, 0, %s46
      %s49 = ssub.s32 %s36, %s48
      %s50 = ssub.s32 %s37, %s44
      %s51 = sor.u32 %s49, %s50
      %p52 = scmp.eq.s32.totalorder %s51, 0
      %s54 = sadd.s32 %s53, 1
      %s55 = scalar_select %p52, %s53, %s54
      %p58 = pneg %p52
      %p59 = scmp.eq.s32.totalorder %s29, 1
      %p60 = por %p58, %p59
      %p61 = scmp.ne.s32.totalorder %s53, %s56
      %p62 = scmp.eq.s32.totalorder %s29, 0
      %p63 = por %p61, %p62
      %p64 = scmp.ne.s32.totalorder %s53, %s56
      %p65 = scmp.eq.s32.totalorder %s34, 1
      %p66 = por %p64, %p65
      %p67 = scmp.ne.s32.totalorder %s56, %s57
      %p68 = scmp.eq.s32.totalorder %s34, 0
      %p69 = por %p67, %p68
      %p70 = scmp.ne.s32.totalorder %s56, %s57
      %p71 = scmp.eq.s32.totalorder %s35, 1
      %p72 = por %p70, %p71
      %p74 = scmp.ne.s32.totalorder %s57, %s73
      %p75 = scmp.eq.s32.totalorder %s35, 0
      %p76 = por %p74, %p75
      %s77 = ssub.s32 %s36, %s48
      %s78 = ssub.s32 %s37, %s44
      %s79 = sor.u32 %s77, %s78
      %p80 = scmp.eq.s32.totalorder %s79, 0
      %s82 = sadd.s32 %s81, 1
      %s83 = scalar_select %p80, %s81, %s82
      %p86 = pneg %p80
      %p87 = scmp.eq.s32.totalorder %s29, 1
      %p88 = por %p86, %p87
      %p89 = scmp.ne.s32.totalorder %s81, %s84
      %p90 = scmp.eq.s32.totalorder %s29, 0
      %p91 = por %p89, %p90
      %p92 = scmp.ne.s32.totalorder %s81, %s84
      %p93 = scmp.eq.s32.totalorder %s34, 1
      %p94 = por %p92, %p93
      %p95 = scmp.ne.s32.totalorder %s84, %s85
      %p96 = scmp.eq.s32.totalorder %s34, 0
      %p97 = por %p95, %p96
      %p98 = scmp.ne.s32.totalorder %s84, %s85
      %p99 = scmp.eq.s32.totalorder %s35, 1
      %p100 = por %p98, %p99
      %p102 = scmp.ne.s32.totalorder %s85, %s101
      %p103 = scmp.eq.s32.totalorder %s35, 0
      %p104 = por %p102, %p103
      %s105 = ssub.s32 %s36, %s48
      %s106 = ssub.s32 %s37, %s44
      %s107 = sor.u32 %s105, %s106
      %p108 = scmp.eq.s32.totalorder %s107, 0
      %s110 = sadd.s32 %s109, 1
      %s111 = scalar_select %p108, %s109, %s110
      %p114 = pneg %p108
      %p115 = scmp.eq.s32.totalorder %s29, 1
      %p116 = por %p114, %p115
      %p117 = scmp.ne.s32.totalorder %s109, %s112
      %p118 = scmp.eq.s32.totalorder %s29, 0
      %p119 = por %p117, %p118
      %p120 = scmp.ne.s32.totalorder %s109, %s112
      %p121 = scmp.eq.s32.totalorder %s34, 1
      %p122 = por %p120, %p121
      %p123 = scmp.ne.s32.totalorder %s112, %s113
      %p124 = scmp.eq.s32.totalorder %s34, 0
      %p125 = por %p123, %p124
      %p126 = scmp.ne.s32.totalorder %s112, %s113
      %p127 = scmp.eq.s32.totalorder %s35, 1
      %p128 = por %p126, %p127
      %p130 = scmp.ne.s32.totalorder %s113, %s129
      %p131 = scmp.eq.s32.totalorder %s35, 0
      %p132 = por %p130, %p131
      %s134 = sadd.s32 %s133, 1
      %p137 = scmp.eq.s32.totalorder %s29, 1
      %p138 = scmp.ne.s32.totalorder %s133, %s135
      %p139 = scmp.eq.s32.totalorder %s29, 0
      %p140 = por %p138, %p139
      %p141 = scmp.ne.s32.totalorder %s133, %s135
      %p142 = scmp.eq.s32.totalorder %s34, 1
      %p143 = por %p141, %p142
      %p144 = scmp.ne.s32.totalorder %s135, %s136
      %p145 = scmp.eq.s32.totalorder %s34, 0
      %p146 = por %p144, %p145
      %p147 = scmp.ne.s32.totalorder %s135, %s136
      %p148 = scmp.eq.s32.totalorder %s35, 1
      %p149 = por %p147, %p148
      %p151 = scmp.ne.s32.totalorder %s136, %s150
      %p152 = scmp.eq.s32.totalorder %s35, 0
      %p153 = por %p151, %p152
      %s155 = sadd.s32 %s154, 1
      %p158 = scmp.eq.s32.totalorder %s29, 1
      %p159 = scmp.ne.s32.totalorder %s154, %s156
      %p160 = scmp.eq.s32.totalorder %s29, 0
      %p161 = por %p159, %p160
      %p162 = scmp.ne.s32.totalorder %s154, %s156
      %p163 = scmp.eq.s32.totalorder %s34, 1
      %p164 = por %p162, %p163
      %p165 = scmp.ne.s32.totalorder %s156, %s157
      %p166 = scmp.eq.s32.totalorder %s34, 0
      %p167 = por %p165, %p166
      %p168 = scmp.ne.s32.totalorder %s156, %s157
      %p169 = scmp.eq.s32.totalorder %s35, 1
      %p170 = por %p168, %p169
      %p172 = scmp.ne.s32.totalorder %s157, %s171
      %p173 = scmp.eq.s32.totalorder %s35, 0
      %p174 = por %p172, %p173
      %s176 = sadd.s32 %s175, 1
      %p179 = scmp.eq.s32.totalorder %s29, 1
      %p180 = scmp.ne.s32.totalorder %s175, %s177
      %p181 = scmp.eq.s32.totalorder %s29, 0
      %p182 = por %p180, %p181
      %p183 = scmp.ne.s32.totalorder %s175, %s177
      %p184 = scmp.eq.s32.totalorder %s34, 1
      %p185 = por %p183, %p184
      %p186 = scmp.ne.s32.totalorder %s177, %s178
      %p187 = scmp.eq.s32.totalorder %s34, 0
      %p188 = por %p186, %p187
      %p189 = scmp.ne.s32.totalorder %s177, %s178
      %p190 = scmp.eq.s32.totalorder %s35, 1
      %p191 = por %p189, %p190
      %p193 = scmp.ne.s32.totalorder %s178, %s192
      %p194 = scmp.eq.s32.totalorder %s35, 0
      %p195 = por %p193, %p194
      %s197 = sadd.s32 %s196, 1
      %p200 = scmp.eq.s32.totalorder %s29, 1
      %p201 = scmp.ne.s32.totalorder %s196, %s198
      %p202 = scmp.eq.s32.totalorder %s29, 0
      %p203 = por %p201, %p202
      %p204 = scmp.ne.s32.totalorder %s196, %s198
      %p205 = scmp.eq.s32.totalorder %s34, 1
      %p206 = por %p204, %p205
      %p207 = scmp.ne.s32.totalorder %s198, %s199
      %p208 = scmp.eq.s32.totalorder %s34, 0
      %p209 = por %p207, %p208
      %p210 = scmp.ne.s32.totalorder %s198, %s199
      %p211 = scmp.eq.s32.totalorder %s35, 1
      %p212 = por %p210, %p211
      %p214 = scmp.ne.s32.totalorder %s199, %s213
      %p215 = scmp.eq.s32.totalorder %s35, 0
      %p216 = por %p214, %p215
      %s218 = sadd.s32 %s217, 1
      %p221 = scmp.eq.s32.totalorder %s29, 1
      %p222 = scmp.ne.s32.totalorder %s217, %s219
      %p223 = scmp.eq.s32.totalorder %s29, 0
      %p224 = por %p222, %p223
      %p225 = scmp.ne.s32.totalorder %s217, %s219
      %p226 = scmp.eq.s32.totalorder %s34, 1
      %p227 = por %p225, %p226
      %p228 = scmp.ne.s32.totalorder %s219, %s220
      %p229 = scmp.eq.s32.totalorder %s34, 0
      %p230 = por %p228, %p229
      %p231 = scmp.ne.s32.totalorder %s219, %s220
      %p232 = scmp.eq.s32.totalorder %s35, 1
      %p233 = por %p231, %p232
      %p235 = scmp.ne.s32.totalorder %s220, %s234
      %p236 = scmp.eq.s32.totalorder %s35, 0
      %p237 = por %p235, %p236
      %s239 = sadd.s32 %s238, 1
      %p242 = scmp.eq.s32.totalorder %s29, 1
      %p243 = scmp.ne.s32.totalorder %s238, %s240
      %p244 = scmp.eq.s32.totalorder %s29, 0
      %p245 = por %p243, %p244
      %p246 = scmp.ne.s32.totalorder %s238, %s240
      %p247 = scmp.eq.s32.totalorder %s34, 1
      %p248 = por %p246, %p247
      %p249 = scmp.ne.s32.totalorder %s240, %s241
      %p250 = scmp.eq.s32.totalorder %s34, 0
      %p251 = por %p249, %p250
      %p252 = scmp.ne.s32.totalorder %s240, %s241
      %p253 = scmp.eq.s32.totalorder %s35, 1
      %p254 = por %p252, %p253
      %p256 = scmp.ne.s32.totalorder %s241, %s255
      %p257 = scmp.eq.s32.totalorder %s35, 0
      %p258 = por %p256, %p257
      %s260 = sadd.s32 %s259, 1
      %p263 = scmp.eq.s32.totalorder %s29, 1
      %p264 = scmp.ne.s32.totalorder %s259, %s261
      %p265 = scmp.eq.s32.totalorder %s29, 0
      %p266 = por %p264, %p265
      %p267 = scmp.ne.s32.totalorder %s259, %s261
      %p268 = scmp.eq.s32.totalorder %s34, 1
      %p269 = por %p267, %p268
      %p270 = scmp.ne.s32.totalorder %s261, %s262
      %p271 = scmp.eq.s32.totalorder %s34, 0
      %p272 = por %p270, %p271
      %p273 = scmp.ne.s32.totalorder %s261, %s262
      %p274 = scmp.eq.s32.totalorder %s35, 1
      %p275 = por %p273, %p274
      %p277 = scmp.ne.s32.totalorder %s262, %s276
      %p278 = scmp.eq.s32.totalorder %s35, 0
      %p279 = por %p277, %p278
      %s281 = sadd.s32 %s280, 1
      %p284 = scmp.eq.s32.totalorder %s29, 1
      %p285 = scmp.ne.s32.totalorder %s280, %s282
      %p286 = scmp.eq.s32.totalorder %s29, 0
      %p287 = por %p285, %p286
      %p288 = scmp.ne.s32.totalorder %s280, %s282
      %p289 = scmp.eq.s32.totalorder %s34, 1
      %p290 = por %p288, %p289
      %p291 = scmp.ne.s32.totalorder %s282, %s283
      %p292 = scmp.eq.s32.totalorder %s34, 0
      %p293 = por %p291, %p292
      %p294 = scmp.ne.s32.totalorder %s282, %s283
      %p295 = scmp.eq.s32.totalorder %s35, 1
      %p296 = por %p294, %p295
      %p298 = scmp.ne.s32.totalorder %s283, %s297
      %p299 = scmp.eq.s32.totalorder %s35, 0
      %p300 = por %p298, %p299
      %s302 = sadd.s32 %s301, 1
      %p305 = scmp.eq.s32.totalorder %s29, 1
      %p306 = scmp.ne.s32.totalorder %s301, %s303
      %p307 = scmp.eq.s32.totalorder %s29, 0
      %p308 = por %p306, %p307
      %p309 = scmp.ne.s32.totalorder %s301, %s303
      %p310 = scmp.eq.s32.totalorder %s34, 1
      %p311 = por %p309, %p310
      %p312 = scmp.ne.s32.totalorder %s303, %s304
      %p313 = scmp.eq.s32.totalorder %s34, 0
      %p314 = por %p312, %p313
      %p315 = scmp.ne.s32.totalorder %s303, %s304
      %p316 = scmp.eq.s32.totalorder %s35, 1
      %p317 = por %p315, %p316
      %p319 = scmp.ne.s32.totalorder %s304, %s318
      %p320 = scmp.eq.s32.totalorder %s35, 0
      %p321 = por %p319, %p320
      %s323 = sadd.s32 %s322, 1
      %p326 = scmp.eq.s32.totalorder %s29, 1
      %p327 = scmp.ne.s32.totalorder %s322, %s324
      %p328 = scmp.eq.s32.totalorder %s29, 0
      %p329 = por %p327, %p328
      %p330 = scmp.ne.s32.totalorder %s322, %s324
      %p331 = scmp.eq.s32.totalorder %s34, 1
      %p332 = por %p330, %p331
      %p333 = scmp.ne.s32.totalorder %s324, %s325
      %p334 = scmp.eq.s32.totalorder %s34, 0
      %p335 = por %p333, %p334
      %p336 = scmp.ne.s32.totalorder %s324, %s325
      %p337 = scmp.eq.s32.totalorder %s35, 1
      %p338 = por %p336, %p337
      %p340 = scmp.ne.s32.totalorder %s325, %s339
      %p341 = scmp.eq.s32.totalorder %s35, 0
      %p342 = por %p340, %p341
      %s344 = sadd.s32 %s343, 1
      %p347 = scmp.eq.s32.totalorder %s29, 1
      %p348 = scmp.ne.s32.totalorder %s343, %s345
      %p349 = scmp.eq.s32.totalorder %s29, 0
      %p350 = por %p348, %p349
      %p351 = scmp.ne.s32.totalorder %s343, %s345
      %p352 = scmp.eq.s32.totalorder %s34, 1
      %p353 = por %p351, %p352
      %p354 = scmp.ne.s32.totalorder %s345, %s346
      %p355 = scmp.eq.s32.totalorder %s34, 0
      %p356 = por %p354, %p355
      %p357 = scmp.ne.s32.totalorder %s345, %s346
      %p358 = scmp.eq.s32.totalorder %s35, 1
      %p359 = por %p357, %p358
      %p361 = scmp.ne.s32.totalorder %s346, %s360
      %p362 = scmp.eq.s32.totalorder %s35, 0
      %p363 = por %p361, %p362
      %s365 = sadd.s32 %s364, 1
      %p368 = scmp.eq.s32.totalorder %s29, 1
      %p369 = scmp.ne.s32.totalorder %s364, %s366
      %p370 = scmp.eq.s32.totalorder %s29, 0
      %p371 = por %p369, %p370
      %p372 = scmp.ne.s32.totalorder %s364, %s366
      %p373 = scmp.eq.s32.totalorder %s34, 1
      %p374 = por %p372, %p373
      %p375 = scmp.ne.s32.totalorder %s366, %s367
      %p376 = scmp.eq.s32.totalorder %s34, 0
      %p377 = por %p375, %p376
      %p378 = scmp.ne.s32.totalorder %s366, %s367
      %p379 = scmp.eq.s32.totalorder %s35, 1
      %p380 = por %p378, %p379
      %p382 = scmp.ne.s32.totalorder %s367, %s381
      %p383 = scmp.eq.s32.totalorder %s35, 0
      %p384 = por %p382, %p383
      %s385 = ssub.s32 %s36, %s48
      %s386 = ssub.s32 %s37, %s44
      %s387 = sor.u32 %s385, %s386
      %p388 = scmp.eq.s32.totalorder %s387, 0
      %s390 = sadd.s32 %s389, 1
      %s391 = scalar_select %p388, %s389, %s390
      %p394 = pneg %p388
      %p395 = scmp.eq.s32.totalorder %s29, 1
      %p396 = por %p394, %p395
      %p397 = scmp.ne.s32.totalorder %s389, %s392
      %p398 = scmp.eq.s32.totalorder %s29, 0
      %p399 = por %p397, %p398
      %p400 = scmp.ne.s32.totalorder %s389, %s392
      %p401 = scmp.eq.s32.totalorder %s34, 1
      %p402 = por %p400, %p401
      %p403 = scmp.ne.s32.totalorder %s392, %s393
      %p404 = scmp.eq.s32.totalorder %s34, 0
      %p405 = por %p403, %p404
      %p406 = scmp.ne.s32.totalorder %s392, %s393
      %p407 = scmp.eq.s32.totalorder %s35, 1
      %p408 = por %p406, %p407
      %p410 = scmp.ne.s32.totalorder %s393, %s409
      %p411 = scmp.eq.s32.totalorder %s35, 0
      %p412 = por %p410, %p411
      %p413 = scmp.le.s32.totalorder 1, %s29
      %p414 = scmp.lt.s32.totalorder %s29, 3
      %p415 = pnand %p413, %p414
      %p416 = pneg %p415
      // Predicated region
      $region9: #{flow_step_forward.1} parent=5 // pred_check
        _
      $region10: #{flow_step_forward.1} parent=5 // pred_check_branch
        %418 = sbr.rel (%p415) target = $region12
      $region11: #{flow_step_forward.1} parent=5 // pred_region
        %s419 = ssub.s32 %s29, 1
        // Predicated region
        $region13: #{flow_step_forward.1} parent=11 // pred_check
          %p420 = pneg %p146
        $region14: #{flow_step_forward.1} parent=11 // pred_check_branch
          %422 = sbr.rel (%p420) target = $region16
        $region15: #{flow_step_forward.1} parent=11 // pred_region
          _
        $region16: #{flow_step_forward.1} parent=11 // pred_fallthru
          _
        // Predicated region
        $region17: #{flow_step_forward.1} parent=11 // pred_check
          %p423 = pneg %p167
        $region18: #{flow_step_forward.1} parent=11 // pred_check_branch
          %425 = sbr.rel (%p423) target = $region20
        $region19: #{flow_step_forward.1} parent=11 // pred_region
          _
        $region20: #{flow_step_forward.1} parent=11 // pred_fallthru
          _
        // Predicated region
        $region21: #{flow_step_forward.1} parent=11 // pred_check
          %p426 = pneg %p188
        $region22: #{flow_step_forward.1} parent=11 // pred_check_branch
          %428 = sbr.rel (%p426) target = $region24
        $region23: #{flow_step_forward.1} parent=11 // pred_region
          _
        $region24: #{flow_step_forward.1} parent=11 // pred_fallthru
          _
        // Predicated region
        $region25: #{flow_step_forward.1} parent=11 // pred_check
          %p429 = pneg %p209
        $region26: #{flow_step_forward.1} parent=11 // pred_check_branch
          %431 = sbr.rel (%p429) target = $region28
        $region27: #{flow_step_forward.1} parent=11 // pred_region
          _
        $region28: #{flow_step_forward.1} parent=11 // pred_fallthru
          _
        // Predicated region
        $region29: #{flow_step_forward.1} parent=11 // pred_check
          %p432 = pneg %p230
        $region30: #{flow_step_forward.1} parent=11 // pred_check_branch
          %434 = sbr.rel (%p432) target = $region32
        $region31: #{flow_step_forward.1} parent=11 // pred_region
          _
        $region32: #{flow_step_forward.1} parent=11 // pred_fallthru
          _
        // Predicated region
        $region33: #{flow_step_forward.1} parent=11 // pred_check
          %p435 = pneg %p251
        $region34: #{flow_step_forward.1} parent=11 // pred_check_branch
          %437 = sbr.rel (%p435) target = $region36
        $region35: #{flow_step_forward.1} parent=11 // pred_region
          _
        $region36: #{flow_step_forward.1} parent=11 // pred_fallthru
          _
        // Predicated region
        $region37: #{flow_step_forward.1} parent=11 // pred_check
          %p438 = pneg %p272
        $region38: #{flow_step_forward.1} parent=11 // pred_check_branch
          %440 = sbr.rel (%p438) target = $region40
        $region39: #{flow_step_forward.1} parent=11 // pred_region
          %442 = vsyncadd [#allocation12], 0
          %s444 = sshll.u32 %s9, 4
          %s445 = int_to_ptr.hbm [resolvable:$true] %s444
          %s446 = sshll.u32 [#allocation11], 4
          %s447 = int_to_ptr.vmem [resolvable:$true] %s446
          %449 = dma.hbm_to_vmem [thread:$0]  %s445, 16, %s447, [#allocation12]
        $region40: #{flow_step_forward.1} parent=11 // pred_fallthru
          _
        // Predicated region
        $region41: #{flow_step_forward.1} parent=11 // pred_check
          %p450 = pneg %p293
        $region42: #{flow_step_forward.1} parent=11 // pred_check_branch
          %452 = sbr.rel (%p450) target = $region44
        $region43: #{flow_step_forward.1} parent=11 // pred_region
          _
        $region44: #{flow_step_forward.1} parent=11 // pred_fallthru
          _
        // Predicated region
        $region45: #{flow_step_forward.1} parent=11 // pred_check
          %p453 = pneg %p314
        $region46: #{flow_step_forward.1} parent=11 // pred_check_branch
          %455 = sbr.rel (%p453) target = $region48
        $region47: #{flow_step_forward.1} parent=11 // pred_region
          %457 = vsyncadd [#allocation12], 0
          %s458 = sshll.u32 %s11, 4
          %s459 = int_to_ptr.hbm [resolvable:$true] %s458
          %s460 = sshll.u32 [#allocation13], 4
          %s461 = int_to_ptr.vmem [resolvable:$true] %s460
          %466 = dma.hbm_to_vmem [thread:$0]  %s459, 512, %s461, [#allocation12], 128, 128, 8
        $region48: #{flow_step_forward.1} parent=11 // pred_fallthru
          _
        // Predicated region
        $region49: #{flow_step_forward.1} parent=11 // pred_check
          %p467 = pneg %p335
        $region50: #{flow_step_forward.1} parent=11 // pred_check_branch
          %469 = sbr.rel (%p467) target = $region52
        $region51: #{flow_step_forward.1} parent=11 // pred_region
          %471 = vsyncadd [#allocation15], 0
          %s473 = sshll.u32 %s12, 4
          %s474 = int_to_ptr.hbm [resolvable:$true] %s473
          %s475 = sshll.u32 [#allocation14], 4
          %s476 = int_to_ptr.vmem [resolvable:$true] %s475
          %478 = dma.hbm_to_vmem [thread:$0]  %s474, 16, %s476, [#allocation15]
        $region52: #{flow_step_forward.1} parent=11 // pred_fallthru
          _
        // Predicated region
        $region53: #{flow_step_forward.1} parent=11 // pred_check
          %p479 = pneg %p356
        $region54: #{flow_step_forward.1} parent=11 // pred_check_branch
          %481 = sbr.rel (%p479) target = $region56
        $region55: #{flow_step_forward.1} parent=11 // pred_region
          _
        $region56: #{flow_step_forward.1} parent=11 // pred_fallthru
          _
        // Predicated region
        $region57: #{flow_step_forward.1} parent=11 // pred_check
          %p482 = pneg %p377
        $region58: #{flow_step_forward.1} parent=11 // pred_check_branch
          %484 = sbr.rel (%p482) target = $region60
        $region59: #{flow_step_forward.1} parent=11 // pred_region
          %486 = vsyncadd [#allocation15], 0
          %s488 = sshll.u32 %s14, 4
          %s489 = int_to_ptr.hbm [resolvable:$true] %s488
          %s490 = sshll.u32 [#allocation16], 4
          %s491 = int_to_ptr.vmem [resolvable:$true] %s490
          %493 = dma.hbm_to_vmem [thread:$0]  %s489, 16, %s491, [#allocation15]
        $region60: #{flow_step_forward.1} parent=11 // pred_fallthru
          _
      $region12: #{flow_step_forward.1} parent=5 // pred_fallthru
        _
      %p494 = scmp.lt.s32.totalorder %s29, 2
      // Predicated region
      $region61: #{flow_step_forward.1} parent=5 // pred_check
        %p495 = pneg %p494
      $region62: #{flow_step_forward.1} parent=5 // pred_check_branch
        %497 = sbr.rel (%p495) target = $region64
      $region63: #{flow_step_forward.1} parent=5 // pred_region
        // Predicated region
        $region65: #{flow_step_forward.1} parent=63 // pred_check
          %p498 = pneg %p63
        $region66: #{flow_step_forward.1} parent=63 // pred_check_branch
          %500 = sbr.rel (%p498) target = $region68
        $region67: #{flow_step_forward.1} parent=63 // pred_region
          %s501 = sand.u32 %s53, 1
          %s502 = scalar_lea.sflag [#allocation9], %s501
          %s503 = sand.u32 %s53, 1
          %s504 = smul.addr %s503, 8
          %s505 = scalar_lea.vmem [#allocation8], %s504
          %507 = vsyncadd %s502, 0
          %s508 = sadd.s32 %s37, %s36
          %s509 = smul.addr %s508, 8
          %s510 = scalar_lea.hbm %s0, %s509
          %s512 = sshll.u32 %s510, 4
          %s513 = int_to_ptr.hbm [resolvable:$true] %s512
          %s514 = sshll.u32 %s505, 4
          %s515 = int_to_ptr.vmem [resolvable:$true] %s514
          %517 = dma.hbm_to_vmem [thread:$0]  %s513, 128, %s515, %s502
        $region68: #{flow_step_forward.1} parent=63 // pred_fallthru
          _
        // Predicated region
        $region69: #{flow_step_forward.1} parent=63 // pred_check
          %p518 = pneg %p91
        $region70: #{flow_step_forward.1} parent=63 // pred_check_branch
          %520 = sbr.rel (%p518) target = $region72
        $region71: #{flow_step_forward.1} parent=63 // pred_region
          %p521 = scmp.lt.s32.totalorder %s36, 1
          %s522 = scalar_select %p521, %s36, 1
          %p523 = scmp.lt.s32.totalorder %s37, 0
          %s524 = scalar_select %p523, %s37, 0
          %s525 = sadd.s32 %s524, %s522
          %s526 = smul.addr %s525, 4
          %s527 = scalar_lea.vmem %s1, %s526
        $region72: #{flow_step_forward.1} parent=63 // pred_fallthru
          _
        // Predicated region
        $region73: #{flow_step_forward.1} parent=63 // pred_check
          %p528 = pneg %p119
        $region74: #{flow_step_forward.1} parent=63 // pred_check_branch
          %530 = sbr.rel (%p528) target = $region76
        $region75: #{flow_step_forward.1} parent=63 // pred_region
          %p531 = scmp.lt.s32.totalorder %s36, 1
          %s532 = scalar_select %p531, %s36, 1
          %p533 = scmp.lt.s32.totalorder %s37, 0
          %s534 = scalar_select %p533, %s37, 0
          %s535 = sadd.s32 %s534, %s532
          %s536 = smul.addr %s535, 4
          %s537 = scalar_lea.vmem %s2, %s536
        $region76: #{flow_step_forward.1} parent=63 // pred_fallthru
          _
      $region64: #{flow_step_forward.1} parent=5 // pred_fallthru
        _
      %p538 = scmp.le.s32.totalorder 1, %s29
      %p539 = scmp.lt.s32.totalorder %s29, 3
      %p540 = pnand %p538, %p539
      %p541 = pneg %p540
      // Predicated region
      $region77: #{flow_step_forward.1} parent=5 // pred_check
        _
      $region78: #{flow_step_forward.1} parent=5 // pred_check_branch
        %543 = sbr.rel (%p540) target = $region80
      $region79: #{flow_step_forward.1} parent=5 // pred_region
        %s544 = ssub.s32 %s29, 1
        %s545 = sand.u32 %s56, 1
        %s546 = scalar_lea.sflag [#allocation9], %s545
        %s547 = sand.u32 %s56, 1
        %s548 = smul.addr %s547, 8
        %s549 = scalar_lea.vmem [#allocation8], %s548
        // Predicated region
        $region81: #{flow_step_forward.1} parent=79 // pred_check
          %p550 = pneg %p69
        $region82: #{flow_step_forward.1} parent=79 // pred_check_branch
          %552 = sbr.rel (%p550) target = $region84
        $region83: #{flow_step_forward.1} parent=79 // pred_region
          %554 = dma.done %s546, 128
        $region84: #{flow_step_forward.1} parent=79 // pred_fallthru
          _
        // Predicated region
        $region85: #{flow_step_forward.1} parent=79 // pred_check
          %p555 = pneg %p272
        $region86: #{flow_step_forward.1} parent=79 // pred_check_branch
          %557 = sbr.rel (%p555) target = $region88
        $region87: #{flow_step_forward.1} parent=79 // pred_region
          %559 = dma.done [#allocation12], 16
        $region88: #{flow_step_forward.1} parent=79 // pred_fallthru
          _
        // Predicated region
        $region89: #{flow_step_forward.1} parent=79 // pred_check
          %p560 = pneg %p314
        $region90: #{flow_step_forward.1} parent=79 // pred_check_branch
          %562 = sbr.rel (%p560) target = $region92
        $region91: #{flow_step_forward.1} parent=79 // pred_region
          %564 = dma.done [#allocation12], 512
        $region92: #{flow_step_forward.1} parent=79 // pred_fallthru
          _
        // Predicated region
        $region93: #{flow_step_forward.1} parent=79 // pred_check
          %p565 = pneg %p335
        $region94: #{flow_step_forward.1} parent=79 // pred_check_branch
          %567 = sbr.rel (%p565) target = $region96
        $region95: #{flow_step_forward.1} parent=79 // pred_region
          %569 = dma.done [#allocation15], 16
        $region96: #{flow_step_forward.1} parent=79 // pred_fallthru
          _
        // Predicated region
        $region97: #{flow_step_forward.1} parent=79 // pred_check
          %p570 = pneg %p377
        $region98: #{flow_step_forward.1} parent=79 // pred_check_branch
          %572 = sbr.rel (%p570) target = $region100
        $region99: #{flow_step_forward.1} parent=79 // pred_region
          %574 = dma.done [#allocation15], 16
        $region100: #{flow_step_forward.1} parent=79 // pred_fallthru
          _
        %s575 = sand.u32 %s56, 1
        %s576 = scalar_lea.sflag [#allocation9], %s575
        %s577 = sand.u32 %s56, 1
        %s578 = smul.addr %s577, 8
        %s579 = scalar_lea.vmem [#allocation8], %s578
        %p580 = pneg %p69
        %p581 = pneg %p66
        %p582 = scmp.lt.s32.totalorder %s38, 1
        %s583 = scalar_select %p582, %s38, 1
        %p584 = scmp.lt.s32.totalorder %s39, 0
        %s585 = scalar_select %p584, %s39, 0
        %s586 = sadd.s32 %s585, %s583
        %s587 = smul.addr %s586, 4
        %s588 = scalar_lea.vmem %s1, %s587
        %p589 = pneg %p97
        %p590 = pneg %p94
        %p591 = scmp.lt.s32.totalorder %s38, 1
        %s592 = scalar_select %p591, %s38, 1
        %p593 = scmp.lt.s32.totalorder %s39, 0
        %s594 = scalar_select %p593, %s39, 0
        %s595 = sadd.s32 %s594, %s592
        %s596 = smul.addr %s595, 4
        %s597 = scalar_lea.vmem %s2, %s596
        %p598 = pneg %p125
        %p599 = pneg %p122
        %p600 = pneg %p146
        %p601 = pneg %p143
        %p602 = pneg %p167
        %p603 = pneg %p164
        %p604 = pneg %p188
        %p605 = pneg %p185
        %p606 = pneg %p209
        %p607 = pneg %p206
        %p608 = pneg %p230
        %p609 = pneg %p227
        %p610 = pneg %p251
        %p611 = pneg %p248
        %p612 = pneg %p272
        %p613 = pneg %p269
        %p614 = pneg %p293
        %p615 = pneg %p290
        %p616 = pneg %p314
        %p617 = pneg %p311
        %p618 = pneg %p335
        %p619 = pneg %p332
        %p620 = pneg %p356
        %p621 = pneg %p353
        %p622 = pneg %p377
        %p623 = pneg %p374
        %p624 = pneg %p405
        %p625 = pneg %p402
        %s626 = sand.u32 %s392, 1
        %s627 = scalar_lea.sflag [#allocation10], %s626
        %s628 = sand.u32 %s392, 1
        %s629 = smul.addr %s628, 8
        %s630 = scalar_lea.vmem [#allocation17], %s629
        %p631 = scmp.lt.s32.totalorder %s38, 1
        %s632 = scalar_select %p631, %s38, 1
        %p633 = scmp.lt.s32.totalorder %s39, 0
        %s634 = scalar_select %p633, %s39, 0
        %s635 = sadd.s32 %s634, %s632
        %s636 = smul.addr %s635, 4
        %s637 = scalar_lea.vmem %s1, %s636
        %p638 = scmp.lt.s32.totalorder %s38, 1
        %s639 = scalar_select %p638, %s38, 1
        %p640 = scmp.lt.s32.totalorder %s39, 0
        %s641 = scalar_select %p640, %s39, 0
        %s642 = sadd.s32 %s641, %s639
        %s643 = smul.addr %s642, 4
        %s644 = scalar_lea.vmem %s2, %s643
        %v645 = vld [vmem:[%s3] sm:$0xff]
        %v646 = vld [vmem:[%s549] sm:$0xff]
        %v647 = vld [vmem:[%s4] sm:$0xff]
        %649 = vset.pattern.permute.xlu0 0
        %650 = vperm.xlu0 %649, %v647
        %v651 = vpop.permute.xlu0 %650
        %vm653 = vcmask 64512
        %v655 = vsel %vm653, %v645, 0
        %657 = vmatpush.msra.mxu0 0.0
        %658 = vmatpush.msra.mxu0 0.0
        %659 = vmatpush.msra.mxu0 0.0
        %660 = vmatpush.msra.mxu0 0.0
        %661 = vmatpush.msra.mxu0 0.0
        %662 = vmatpush.msra.mxu0 0.0
        %663 = vmatpush.msra.mxu0 0.0
        %664 = vmatpush.msra.mxu0 0.0
        %665 = vmatpush.msra.mxu0 0.0
        %666 = vmatpush.msra.mxu0 0.0
        %667 = vmatpush.msra.mxu0 0.0
        %668 = vmatpush.msra.mxu0 0.0
        %669 = vmatpush.msra.mxu0 0.0
        %670 = vmatpush.msra.mxu0 0.0
        %671 = vmatpush.msra.mxu0 0.0
        %672 = vmatpush.msra.mxu0 %v646
        %673 = vmatmul.f32.gmra.mxu0 %v655
        %v674 = vpop.f32.mrf.mxu0
        %v675 = vadd.f32 %v651, %v674
        %676 = vdwg.mxu0
        %677 = vxpose.xlu0.b32.start [1/16] %v675, 128
        %678 = vxpose.xlu0.b32.cont [2/16] 0.0, 128
        %679 = vxpose.xlu0.b32.cont [3/16] 0.0, 128
        %680 = vxpose.xlu0.b32.cont [4/16] 0.0, 128
        %681 = vxpose.xlu0.b32.cont [5/16] 0.0, 128
        %682 = vxpose.xlu0.b32.cont [6/16] 0.0, 128
        %683 = vxpose.xlu0.b32.cont [7/16] 0.0, 128
        %684 = vxpose.xlu0.b32.cont [8/16] 0.0, 128
        %685 = vxpose.xlu0.b32.cont [9/16] 0.0, 128
        %686 = vxpose.xlu0.b32.cont [10/16] 0.0, 128
        %687 = vxpose.xlu0.b32.cont [11/16] 0.0, 128
        %688 = vxpose.xlu0.b32.cont [12/16] 0.0, 128
        %689 = vxpose.xlu0.b32.cont [13/16] 0.0, 128
        %690 = vxpose.xlu0.b32.cont [14/16] 0.0, 128
        %691 = vxpose.xlu0.b32.cont [15/16] 0.0, 128
        %692 = vxpose.xlu0.b32.end [16/16] 0.0, 128
        %v693 = vpop.trf.xlu0
        %v694 = vpop.trf.xlu0
        %v695 = vpop.trf.xlu0
        %v696 = vpop.trf.xlu0
        %v697 = vpop.trf.xlu0
        %v698 = vpop.trf.xlu0
        %v699 = vpop.trf.xlu0
        %v700 = vpop.trf.xlu0
        %v701 = vpop.trf.xlu0
        %v702 = vpop.trf.xlu0
        %v703 = vpop.trf.xlu0
        %v704 = vpop.trf.xlu0
        %v705 = vpop.trf.xlu0
        %v706 = vpop.trf.xlu0
        %v707 = vpop.trf.xlu0
        %v708 = vpop.trf.xlu0
        %v709 = vld [vmem:[%s5] sm:$0xf]
        %v710 = vld [vmem:[%s637] sm:$0xf]
        %711 = vxpose.xlu0.b32.start [1/16] %v710, 128
        %712 = vxpose.xlu0.b32.cont [2/16] 0.0, 128
        %713 = vxpose.xlu0.b32.cont [3/16] 0.0, 128
        %714 = vxpose.xlu0.b32.cont [4/16] 0.0, 128
        %715 = vxpose.xlu0.b32.cont [5/16] 0.0, 128
        %716 = vxpose.xlu0.b32.cont [6/16] 0.0, 128
        %717 = vxpose.xlu0.b32.cont [7/16] 0.0, 128
        %718 = vxpose.xlu0.b32.cont [8/16] 0.0, 128
        %719 = vxpose.xlu0.b32.cont [9/16] 0.0, 128
        %720 = vxpose.xlu0.b32.cont [10/16] 0.0, 128
        %721 = vxpose.xlu0.b32.cont [11/16] 0.0, 128
        %722 = vxpose.xlu0.b32.cont [12/16] 0.0, 128
        %723 = vxpose.xlu0.b32.cont [13/16] 0.0, 128
        %724 = vxpose.xlu0.b32.cont [14/16] 0.0, 128
        %725 = vxpose.xlu0.b32.cont [15/16] 0.0, 128
        %726 = vxpose.xlu0.b32.end [16/16] 0.0, 128
        %v727 = vpop.trf.xlu0
        %v728 = vpop.trf.xlu0
        %v729 = vpop.trf.xlu0
        %v730 = vpop.trf.xlu0
        %v731 = vpop.trf.xlu0
        %v732 = vpop.trf.xlu0
        %v733 = vpop.trf.xlu0
        %v734 = vpop.trf.xlu0
        %v735 = vpop.trf.xlu0
        %v736 = vpop.trf.xlu0
        %v737 = vpop.trf.xlu0
        %v738 = vpop.trf.xlu0
        %v739 = vpop.trf.xlu0
        %v740 = vpop.trf.xlu0
        %v741 = vpop.trf.xlu0
        %v742 = vpop.trf.xlu0
        %v743 = vld [vmem:[%s6] sm:$0xf]
        %vm744 = vcmask 31744
        %v746 = vsel %vm744, %v727, 0
        %v749 = vsel %vm744, %v728, 0
        %vm751 = vcmask 1043456
        %v753 = vsel %vm751, %v743, 0
        %755 = vmatpush.msra.mxu0 0.0
        %756 = vmatpush.msra.mxu0 0.0
        %757 = vmatpush.msra.mxu0 0.0
        %758 = vmatpush.msra.mxu0 0.0
        %759 = vmatpush.msra.mxu0 0.0
        %760 = vmatpush.msra.mxu0 0.0
        %761 = vmatpush.msra.mxu0 0.0
        %762 = vmatpush.msra.mxu0 0.0
        %763 = vmatpush.msra.mxu0 0.0
        %764 = vmatpush.msra.mxu0 0.0
        %765 = vmatpush.msra.mxu0 0.0
        %766 = vmatpush.msra.mxu0 0.0
        %767 = vmatpush.msra.mxu0 0.0
        %768 = vmatpush.msra.mxu0 0.0
        %769 = vmatpush.msra.mxu0 0.0
        %770 = vmatpush.msra.mxu0 %v753
        %771 = vmatmul.f32.gmra.mxu0 %v746
        %v772 = vpop.f32.mrf.mxu0
        %v773 = vadd.f32 0.0, %v772
        %774 = vmatmul.f32.gmra.mxu0 %v749
        %v775 = vpop.f32.mrf.mxu0
        %v776 = vadd.f32 0.0, %v775
        %777 = vdwg.mxu0
        %v779 = vsel %vm744, %v693, 0
        %v782 = vsel %vm744, %v694, 0
        %v785 = vsel %vm751, %v709, 0
        %787 = vmatpush.msra.mxu0 0.0
        %788 = vmatpush.msra.mxu0 0.0
        %789 = vmatpush.msra.mxu0 0.0
        %790 = vmatpush.msra.mxu0 0.0
        %791 = vmatpush.msra.mxu0 0.0
        %792 = vmatpush.msra.mxu0 0.0
        %793 = vmatpush.msra.mxu0 0.0
        %794 = vmatpush.msra.mxu0 0.0
        %795 = vmatpush.msra.mxu0 0.0
        %796 = vmatpush.msra.mxu0 0.0
        %797 = vmatpush.msra.mxu0 0.0
        %798 = vmatpush.msra.mxu0 0.0
        %799 = vmatpush.msra.mxu0 0.0
        %800 = vmatpush.msra.mxu0 0.0
        %801 = vmatpush.msra.mxu0 0.0
        %802 = vmatpush.msra.mxu0 %v785
        %803 = vmatmul.f32.gmra.mxu0 %v779
        %v804 = vpop.f32.mrf.mxu0
        %v805 = vadd.f32 %v773, %v804
        %806 = vmatmul.f32.gmra.mxu0 %v782
        %v807 = vpop.f32.mrf.mxu0
        %v808 = vadd.f32 %v776, %v807
        %809 = vdwg.mxu0
        %v810 = vld [vmem:[%s644] sm:$0xf]
        %811 = vxpose.xlu0.b32.start [1/16] %v810, 128
        %812 = vxpose.xlu0.b32.cont [2/16] 0.0, 128
        %813 = vxpose.xlu0.b32.cont [3/16] 0.0, 128
        %814 = vxpose.xlu0.b32.cont [4/16] 0.0, 128
        %815 = vxpose.xlu0.b32.cont [5/16] 0.0, 128
        %816 = vxpose.xlu0.b32.cont [6/16] 0.0, 128
        %817 = vxpose.xlu0.b32.cont [7/16] 0.0, 128
        %818 = vxpose.xlu0.b32.cont [8/16] 0.0, 128
        %819 = vxpose.xlu0.b32.cont [9/16] 0.0, 128
        %820 = vxpose.xlu0.b32.cont [10/16] 0.0, 128
        %821 = vxpose.xlu0.b32.cont [11/16] 0.0, 128
        %822 = vxpose.xlu0.b32.cont [12/16] 0.0, 128
        %823 = vxpose.xlu0.b32.cont [13/16] 0.0, 128
        %824 = vxpose.xlu0.b32.cont [14/16] 0.0, 128
        %825 = vxpose.xlu0.b32.cont [15/16] 0.0, 128
        %826 = vxpose.xlu0.b32.end [16/16] 0.0, 128
        %v827 = vpop.trf.xlu0
        %v828 = vpop.trf.xlu0
        %v829 = vpop.trf.xlu0
        %v830 = vpop.trf.xlu0
        %v831 = vpop.trf.xlu0
        %v832 = vpop.trf.xlu0
        %v833 = vpop.trf.xlu0
        %v834 = vpop.trf.xlu0
        %v835 = vpop.trf.xlu0
        %v836 = vpop.trf.xlu0
        %v837 = vpop.trf.xlu0
        %v838 = vpop.trf.xlu0
        %v839 = vpop.trf.xlu0
        %v840 = vpop.trf.xlu0
        %v841 = vpop.trf.xlu0
        %v842 = vpop.trf.xlu0
        %v843 = vld [vmem:[%s7] sm:$0xf]
        %v845 = vsel %vm744, %v827, 0
        %v848 = vsel %vm744, %v828, 0
        %v851 = vsel %vm751, %v843, 0
        %853 = vmatpush.msra.mxu0 0.0
        %854 = vmatpush.msra.mxu0 0.0
        %855 = vmatpush.msra.mxu0 0.0
        %856 = vmatpush.msra.mxu0 0.0
        %857 = vmatpush.msra.mxu0 0.0
        %858 = vmatpush.msra.mxu0 0.0
        %859 = vmatpush.msra.mxu0 0.0
        %860 = vmatpush.msra.mxu0 0.0
        %861 = vmatpush.msra.mxu0 0.0
        %862 = vmatpush.msra.mxu0 0.0
        %863 = vmatpush.msra.mxu0 0.0
        %864 = vmatpush.msra.mxu0 0.0
        %865 = vmatpush.msra.mxu0 0.0
        %866 = vmatpush.msra.mxu0 0.0
        %867 = vmatpush.msra.mxu0 0.0
        %868 = vmatpush.msra.mxu0 %v851
        %869 = vmatmul.f32.gmra.mxu0 %v845
        %v870 = vpop.f32.mrf.mxu0
        %v871 = vadd.f32 0.0, %v870
        %872 = vmatmul.f32.gmra.mxu0 %v848
        %v873 = vpop.f32.mrf.mxu0
        %v874 = vadd.f32 0.0, %v873
        %875 = vdwg.mxu0
        %v876 = vadd.f32 %v805, %v871
        %v877 = vadd.f32 %v808, %v874
        %v878 = vld [vmem:[#allocation11] sm:$0x1]
        %v880 = vperm.slane %v878, 0
        %v882 = vadd.f32 %v876, %v880
        %v883 = vadd.f32 %v877, %v880
        %884 = vst [vmem:[#allocation6] sm:$0xff] %v882
        %885 = vst [vmem:[#allocation6 + $0x8] sm:$0xff] %v883
        %p886 = scmp.eq.s32.totalorder %s39, 0
        // Predicated region
        $region101: #{flow_step_forward.1} parent=79 // pred_check
          %p887 = pneg %p886
        $region102: #{flow_step_forward.1} parent=79 // pred_check_branch
          %889 = sbr.rel (%p887) target = $region104
        $region103: #{flow_step_forward.1} parent=79 // pred_region
          %vm890 = vcmask 253952
          %891 = vst.msk [vmem:[#allocation2] sm:$0x1] %vm890, 0.0
          %892 = vst.msk [vmem:[#allocation3] sm:$0x1] %vm890, 0.0
          %893 = vst.msk [vmem:[#allocation4] sm:$0x1] %vm890, 0.0
          %894 = vst.msk [vmem:[#allocation5] sm:$0x1] %vm890, 0.0
        $region104: #{flow_step_forward.1} parent=79 // pred_fallthru
          _
        %v895 = vld [vmem:[%s8] sm:$0xff]
        %v896 = vld [vmem:[%s8 + $0x8] sm:$0xff]
        %v897 = vld [vmem:[%s8 + $0x10] sm:$0xff]
        %v898 = vld [vmem:[%s8 + $0x18] sm:$0xff]
        %v899 = vld [vmem:[%s10] sm:$0xff]
        %v900 = vld [vmem:[%s10 + $0x8] sm:$0xff]
        %v901 = vld [vmem:[%s10 + $0x10] sm:$0xff]
        %v902 = vld [vmem:[%s10 + $0x18] sm:$0xff]
        %v903 = vld [vmem:[#allocation13] sm:$0xff]
        %v904 = vld [vmem:[#allocation13 + $0x8] sm:$0xff]
        %v905 = vld [vmem:[#allocation13 + $0x10] sm:$0xff]
        %v906 = vld [vmem:[#allocation13 + $0x18] sm:$0xff]
        %v907 = vld [vmem:[#allocation14] sm:$0x1]
        %v908 = vld [vmem:[#allocation2] sm:$0x1]
        %v909 = vld [vmem:[#allocation3] sm:$0x1]
        %v910 = vld [vmem:[#allocation4] sm:$0x1]
        %v911 = vld [vmem:[#allocation5] sm:$0x1]
        %v912 = vld [vmem:[#allocation6] sm:$0x1]
        %vm913 = vcmask 261120
        %v915 = vsel %vm913, %v908, 0
        %917 = vmatpush.msra.mxu0 0.0
        %918 = vmatpush.msra.mxu0 0.0
        %919 = vmatpush.msra.mxu0 0.0
        %920 = vmatpush.msra.mxu0 0.0
        %921 = vmatpush.msra.mxu0 0.0
        %922 = vmatpush.msra.mxu0 0.0
        %923 = vmatpush.msra.mxu0 0.0
        %924 = vmatpush.msra.mxu0 0.0
        %925 = vmatpush.msra.mxu0 0.0
        %926 = vmatpush.msra.mxu0 0.0
        %927 = vmatpush.msra.mxu0 0.0
        %928 = vmatpush.msra.mxu0 0.0
        %929 = vmatpush.msra.mxu0 %v898
        %930 = vmatpush.msra.mxu0 %v897
        %931 = vmatpush.msra.mxu0 %v896
        %932 = vmatpush.msra.mxu0 %v895
        %933 = vmatmul.f32.gmra.mxu0 %v915
        %v934 = vpop.f32.mrf.mxu0
        %v935 = vadd.f32 0.0, %v934
        %936 = vdwg.mxu0
        %v937 = vadd.f32 %v912, %v935
        %v938 = vxor.u32 %v937, 2147483648
        %v939 = vmul.f32 %v938, 1.442695
        %v940 = vpow.pop %v939
        %v941 = vadd.f32 %v940, 1.0
        %v942 = vrcp.pop %v941
        %v943 = vmul.f32 %v941, %v942
        %v944 = vsub.f32 1.0, %v943
        %v945 = vmul.f32 %v942, %v944
        %v946 = vadd.f32 %v942, %v945
        %vm947 = vweird.f32 %v941
        %vm948 = vweird.f32 %v942
        %vm949 = vmor %vm947, %vm948
        %v950 = vsel %vm949, %v942, %v946
        %v951 = vand.u32 2147483647, %v941
        %vm952 = vcmp.eq.f32.partialorder %v951, 8.507059e+37
        %v953 = vand.u32 %v941, 2147483648
        %v954 = vor.u32 1.1754944e-38, %v953
        %v955 = vsel %vm952, %v954, %v950
        %v956 = vmul.f32 1.0, %v955
        %v957 = vtanh.pop %v937
        %v959 = vperm.slane %v909, 0
        %960 = vrot.lane.b32.xlu0 %v959, 32
        %v961 = vpop.permute.xlu0 %960
        %v963 = vmul.f32 %v956, %v961
        %965 = vrot.lane.b32.xlu0 %v957, 64
        %v966 = vpop.permute.xlu0 %965
        %v968 = vmul.f32 %v956, %v966
        %970 = vrot.lane.b32.xlu0 %v968, 32
        %v971 = vpop.permute.xlu0 %970
        %v973 = vadd.f32 %v963, %v971
        %v974 = vtanh.pop %v973
        %976 = vrot.lane.b32.xlu0 %v974, 64
        %v977 = vpop.permute.xlu0 %976
        %v979 = vmul.f32 %v956, %v977
        %v981 = vsel %vm913, %v910, 0
        %983 = vmatpush.msra.mxu0 0.0
        %984 = vmatpush.msra.mxu0 0.0
        %985 = vmatpush.msra.mxu0 0.0
        %986 = vmatpush.msra.mxu0 0.0
        %987 = vmatpush.msra.mxu0 0.0
        %988 = vmatpush.msra.mxu0 0.0
        %989 = vmatpush.msra.mxu0 0.0
        %990 = vmatpush.msra.mxu0 0.0
        %991 = vmatpush.msra.mxu0 0.0
        %992 = vmatpush.msra.mxu0 0.0
        %993 = vmatpush.msra.mxu0 0.0
        %994 = vmatpush.msra.mxu0 0.0
        %995 = vmatpush.msra.mxu0 %v906
        %996 = vmatpush.msra.mxu0 %v905
        %997 = vmatpush.msra.mxu0 %v904
        %998 = vmatpush.msra.mxu0 %v903
        %999 = vmatmul.f32.gmra.mxu0 %v981
        %v1000 = vpop.f32.mrf.mxu0
        %v1001 = vadd.f32 0.0, %v1000
        %1002 = vdwg.mxu0
        %1004 = vrot.lane.b32.xlu0 %v979, 32
        %v1005 = vpop.permute.xlu0 %1004
        %v1006 = vsel %vm913, %v1005, 0
        %1008 = vmatpush.msra.mxu0 0.0
        %1009 = vmatpush.msra.mxu0 0.0
        %1010 = vmatpush.msra.mxu0 0.0
        %1011 = vmatpush.msra.mxu0 0.0
        %1012 = vmatpush.msra.mxu0 0.0
        %1013 = vmatpush.msra.mxu0 0.0
        %1014 = vmatpush.msra.mxu0 0.0
        %1015 = vmatpush.msra.mxu0 0.0
        %1016 = vmatpush.msra.mxu0 0.0
        %1017 = vmatpush.msra.mxu0 0.0
        %1018 = vmatpush.msra.mxu0 0.0
        %1019 = vmatpush.msra.mxu0 0.0
        %1020 = vmatpush.msra.mxu0 %v902
        %1021 = vmatpush.msra.mxu0 %v901
        %1022 = vmatpush.msra.mxu0 %v900
        %1023 = vmatpush.msra.mxu0 %v899
        %1024 = vmatmul.f32.gmra.mxu0 %v1006
        %v1025 = vpop.f32.mrf.mxu0
        %v1026 = vadd.f32 %v1001, %v1025
        %1027 = vdwg.mxu0
        %v1028 = vadd.f32 %v1026, %v907
        %v1029 = vxor.u32 %v1028, 2147483648
        %v1030 = vmul.f32 %v1029, 1.442695
        %v1031 = vpow.pop %v1030
        %v1032 = vadd.f32 %v1031, 1.0
        %v1033 = vrcp.pop %v1032
        %v1034 = vmul.f32 %v1032, %v1033
        %v1035 = vsub.f32 1.0, %v1034
        %v1036 = vmul.f32 %v1033, %v1035
        %v1037 = vadd.f32 %v1033, %v1036
        %vm1038 = vweird.f32 %v1032
        %vm1039 = vweird.f32 %v1033
        %vm1040 = vmor %vm1038, %vm1039
        %v1041 = vsel %vm1040, %v1033, %v1037
        %v1042 = vand.u32 2147483647, %v1032
        %vm1043 = vcmp.eq.f32.partialorder %v1042, 8.507059e+37
        %v1044 = vand.u32 %v1032, 2147483648
        %v1045 = vor.u32 1.1754944e-38, %v1044
        %v1046 = vsel %vm1043, %v1045, %v1041
        %v1047 = vmul.f32 1.0, %v1046
        %v1048 = vtanh.pop %v1028
        %v1050 = vperm.slane %v911, 0
        %1051 = vrot.lane.b32.xlu0 %v1050, 32
        %v1052 = vpop.permute.xlu0 %1051
        %v1054 = vmul.f32 %v1047, %v1052
        %1056 = vrot.lane.b32.xlu0 %v1048, 64
        %v1057 = vpop.permute.xlu0 %1056
        %v1059 = vmul.f32 %v1047, %v1057
        %1061 = vrot.lane.b32.xlu0 %v1059, 32
        %v1062 = vpop.permute.xlu0 %1061
        %v1064 = vadd.f32 %v1054, %v1062
        %v1065 = vtanh.pop %v1064
        %1067 = vrot.lane.b32.xlu0 %v1065, 64
        %v1068 = vpop.permute.xlu0 %1067
        %v1070 = vmul.f32 %v1047, %v1068
        %1072 = vrot.lane.b32.xlu0 %v1070, 32
        %v1073 = vpop.permute.xlu0 %1072
        %vm1075 = vcmask 253952
        %1076 = vst.msk [vmem:[#allocation7] sm:$0x1] %vm1075, %v1073
        %v1077 = vld [vmem:[#allocation6 + $0x1] sm:$0x1]
        %1078 = vmatpush.msra.mxu0 0.0
        %1079 = vmatpush.msra.mxu0 0.0
        %1080 = vmatpush.msra.mxu0 0.0
        %1081 = vmatpush.msra.mxu0 0.0
        %1082 = vmatpush.msra.mxu0 0.0
        %1083 = vmatpush.msra.mxu0 0.0
        %1084 = vmatpush.msra.mxu0 0.0
        %1085 = vmatpush.msra.mxu0 0.0
        %1086 = vmatpush.msra.mxu0 0.0
        %1087 = vmatpush.msra.mxu0 0.0
        %1088 = vmatpush.msra.mxu0 0.0
        %1089 = vmatpush.msra.mxu0 0.0
        %1090 = vmatpush.msra.mxu0 %v898
        %1091 = vmatpush.msra.mxu0 %v897
        %1092 = vmatpush.msra.mxu0 %v896
        %1093 = vmatpush.msra.mxu0 %v895
        %1094 = vmatmul.f32.gmra.mxu0 %v1006
        %v1095 = vpop.f32.mrf.mxu0
        %v1096 = vadd.f32 0.0, %v1095
        %1097 = vdwg.mxu0
        %v1098 = vadd.f32 %v1077, %v1096
        %v1099 = vxor.u32 %v1098, 2147483648
        %v1100 = vmul.f32 %v1099, 1.442695
        %v1101 = vpow.pop %v1100
        %v1102 = vadd.f32 %v1101, 1.0
        %v1103 = vrcp.pop %v1102
        %v1104 = vmul.f32 %v1102, %v1103
        %v1105 = vsub.f32 1.0, %v1104
        %v1106 = vmul.f32 %v1103, %v1105
        %v1107 = vadd.f32 %v1103, %v1106
        %vm1108 = vweird.f32 %v1102
        %vm1109 = vweird.f32 %v1103
        %vm1110 = vmor %vm1108, %vm1109
        %v1111 = vsel %vm1110, %v1103, %v1107
        %v1112 = vand.u32 2147483647, %v1102
        %vm1113 = vcmp.eq.f32.partialorder %v1112, 8.507059e+37
        %v1114 = vand.u32 %v1102, 2147483648
        %v1115 = vor.u32 1.1754944e-38, %v1114
        %v1116 = vsel %vm1113, %v1115, %v1111
        %v1117 = vmul.f32 1.0, %v1116
        %v1118 = vtanh.pop %v1098
        %v1119 = vmul.f32 %v1117, %v973
        %1121 = vrot.lane.b32.xlu0 %v1118, 64
        %v1122 = vpop.permute.xlu0 %1121
        %v1124 = vmul.f32 %v1117, %v1122
        %1126 = vrot.lane.b32.xlu0 %v1124, 32
        %v1127 = vpop.permute.xlu0 %1126
        %v1129 = vadd.f32 %v1119, %v1127
        %v1130 = vtanh.pop %v1129
        %1132 = vrot.lane.b32.xlu0 %v1130, 64
        %v1133 = vpop.permute.xlu0 %1132
        %v1135 = vmul.f32 %v1117, %v1133
        %v1136 = vsel %vm913, %v1073, 0
        %1138 = vmatpush.msra.mxu0 0.0
        %1139 = vmatpush.msra.mxu0 0.0
        %1140 = vmatpush.msra.mxu0 0.0
        %1141 = vmatpush.msra.mxu0 0.0
        %1142 = vmatpush.msra.mxu0 0.0
        %1143 = vmatpush.msra.mxu0 0.0
        %1144 = vmatpush.msra.mxu0 0.0
        %1145 = vmatpush.msra.mxu0 0.0
        %1146 = vmatpush.msra.mxu0 0.0
        %1147 = vmatpush.msra.mxu0 0.0
        %1148 = vmatpush.msra.mxu0 0.0
        %1149 = vmatpush.msra.mxu0 0.0
        %1150 = vmatpush.msra.mxu0 %v906
        %1151 = vmatpush.msra.mxu0 %v905
        %1152 = vmatpush.msra.mxu0 %v904
        %1153 = vmatpush.msra.mxu0 %v903
        %1154 = vmatmul.f32.gmra.mxu0 %v1136
        %v1155 = vpop.f32.mrf.mxu0
        %v1156 = vadd.f32 0.0, %v1155
        %1157 = vdwg.mxu0
        %1159 = vrot.lane.b32.xlu0 %v1135, 32
        %v1160 = vpop.permute.xlu0 %1159
        %v1161 = vsel %vm913, %v1160, 0
        %1163 = vmatpush.msra.mxu0 0.0
        %1164 = vmatpush.msra.mxu0 0.0
        %1165 = vmatpush.msra.mxu0 0.0
        %1166 = vmatpush.msra.mxu0 0.0
        %1167 = vmatpush.msra.mxu0 0.0
        %1168 = vmatpush.msra.mxu0 0.0
        %1169 = vmatpush.msra.mxu0 0.0
        %1170 = vmatpush.msra.mxu0 0.0
        %1171 = vmatpush.msra.mxu0 0.0
        %1172 = vmatpush.msra.mxu0 0.0
        %1173 = vmatpush.msra.mxu0 0.0
        %1174 = vmatpush.msra.mxu0 0.0
        %1175 = vmatpush.msra.mxu0 %v902
        %1176 = vmatpush.msra.mxu0 %v901
        %1177 = vmatpush.msra.mxu0 %v900
        %1178 = vmatpush.msra.mxu0 %v899
        %1179 = vmatmul.f32.gmra.mxu0 %v1161
        %v1180 = vpop.f32.mrf.mxu0
        %v1181 = vadd.f32 %v1156, %v1180
        %1182 = vdwg.mxu0
        %v1183 = vadd.f32 %v1181, %v907
        %v1184 = vxor.u32 %v1183, 2147483648
        %v1185 = vmul.f32 %v1184, 1.442695
        %v1186 = vpow.pop %v1185
        %v1187 = vadd.f32 %v1186, 1.0
        %v1188 = vrcp.pop %v1187
        %v1189 = vmul.f32 %v1187, %v1188
        %v1190 = vsub.f32 1.0, %v1189
        %v1191 = vmul.f32 %v1188, %v1190
        %v1192 = vadd.f32 %v1188, %v1191
        %vm1193 = vweird.f32 %v1187
        %vm1194 = vweird.f32 %v1188
        %vm1195 = vmor %vm1193, %vm1194
        %v1196 = vsel %vm1195, %v1188, %v1192
        %v1197 = vand.u32 2147483647, %v1187
        %vm1198 = vcmp.eq.f32.partialorder %v1197, 8.507059e+37
        %v1199 = vand.u32 %v1187, 2147483648
        %v1200 = vor.u32 1.1754944e-38, %v1199
        %v1201 = vsel %vm1198, %v1200, %v1196
        %v1202 = vmul.f32 1.0, %v1201
        %v1203 = vtanh.pop %v1183
        %v1204 = vmul.f32 %v1202, %v1064
        %1206 = vrot.lane.b32.xlu0 %v1203, 64
        %v1207 = vpop.permute.xlu0 %1206
        %v1209 = vmul.f32 %v1202, %v1207
        %1211 = vrot.lane.b32.xlu0 %v1209, 32
        %v1212 = vpop.permute.xlu0 %1211
        %v1214 = vadd.f32 %v1204, %v1212
        %v1215 = vtanh.pop %v1214
        %1217 = vrot.lane.b32.xlu0 %v1215, 64
        %v1218 = vpop.permute.xlu0 %1217
        %v1220 = vmul.f32 %v1202, %v1218
        %1222 = vrot.lane.b32.xlu0 %v1220, 32
        %v1223 = vpop.permute.xlu0 %1222
        %1225 = vst.msk [vmem:[#allocation7 + $0x1] sm:$0x1] %vm1075, %v1223
        %v1226 = vld [vmem:[#allocation6 + $0x2] sm:$0x1]
        %1227 = vmatpush.msra.mxu0 0.0
        %1228 = vmatpush.msra.mxu0 0.0
        %1229 = vmatpush.msra.mxu0 0.0
        %1230 = vmatpush.msra.mxu0 0.0
        %1231 = vmatpush.msra.mxu0 0.0
        %1232 = vmatpush.msra.mxu0 0.0
        %1233 = vmatpush.msra.mxu0 0.0
        %1234 = vmatpush.msra.mxu0 0.0
        %1235 = vmatpush.msra.mxu0 0.0
        %1236 = vmatpush.msra.mxu0 0.0
        %1237 = vmatpush.msra.mxu0 0.0
        %1238 = vmatpush.msra.mxu0 0.0
        %1239 = vmatpush.msra.mxu0 %v898
        %1240 = vmatpush.msra.mxu0 %v897
        %1241 = vmatpush.msra.mxu0 %v896
        %1242 = vmatpush.msra.mxu0 %v895
        %1243 = vmatmul.f32.gmra.mxu0 %v1161
        %v1244 = vpop.f32.mrf.mxu0
        %v1245 = vadd.f32 0.0, %v1244
        %1246 = vdwg.mxu0
        %v1247 = vadd.f32 %v1226, %v1245
        %v1248 = vxor.u32 %v1247, 2147483648
        %v1249 = vmul.f32 %v1248, 1.442695
        %v1250 = vpow.pop %v1249
        %v1251 = vadd.f32 %v1250, 1.0
        %v1252 = vrcp.pop %v1251
        %v1253 = vmul.f32 %v1251, %v1252
        %v1254 = vsub.f32 1.0, %v1253
        %v1255 = vmul.f32 %v1252, %v1254
        %v1256 = vadd.f32 %v1252, %v1255
        %vm1257 = vweird.f32 %v1251
        %vm1258 = vweird.f32 %v1252
        %vm1259 = vmor %vm1257, %vm1258
        %v1260 = vsel %vm1259, %v1252, %v1256
        %v1261 = vand.u32 2147483647, %v1251
        %vm1262 = vcmp.eq.f32.partialorder %v1261, 8.507059e+37
        %v1263 = vand.u32 %v1251, 2147483648
        %v1264 = vor.u32 1.1754944e-38, %v1263
        %v1265 = vsel %vm1262, %v1264, %v1260
        %v1266 = vmul.f32 1.0, %v1265
        %v1267 = vtanh.pop %v1247
        %v1268 = vmul.f32 %v1266, %v1129
        %1270 = vrot.lane.b32.xlu0 %v1267, 64
        %v1271 = vpop.permute.xlu0 %1270
        %v1273 = vmul.f32 %v1266, %v1271
        %1275 = vrot.lane.b32.xlu0 %v1273, 32
        %v1276 = vpop.permute.xlu0 %1275
        %v1278 = vadd.f32 %v1268, %v1276
        %v1279 = vtanh.pop %v1278
        %1281 = vrot.lane.b32.xlu0 %v1279, 64
        %v1282 = vpop.permute.xlu0 %1281
        %v1284 = vmul.f32 %v1266, %v1282
        %v1285 = vsel %vm913, %v1223, 0
        %1287 = vmatpush.msra.mxu0 0.0
        %1288 = vmatpush.msra.mxu0 0.0
        %1289 = vmatpush.msra.mxu0 0.0
        %1290 = vmatpush.msra.mxu0 0.0
        %1291 = vmatpush.msra.mxu0 0.0
        %1292 = vmatpush.msra.mxu0 0.0
        %1293 = vmatpush.msra.mxu0 0.0
        %1294 = vmatpush.msra.mxu0 0.0
        %1295 = vmatpush.msra.mxu0 0.0
        %1296 = vmatpush.msra.mxu0 0.0
        %1297 = vmatpush.msra.mxu0 0.0
        %1298 = vmatpush.msra.mxu0 0.0
        %1299 = vmatpush.msra.mxu0 %v906
        %1300 = vmatpush.msra.mxu0 %v905
        %1301 = vmatpush.msra.mxu0 %v904
        %1302 = vmatpush.msra.mxu0 %v903
        %1303 = vmatmul.f32.gmra.mxu0 %v1285
        %v1304 = vpop.f32.mrf.mxu0
        %v1305 = vadd.f32 0.0, %v1304
        %1306 = vdwg.mxu0
        %1308 = vrot.lane.b32.xlu0 %v1284, 32
        %v1309 = vpop.permute.xlu0 %1308
        %v1310 = vsel %vm913, %v1309, 0
        %1312 = vmatpush.msra.mxu0 0.0
        %1313 = vmatpush.msra.mxu0 0.0
        %1314 = vmatpush.msra.mxu0 0.0
        %1315 = vmatpush.msra.mxu0 0.0
        %1316 = vmatpush.msra.mxu0 0.0
        %1317 = vmatpush.msra.mxu0 0.0
        %1318 = vmatpush.msra.mxu0 0.0
        %1319 = vmatpush.msra.mxu0 0.0
        %1320 = vmatpush.msra.mxu0 0.0
        %1321 = vmatpush.msra.mxu0 0.0
        %1322 = vmatpush.msra.mxu0 0.0
        %1323 = vmatpush.msra.mxu0 0.0
        %1324 = vmatpush.msra.mxu0 %v902
        %1325 = vmatpush.msra.mxu0 %v901
        %1326 = vmatpush.msra.mxu0 %v900
        %1327 = vmatpush.msra.mxu0 %v899
        %1328 = vmatmul.f32.gmra.mxu0 %v1310
        %v1329 = vpop.f32.mrf.mxu0
        %v1330 = vadd.f32 %v1305, %v1329
        %1331 = vdwg.mxu0
        %v1332 = vadd.f32 %v1330, %v907
        %v1333 = vxor.u32 %v1332, 2147483648
        %v1334 = vmul.f32 %v1333, 1.442695
        %v1335 = vpow.pop %v1334
        %v1336 = vadd.f32 %v1335, 1.0
        %v1337 = vrcp.pop %v1336
        %v1338 = vmul.f32 %v1336, %v1337
        %v1339 = vsub.f32 1.0, %v1338
        %v1340 = vmul.f32 %v1337, %v1339
        %v1341 = vadd.f32 %v1337, %v1340
        %vm1342 = vweird.f32 %v1336
        %vm1343 = vweird.f32 %v1337
        %vm1344 = vmor %vm1342, %vm1343
        %v1345 = vsel %vm1344, %v1337, %v1341
        %v1346 = vand.u32 2147483647, %v1336
        %vm1347 = vcmp.eq.f32.partialorder %v1346, 8.507059e+37
        %v1348 = vand.u32 %v1336, 2147483648
        %v1349 = vor.u32 1.1754944e-38, %v1348
        %v1350 = vsel %vm1347, %v1349, %v1345
        %v1351 = vmul.f32 1.0, %v1350
        %v1352 = vtanh.pop %v1332
        %v1353 = vmul.f32 %v1351, %v1214
        %1355 = vrot.lane.b32.xlu0 %v1352, 64
        %v1356 = vpop.permute.xlu0 %1355
        %v1358 = vmul.f32 %v1351, %v1356
        %1360 = vrot.lane.b32.xlu0 %v1358, 32
        %v1361 = vpop.permute.xlu0 %1360
        %v1363 = vadd.f32 %v1353, %v1361
        %v1364 = vtanh.pop %v1363
        %1366 = vrot.lane.b32.xlu0 %v1364, 64
        %v1367 = vpop.permute.xlu0 %1366
        %v1369 = vmul.f32 %v1351, %v1367
        %1371 = vrot.lane.b32.xlu0 %v1369, 32
        %v1372 = vpop.permute.xlu0 %1371
        %1374 = vst.msk [vmem:[#allocation7 + $0x2] sm:$0x1] %vm1075, %v1372
        %v1375 = vld [vmem:[#allocation6 + $0x3] sm:$0x1]
        %1376 = vmatpush.msra.mxu0 0.0
        %1377 = vmatpush.msra.mxu0 0.0
        %1378 = vmatpush.msra.mxu0 0.0
        %1379 = vmatpush.msra.mxu0 0.0
        %1380 = vmatpush.msra.mxu0 0.0
        %1381 = vmatpush.msra.mxu0 0.0
        %1382 = vmatpush.msra.mxu0 0.0
        %1383 = vmatpush.msra.mxu0 0.0
        %1384 = vmatpush.msra.mxu0 0.0
        %1385 = vmatpush.msra.mxu0 0.0
        %1386 = vmatpush.msra.mxu0 0.0
        %1387 = vmatpush.msra.mxu0 0.0
        %1388 = vmatpush.msra.mxu0 %v898
        %1389 = vmatpush.msra.mxu0 %v897
        %1390 = vmatpush.msra.mxu0 %v896
        %1391 = vmatpush.msra.mxu0 %v895
        %1392 = vmatmul.f32.gmra.mxu0 %v1310
        %v1393 = vpop.f32.mrf.mxu0
        %v1394 = vadd.f32 0.0, %v1393
        %1395 = vdwg.mxu0
        %v1396 = vadd.f32 %v1375, %v1394
        %v1397 = vxor.u32 %v1396, 2147483648
        %v1398 = vmul.f32 %v1397, 1.442695
        %v1399 = vpow.pop %v1398
        %v1400 = vadd.f32 %v1399, 1.0
        %v1401 = vrcp.pop %v1400
        %v1402 = vmul.f32 %v1400, %v1401
        %v1403 = vsub.f32 1.0, %v1402
        %v1404 = vmul.f32 %v1401, %v1403
        %v1405 = vadd.f32 %v1401, %v1404
        %vm1406 = vweird.f32 %v1400
        %vm1407 = vweird.f32 %v1401
        %vm1408 = vmor %vm1406, %vm1407
        %v1409 = vsel %vm1408, %v1401, %v1405
        %v1410 = vand.u32 2147483647, %v1400
        %vm1411 = vcmp.eq.f32.partialorder %v1410, 8.507059e+37
        %v1412 = vand.u32 %v1400, 2147483648
        %v1413 = vor.u32 1.1754944e-38, %v1412
        %v1414 = vsel %vm1411, %v1413, %v1409
        %v1415 = vmul.f32 1.0, %v1414
        %v1416 = vtanh.pop %v1396
        %v1417 = vmul.f32 %v1415, %v1278
        %1419 = vrot.lane.b32.xlu0 %v1416, 64
        %v1420 = vpop.permute.xlu0 %1419
        %v1422 = vmul.f32 %v1415, %v1420
        %1424 = vrot.lane.b32.xlu0 %v1422, 32
        %v1425 = vpop.permute.xlu0 %1424
        %v1427 = vadd.f32 %v1417, %v1425
        %v1428 = vtanh.pop %v1427
        %1430 = vrot.lane.b32.xlu0 %v1428, 64
        %v1431 = vpop.permute.xlu0 %1430
        %v1433 = vmul.f32 %v1415, %v1431
        %v1434 = vsel %vm913, %v1372, 0
        %1436 = vmatpush.msra.mxu0 0.0
        %1437 = vmatpush.msra.mxu0 0.0
        %1438 = vmatpush.msra.mxu0 0.0
        %1439 = vmatpush.msra.mxu0 0.0
        %1440 = vmatpush.msra.mxu0 0.0
        %1441 = vmatpush.msra.mxu0 0.0
        %1442 = vmatpush.msra.mxu0 0.0
        %1443 = vmatpush.msra.mxu0 0.0
        %1444 = vmatpush.msra.mxu0 0.0
        %1445 = vmatpush.msra.mxu0 0.0
        %1446 = vmatpush.msra.mxu0 0.0
        %1447 = vmatpush.msra.mxu0 0.0
        %1448 = vmatpush.msra.mxu0 %v906
        %1449 = vmatpush.msra.mxu0 %v905
        %1450 = vmatpush.msra.mxu0 %v904
        %1451 = vmatpush.msra.mxu0 %v903
        %1452 = vmatmul.f32.gmra.mxu0 %v1434
        %v1453 = vpop.f32.mrf.mxu0
        %v1454 = vadd.f32 0.0, %v1453
        %1455 = vdwg.mxu0
        %1457 = vrot.lane.b32.xlu0 %v1433, 32
        %v1458 = vpop.permute.xlu0 %1457
        %v1459 = vsel %vm913, %v1458, 0
        %1461 = vmatpush.msra.mxu0 0.0
        %1462 = vmatpush.msra.mxu0 0.0
        %1463 = vmatpush.msra.mxu0 0.0
        %1464 = vmatpush.msra.mxu0 0.0
        %1465 = vmatpush.msra.mxu0 0.0
        %1466 = vmatpush.msra.mxu0 0.0
        %1467 = vmatpush.msra.mxu0 0.0
        %1468 = vmatpush.msra.mxu0 0.0
        %1469 = vmatpush.msra.mxu0 0.0
        %1470 = vmatpush.msra.mxu0 0.0
        %1471 = vmatpush.msra.mxu0 0.0
        %1472 = vmatpush.msra.mxu0 0.0
        %1473 = vmatpush.msra.mxu0 %v902
        %1474 = vmatpush.msra.mxu0 %v901
        %1475 = vmatpush.msra.mxu0 %v900
        %1476 = vmatpush.msra.mxu0 %v899
        %1477 = vmatmul.f32.gmra.mxu0 %v1459
        %v1478 = vpop.f32.mrf.mxu0
        %v1479 = vadd.f32 %v1454, %v1478
        %1480 = vdwg.mxu0
        %v1481 = vadd.f32 %v1479, %v907
        %v1482 = vxor.u32 %v1481, 2147483648
        %v1483 = vmul.f32 %v1482, 1.442695
        %v1484 = vpow.pop %v1483
        %v1485 = vadd.f32 %v1484, 1.0
        %v1486 = vrcp.pop %v1485
        %v1487 = vmul.f32 %v1485, %v1486
        %v1488 = vsub.f32 1.0, %v1487
        %v1489 = vmul.f32 %v1486, %v1488
        %v1490 = vadd.f32 %v1486, %v1489
        %vm1491 = vweird.f32 %v1485
        %vm1492 = vweird.f32 %v1486
        %vm1493 = vmor %vm1491, %vm1492
        %v1494 = vsel %vm1493, %v1486, %v1490
        %v1495 = vand.u32 2147483647, %v1485
        %vm1496 = vcmp.eq.f32.partialorder %v1495, 8.507059e+37
        %v1497 = vand.u32 %v1485, 2147483648
        %v1498 = vor.u32 1.1754944e-38, %v1497
        %v1499 = vsel %vm1496, %v1498, %v1494
        %v1500 = vmul.f32 1.0, %v1499
        %v1501 = vtanh.pop %v1481
        %v1502 = vmul.f32 %v1500, %v1363
        %1504 = vrot.lane.b32.xlu0 %v1501, 64
        %v1505 = vpop.permute.xlu0 %1504
        %v1507 = vmul.f32 %v1500, %v1505
        %1509 = vrot.lane.b32.xlu0 %v1507, 32
        %v1510 = vpop.permute.xlu0 %1509
        %v1512 = vadd.f32 %v1502, %v1510
        %v1513 = vtanh.pop %v1512
        %1515 = vrot.lane.b32.xlu0 %v1513, 64
        %v1516 = vpop.permute.xlu0 %1515
        %v1518 = vmul.f32 %v1500, %v1516
        %1520 = vrot.lane.b32.xlu0 %v1518, 32
        %v1521 = vpop.permute.xlu0 %1520
        %1523 = vst.msk [vmem:[#allocation7 + $0x3] sm:$0x1] %vm1075, %v1521
        %v1524 = vld [vmem:[#allocation6 + $0x4] sm:$0x1]
        %1525 = vmatpush.msra.mxu0 0.0
        %1526 = vmatpush.msra.mxu0 0.0
        %1527 = vmatpush.msra.mxu0 0.0
        %1528 = vmatpush.msra.mxu0 0.0
        %1529 = vmatpush.msra.mxu0 0.0
        %1530 = vmatpush.msra.mxu0 0.0
        %1531 = vmatpush.msra.mxu0 0.0
        %1532 = vmatpush.msra.mxu0 0.0
        %1533 = vmatpush.msra.mxu0 0.0
        %1534 = vmatpush.msra.mxu0 0.0
        %1535 = vmatpush.msra.mxu0 0.0
        %1536 = vmatpush.msra.mxu0 0.0
        %1537 = vmatpush.msra.mxu0 %v898
        %1538 = vmatpush.msra.mxu0 %v897
        %1539 = vmatpush.msra.mxu0 %v896
        %1540 = vmatpush.msra.mxu0 %v895
        %1541 = vmatmul.f32.gmra.mxu0 %v1459
        %v1542 = vpop.f32.mrf.mxu0
        %v1543 = vadd.f32 0.0, %v1542
        %1544 = vdwg.mxu0
        %v1545 = vadd.f32 %v1524, %v1543
        %v1546 = vxor.u32 %v1545, 2147483648
        %v1547 = vmul.f32 %v1546, 1.442695
        %v1548 = vpow.pop %v1547
        %v1549 = vadd.f32 %v1548, 1.0
        %v1550 = vrcp.pop %v1549
        %v1551 = vmul.f32 %v1549, %v1550
        %v1552 = vsub.f32 1.0, %v1551
        %v1553 = vmul.f32 %v1550, %v1552
        %v1554 = vadd.f32 %v1550, %v1553
        %vm1555 = vweird.f32 %v1549
        %vm1556 = vweird.f32 %v1550
        %vm1557 = vmor %vm1555, %vm1556
        %v1558 = vsel %vm1557, %v1550, %v1554
        %v1559 = vand.u32 2147483647, %v1549
        %vm1560 = vcmp.eq.f32.partialorder %v1559, 8.507059e+37
        %v1561 = vand.u32 %v1549, 2147483648
        %v1562 = vor.u32 1.1754944e-38, %v1561
        %v1563 = vsel %vm1560, %v1562, %v1558
        %v1564 = vmul.f32 1.0, %v1563
        %v1565 = vtanh.pop %v1545
        %v1566 = vmul.f32 %v1564, %v1427
        %1568 = vrot.lane.b32.xlu0 %v1565, 64
        %v1569 = vpop.permute.xlu0 %1568
        %v1571 = vmul.f32 %v1564, %v1569
        %1573 = vrot.lane.b32.xlu0 %v1571, 32
        %v1574 = vpop.permute.xlu0 %1573
        %v1576 = vadd.f32 %v1566, %v1574
        %v1577 = vtanh.pop %v1576
        %1579 = vrot.lane.b32.xlu0 %v1577, 64
        %v1580 = vpop.permute.xlu0 %1579
        %v1582 = vmul.f32 %v1564, %v1580
        %v1583 = vsel %vm913, %v1521, 0
        %1585 = vmatpush.msra.mxu0 0.0
        %1586 = vmatpush.msra.mxu0 0.0
        %1587 = vmatpush.msra.mxu0 0.0
        %1588 = vmatpush.msra.mxu0 0.0
        %1589 = vmatpush.msra.mxu0 0.0
        %1590 = vmatpush.msra.mxu0 0.0
        %1591 = vmatpush.msra.mxu0 0.0
        %1592 = vmatpush.msra.mxu0 0.0
        %1593 = vmatpush.msra.mxu0 0.0
        %1594 = vmatpush.msra.mxu0 0.0
        %1595 = vmatpush.msra.mxu0 0.0
        %1596 = vmatpush.msra.mxu0 0.0
        %1597 = vmatpush.msra.mxu0 %v906
        %1598 = vmatpush.msra.mxu0 %v905
        %1599 = vmatpush.msra.mxu0 %v904
        %1600 = vmatpush.msra.mxu0 %v903
        %1601 = vmatmul.f32.gmra.mxu0 %v1583
        %v1602 = vpop.f32.mrf.mxu0
        %v1603 = vadd.f32 0.0, %v1602
        %1604 = vdwg.mxu0
        %1606 = vrot.lane.b32.xlu0 %v1582, 32
        %v1607 = vpop.permute.xlu0 %1606
        %v1608 = vsel %vm913, %v1607, 0
        %1610 = vmatpush.msra.mxu0 0.0
        %1611 = vmatpush.msra.mxu0 0.0
        %1612 = vmatpush.msra.mxu0 0.0
        %1613 = vmatpush.msra.mxu0 0.0
        %1614 = vmatpush.msra.mxu0 0.0
        %1615 = vmatpush.msra.mxu0 0.0
        %1616 = vmatpush.msra.mxu0 0.0
        %1617 = vmatpush.msra.mxu0 0.0
        %1618 = vmatpush.msra.mxu0 0.0
        %1619 = vmatpush.msra.mxu0 0.0
        %1620 = vmatpush.msra.mxu0 0.0
        %1621 = vmatpush.msra.mxu0 0.0
        %1622 = vmatpush.msra.mxu0 %v902
        %1623 = vmatpush.msra.mxu0 %v901
        %1624 = vmatpush.msra.mxu0 %v900
        %1625 = vmatpush.msra.mxu0 %v899
        %1626 = vmatmul.f32.gmra.mxu0 %v1608
        %v1627 = vpop.f32.mrf.mxu0
        %v1628 = vadd.f32 %v1603, %v1627
        %1629 = vdwg.mxu0
        %v1630 = vadd.f32 %v1628, %v907
        %v1631 = vxor.u32 %v1630, 2147483648
        %v1632 = vmul.f32 %v1631, 1.442695
        %v1633 = vpow.pop %v1632
        %v1634 = vadd.f32 %v1633, 1.0
        %v1635 = vrcp.pop %v1634
        %v1636 = vmul.f32 %v1634, %v1635
        %v1637 = vsub.f32 1.0, %v1636
        %v1638 = vmul.f32 %v1635, %v1637
        %v1639 = vadd.f32 %v1635, %v1638
        %vm1640 = vweird.f32 %v1634
        %vm1641 = vweird.f32 %v1635
        %vm1642 = vmor %vm1640, %vm1641
        %v1643 = vsel %vm1642, %v1635, %v1639
        %v1644 = vand.u32 2147483647, %v1634
        %vm1645 = vcmp.eq.f32.partialorder %v1644, 8.507059e+37
        %v1646 = vand.u32 %v1634, 2147483648
        %v1647 = vor.u32 1.1754944e-38, %v1646
        %v1648 = vsel %vm1645, %v1647, %v1643
        %v1649 = vmul.f32 1.0, %v1648
        %v1650 = vtanh.pop %v1630
        %v1651 = vmul.f32 %v1649, %v1512
        %1653 = vrot.lane.b32.xlu0 %v1650, 64
        %v1654 = vpop.permute.xlu0 %1653
        %v1656 = vmul.f32 %v1649, %v1654
        %1658 = vrot.lane.b32.xlu0 %v1656, 32
        %v1659 = vpop.permute.xlu0 %1658
        %v1661 = vadd.f32 %v1651, %v1659
        %v1662 = vtanh.pop %v1661
        %1664 = vrot.lane.b32.xlu0 %v1662, 64
        %v1665 = vpop.permute.xlu0 %1664
        %v1667 = vmul.f32 %v1649, %v1665
        %1669 = vrot.lane.b32.xlu0 %v1667, 32
        %v1670 = vpop.permute.xlu0 %1669
        %1672 = vst.msk [vmem:[#allocation7 + $0x4] sm:$0x1] %vm1075, %v1670
        %v1673 = vld [vmem:[#allocation6 + $0x5] sm:$0x1]
        %1674 = vmatpush.msra.mxu0 0.0
        %1675 = vmatpush.msra.mxu0 0.0
        %1676 = vmatpush.msra.mxu0 0.0
        %1677 = vmatpush.msra.mxu0 0.0
        %1678 = vmatpush.msra.mxu0 0.0
        %1679 = vmatpush.msra.mxu0 0.0
        %1680 = vmatpush.msra.mxu0 0.0
        %1681 = vmatpush.msra.mxu0 0.0
        %1682 = vmatpush.msra.mxu0 0.0
        %1683 = vmatpush.msra.mxu0 0.0
        %1684 = vmatpush.msra.mxu0 0.0
        %1685 = vmatpush.msra.mxu0 0.0
        %1686 = vmatpush.msra.mxu0 %v898
        %1687 = vmatpush.msra.mxu0 %v897
        %1688 = vmatpush.msra.mxu0 %v896
        %1689 = vmatpush.msra.mxu0 %v895
        %1690 = vmatmul.f32.gmra.mxu0 %v1608
        %v1691 = vpop.f32.mrf.mxu0
        %v1692 = vadd.f32 0.0, %v1691
        %1693 = vdwg.mxu0
        %v1694 = vadd.f32 %v1673, %v1692
        %v1695 = vxor.u32 %v1694, 2147483648
        %v1696 = vmul.f32 %v1695, 1.442695
        %v1697 = vpow.pop %v1696
        %v1698 = vadd.f32 %v1697, 1.0
        %v1699 = vrcp.pop %v1698
        %v1700 = vmul.f32 %v1698, %v1699
        %v1701 = vsub.f32 1.0, %v1700
        %v1702 = vmul.f32 %v1699, %v1701
        %v1703 = vadd.f32 %v1699, %v1702
        %vm1704 = vweird.f32 %v1698
        %vm1705 = vweird.f32 %v1699
        %vm1706 = vmor %vm1704, %vm1705
        %v1707 = vsel %vm1706, %v1699, %v1703
        %v1708 = vand.u32 2147483647, %v1698
        %vm1709 = vcmp.eq.f32.partialorder %v1708, 8.507059e+37
        %v1710 = vand.u32 %v1698, 2147483648
        %v1711 = vor.u32 1.1754944e-38, %v1710
        %v1712 = vsel %vm1709, %v1711, %v1707
        %v1713 = vmul.f32 1.0, %v1712
        %v1714 = vtanh.pop %v1694
        %v1715 = vmul.f32 %v1713, %v1576
        %1717 = vrot.lane.b32.xlu0 %v1714, 64
        %v1718 = vpop.permute.xlu0 %1717
        %v1720 = vmul.f32 %v1713, %v1718
        %1722 = vrot.lane.b32.xlu0 %v1720, 32
        %v1723 = vpop.permute.xlu0 %1722
        %v1725 = vadd.f32 %v1715, %v1723
        %v1726 = vtanh.pop %v1725
        %1728 = vrot.lane.b32.xlu0 %v1726, 64
        %v1729 = vpop.permute.xlu0 %1728
        %v1731 = vmul.f32 %v1713, %v1729
        %v1732 = vsel %vm913, %v1670, 0
        %1734 = vmatpush.msra.mxu0 0.0
        %1735 = vmatpush.msra.mxu0 0.0
        %1736 = vmatpush.msra.mxu0 0.0
        %1737 = vmatpush.msra.mxu0 0.0
        %1738 = vmatpush.msra.mxu0 0.0
        %1739 = vmatpush.msra.mxu0 0.0
        %1740 = vmatpush.msra.mxu0 0.0
        %1741 = vmatpush.msra.mxu0 0.0
        %1742 = vmatpush.msra.mxu0 0.0
        %1743 = vmatpush.msra.mxu0 0.0
        %1744 = vmatpush.msra.mxu0 0.0
        %1745 = vmatpush.msra.mxu0 0.0
        %1746 = vmatpush.msra.mxu0 %v906
        %1747 = vmatpush.msra.mxu0 %v905
        %1748 = vmatpush.msra.mxu0 %v904
        %1749 = vmatpush.msra.mxu0 %v903
        %1750 = vmatmul.f32.gmra.mxu0 %v1732
        %v1751 = vpop.f32.mrf.mxu0
        %v1752 = vadd.f32 0.0, %v1751
        %1753 = vdwg.mxu0
        %1755 = vrot.lane.b32.xlu0 %v1731, 32
        %v1756 = vpop.permute.xlu0 %1755
        %v1757 = vsel %vm913, %v1756, 0
        %1759 = vmatpush.msra.mxu0 0.0
        %1760 = vmatpush.msra.mxu0 0.0
        %1761 = vmatpush.msra.mxu0 0.0
        %1762 = vmatpush.msra.mxu0 0.0
        %1763 = vmatpush.msra.mxu0 0.0
        %1764 = vmatpush.msra.mxu0 0.0
        %1765 = vmatpush.msra.mxu0 0.0
        %1766 = vmatpush.msra.mxu0 0.0
        %1767 = vmatpush.msra.mxu0 0.0
        %1768 = vmatpush.msra.mxu0 0.0
        %1769 = vmatpush.msra.mxu0 0.0
        %1770 = vmatpush.msra.mxu0 0.0
        %1771 = vmatpush.msra.mxu0 %v902
        %1772 = vmatpush.msra.mxu0 %v901
        %1773 = vmatpush.msra.mxu0 %v900
        %1774 = vmatpush.msra.mxu0 %v899
        %1775 = vmatmul.f32.gmra.mxu0 %v1757
        %v1776 = vpop.f32.mrf.mxu0
        %v1777 = vadd.f32 %v1752, %v1776
        %1778 = vdwg.mxu0
        %v1779 = vadd.f32 %v1777, %v907
        %v1780 = vxor.u32 %v1779, 2147483648
        %v1781 = vmul.f32 %v1780, 1.442695
        %v1782 = vpow.pop %v1781
        %v1783 = vadd.f32 %v1782, 1.0
        %v1784 = vrcp.pop %v1783
        %v1785 = vmul.f32 %v1783, %v1784
        %v1786 = vsub.f32 1.0, %v1785
        %v1787 = vmul.f32 %v1784, %v1786
        %v1788 = vadd.f32 %v1784, %v1787
        %vm1789 = vweird.f32 %v1783
        %vm1790 = vweird.f32 %v1784
        %vm1791 = vmor %vm1789, %vm1790
        %v1792 = vsel %vm1791, %v1784, %v1788
        %v1793 = vand.u32 2147483647, %v1783
        %vm1794 = vcmp.eq.f32.partialorder %v1793, 8.507059e+37
        %v1795 = vand.u32 %v1783, 2147483648
        %v1796 = vor.u32 1.1754944e-38, %v1795
        %v1797 = vsel %vm1794, %v1796, %v1792
        %v1798 = vmul.f32 1.0, %v1797
        %v1799 = vtanh.pop %v1779
        %v1800 = vmul.f32 %v1798, %v1661
        %1802 = vrot.lane.b32.xlu0 %v1799, 64
        %v1803 = vpop.permute.xlu0 %1802
        %v1805 = vmul.f32 %v1798, %v1803
        %1807 = vrot.lane.b32.xlu0 %v1805, 32
        %v1808 = vpop.permute.xlu0 %1807
        %v1810 = vadd.f32 %v1800, %v1808
        %v1811 = vtanh.pop %v1810
        %1813 = vrot.lane.b32.xlu0 %v1811, 64
        %v1814 = vpop.permute.xlu0 %1813
        %v1816 = vmul.f32 %v1798, %v1814
        %1818 = vrot.lane.b32.xlu0 %v1816, 32
        %v1819 = vpop.permute.xlu0 %1818
        %1821 = vst.msk [vmem:[#allocation7 + $0x5] sm:$0x1] %vm1075, %v1819
        %v1822 = vld [vmem:[#allocation6 + $0x6] sm:$0x1]
        %1823 = vmatpush.msra.mxu0 0.0
        %1824 = vmatpush.msra.mxu0 0.0
        %1825 = vmatpush.msra.mxu0 0.0
        %1826 = vmatpush.msra.mxu0 0.0
        %1827 = vmatpush.msra.mxu0 0.0
        %1828 = vmatpush.msra.mxu0 0.0
        %1829 = vmatpush.msra.mxu0 0.0
        %1830 = vmatpush.msra.mxu0 0.0
        %1831 = vmatpush.msra.mxu0 0.0
        %1832 = vmatpush.msra.mxu0 0.0
        %1833 = vmatpush.msra.mxu0 0.0
        %1834 = vmatpush.msra.mxu0 0.0
        %1835 = vmatpush.msra.mxu0 %v898
        %1836 = vmatpush.msra.mxu0 %v897
        %1837 = vmatpush.msra.mxu0 %v896
        %1838 = vmatpush.msra.mxu0 %v895
        %1839 = vmatmul.f32.gmra.mxu0 %v1757
        %v1840 = vpop.f32.mrf.mxu0
        %v1841 = vadd.f32 0.0, %v1840
        %1842 = vdwg.mxu0
        %v1843 = vadd.f32 %v1822, %v1841
        %v1844 = vxor.u32 %v1843, 2147483648
        %v1845 = vmul.f32 %v1844, 1.442695
        %v1846 = vpow.pop %v1845
        %v1847 = vadd.f32 %v1846, 1.0
        %v1848 = vrcp.pop %v1847
        %v1849 = vmul.f32 %v1847, %v1848
        %v1850 = vsub.f32 1.0, %v1849
        %v1851 = vmul.f32 %v1848, %v1850
        %v1852 = vadd.f32 %v1848, %v1851
        %vm1853 = vweird.f32 %v1847
        %vm1854 = vweird.f32 %v1848
        %vm1855 = vmor %vm1853, %vm1854
        %v1856 = vsel %vm1855, %v1848, %v1852
        %v1857 = vand.u32 2147483647, %v1847
        %vm1858 = vcmp.eq.f32.partialorder %v1857, 8.507059e+37
        %v1859 = vand.u32 %v1847, 2147483648
        %v1860 = vor.u32 1.1754944e-38, %v1859
        %v1861 = vsel %vm1858, %v1860, %v1856
        %v1862 = vmul.f32 1.0, %v1861
        %v1863 = vtanh.pop %v1843
        %v1864 = vmul.f32 %v1862, %v1725
        %1866 = vrot.lane.b32.xlu0 %v1863, 64
        %v1867 = vpop.permute.xlu0 %1866
        %v1869 = vmul.f32 %v1862, %v1867
        %1871 = vrot.lane.b32.xlu0 %v1869, 32
        %v1872 = vpop.permute.xlu0 %1871
        %v1874 = vadd.f32 %v1864, %v1872
        %v1875 = vtanh.pop %v1874
        %1877 = vrot.lane.b32.xlu0 %v1875, 64
        %v1878 = vpop.permute.xlu0 %1877
        %v1880 = vmul.f32 %v1862, %v1878
        %v1881 = vsel %vm913, %v1819, 0
        %1883 = vmatpush.msra.mxu0 0.0
        %1884 = vmatpush.msra.mxu0 0.0
        %1885 = vmatpush.msra.mxu0 0.0
        %1886 = vmatpush.msra.mxu0 0.0
        %1887 = vmatpush.msra.mxu0 0.0
        %1888 = vmatpush.msra.mxu0 0.0
        %1889 = vmatpush.msra.mxu0 0.0
        %1890 = vmatpush.msra.mxu0 0.0
        %1891 = vmatpush.msra.mxu0 0.0
        %1892 = vmatpush.msra.mxu0 0.0
        %1893 = vmatpush.msra.mxu0 0.0
        %1894 = vmatpush.msra.mxu0 0.0
        %1895 = vmatpush.msra.mxu0 %v906
        %1896 = vmatpush.msra.mxu0 %v905
        %1897 = vmatpush.msra.mxu0 %v904
        %1898 = vmatpush.msra.mxu0 %v903
        %1899 = vmatmul.f32.gmra.mxu0 %v1881
        %v1900 = vpop.f32.mrf.mxu0
        %v1901 = vadd.f32 0.0, %v1900
        %1902 = vdwg.mxu0
        %1904 = vrot.lane.b32.xlu0 %v1880, 32
        %v1905 = vpop.permute.xlu0 %1904
        %v1906 = vsel %vm913, %v1905, 0
        %1908 = vmatpush.msra.mxu0 0.0
        %1909 = vmatpush.msra.mxu0 0.0
        %1910 = vmatpush.msra.mxu0 0.0
        %1911 = vmatpush.msra.mxu0 0.0
        %1912 = vmatpush.msra.mxu0 0.0
        %1913 = vmatpush.msra.mxu0 0.0
        %1914 = vmatpush.msra.mxu0 0.0
        %1915 = vmatpush.msra.mxu0 0.0
        %1916 = vmatpush.msra.mxu0 0.0
        %1917 = vmatpush.msra.mxu0 0.0
        %1918 = vmatpush.msra.mxu0 0.0
        %1919 = vmatpush.msra.mxu0 0.0
        %1920 = vmatpush.msra.mxu0 %v902
        %1921 = vmatpush.msra.mxu0 %v901
        %1922 = vmatpush.msra.mxu0 %v900
        %1923 = vmatpush.msra.mxu0 %v899
        %1924 = vmatmul.f32.gmra.mxu0 %v1906
        %v1925 = vpop.f32.mrf.mxu0
        %v1926 = vadd.f32 %v1901, %v1925
        %1927 = vdwg.mxu0
        %v1928 = vadd.f32 %v1926, %v907
        %v1929 = vxor.u32 %v1928, 2147483648
        %v1930 = vmul.f32 %v1929, 1.442695
        %v1931 = vpow.pop %v1930
        %v1932 = vadd.f32 %v1931, 1.0
        %v1933 = vrcp.pop %v1932
        %v1934 = vmul.f32 %v1932, %v1933
        %v1935 = vsub.f32 1.0, %v1934
        %v1936 = vmul.f32 %v1933, %v1935
        %v1937 = vadd.f32 %v1933, %v1936
        %vm1938 = vweird.f32 %v1932
        %vm1939 = vweird.f32 %v1933
        %vm1940 = vmor %vm1938, %vm1939
        %v1941 = vsel %vm1940, %v1933, %v1937
        %v1942 = vand.u32 2147483647, %v1932
        %vm1943 = vcmp.eq.f32.partialorder %v1942, 8.507059e+37
        %v1944 = vand.u32 %v1932, 2147483648
        %v1945 = vor.u32 1.1754944e-38, %v1944
        %v1946 = vsel %vm1943, %v1945, %v1941
        %v1947 = vmul.f32 1.0, %v1946
        %v1948 = vtanh.pop %v1928
        %v1949 = vmul.f32 %v1947, %v1810
        %1951 = vrot.lane.b32.xlu0 %v1948, 64
        %v1952 = vpop.permute.xlu0 %1951
        %v1954 = vmul.f32 %v1947, %v1952
        %1956 = vrot.lane.b32.xlu0 %v1954, 32
        %v1957 = vpop.permute.xlu0 %1956
        %v1959 = vadd.f32 %v1949, %v1957
        %v1960 = vtanh.pop %v1959
        %1962 = vrot.lane.b32.xlu0 %v1960, 64
        %v1963 = vpop.permute.xlu0 %1962
        %v1965 = vmul.f32 %v1947, %v1963
        %1967 = vrot.lane.b32.xlu0 %v1965, 32
        %v1968 = vpop.permute.xlu0 %1967
        %1970 = vst.msk [vmem:[#allocation7 + $0x6] sm:$0x1] %vm1075, %v1968
        %v1971 = vld [vmem:[#allocation6 + $0x7] sm:$0x1]
        %1972 = vmatpush.msra.mxu0 0.0
        %1973 = vmatpush.msra.mxu0 0.0
        %1974 = vmatpush.msra.mxu0 0.0
        %1975 = vmatpush.msra.mxu0 0.0
        %1976 = vmatpush.msra.mxu0 0.0
        %1977 = vmatpush.msra.mxu0 0.0
        %1978 = vmatpush.msra.mxu0 0.0
        %1979 = vmatpush.msra.mxu0 0.0
        %1980 = vmatpush.msra.mxu0 0.0
        %1981 = vmatpush.msra.mxu0 0.0
        %1982 = vmatpush.msra.mxu0 0.0
        %1983 = vmatpush.msra.mxu0 0.0
        %1984 = vmatpush.msra.mxu0 %v898
        %1985 = vmatpush.msra.mxu0 %v897
        %1986 = vmatpush.msra.mxu0 %v896
        %1987 = vmatpush.msra.mxu0 %v895
        %1988 = vmatmul.f32.gmra.mxu0 %v1906
        %v1989 = vpop.f32.mrf.mxu0
        %v1990 = vadd.f32 0.0, %v1989
        %1991 = vdwg.mxu0
        %v1992 = vadd.f32 %v1971, %v1990
        %v1993 = vxor.u32 %v1992, 2147483648
        %v1994 = vmul.f32 %v1993, 1.442695
        %v1995 = vpow.pop %v1994
        %v1996 = vadd.f32 %v1995, 1.0
        %v1997 = vrcp.pop %v1996
        %v1998 = vmul.f32 %v1996, %v1997
        %v1999 = vsub.f32 1.0, %v1998
        %v2000 = vmul.f32 %v1997, %v1999
        %v2001 = vadd.f32 %v1997, %v2000
        %vm2002 = vweird.f32 %v1996
        %vm2003 = vweird.f32 %v1997
        %vm2004 = vmor %vm2002, %vm2003
        %v2005 = vsel %vm2004, %v1997, %v2001
        %v2006 = vand.u32 2147483647, %v1996
        %vm2007 = vcmp.eq.f32.partialorder %v2006, 8.507059e+37
        %v2008 = vand.u32 %v1996, 2147483648
        %v2009 = vor.u32 1.1754944e-38, %v2008
        %v2010 = vsel %vm2007, %v2009, %v2005
        %v2011 = vmul.f32 1.0, %v2010
        %v2012 = vtanh.pop %v1992
        %v2013 = vmul.f32 %v2011, %v1874
        %2015 = vrot.lane.b32.xlu0 %v2012, 64
        %v2016 = vpop.permute.xlu0 %2015
        %v2018 = vmul.f32 %v2011, %v2016
        %2020 = vrot.lane.b32.xlu0 %v2018, 32
        %v2021 = vpop.permute.xlu0 %2020
        %v2023 = vadd.f32 %v2013, %v2021
        %v2024 = vtanh.pop %v2023
        %2026 = vrot.lane.b32.xlu0 %v2024, 64
        %v2027 = vpop.permute.xlu0 %2026
        %v2029 = vmul.f32 %v2011, %v2027
        %v2030 = vsel %vm913, %v1968, 0
        %2032 = vmatpush.msra.mxu0 0.0
        %2033 = vmatpush.msra.mxu0 0.0
        %2034 = vmatpush.msra.mxu0 0.0
        %2035 = vmatpush.msra.mxu0 0.0
        %2036 = vmatpush.msra.mxu0 0.0
        %2037 = vmatpush.msra.mxu0 0.0
        %2038 = vmatpush.msra.mxu0 0.0
        %2039 = vmatpush.msra.mxu0 0.0
        %2040 = vmatpush.msra.mxu0 0.0
        %2041 = vmatpush.msra.mxu0 0.0
        %2042 = vmatpush.msra.mxu0 0.0
        %2043 = vmatpush.msra.mxu0 0.0
        %2044 = vmatpush.msra.mxu0 %v906
        %2045 = vmatpush.msra.mxu0 %v905
        %2046 = vmatpush.msra.mxu0 %v904
        %2047 = vmatpush.msra.mxu0 %v903
        %2048 = vmatmul.f32.gmra.mxu0 %v2030
        %v2049 = vpop.f32.mrf.mxu0
        %v2050 = vadd.f32 0.0, %v2049
        %2051 = vdwg.mxu0
        %2053 = vrot.lane.b32.xlu0 %v2029, 32
        %v2054 = vpop.permute.xlu0 %2053
        %v2055 = vsel %vm913, %v2054, 0
        %2057 = vmatpush.msra.mxu0 0.0
        %2058 = vmatpush.msra.mxu0 0.0
        %2059 = vmatpush.msra.mxu0 0.0
        %2060 = vmatpush.msra.mxu0 0.0
        %2061 = vmatpush.msra.mxu0 0.0
        %2062 = vmatpush.msra.mxu0 0.0
        %2063 = vmatpush.msra.mxu0 0.0
        %2064 = vmatpush.msra.mxu0 0.0
        %2065 = vmatpush.msra.mxu0 0.0
        %2066 = vmatpush.msra.mxu0 0.0
        %2067 = vmatpush.msra.mxu0 0.0
        %2068 = vmatpush.msra.mxu0 0.0
        %2069 = vmatpush.msra.mxu0 %v902
        %2070 = vmatpush.msra.mxu0 %v901
        %2071 = vmatpush.msra.mxu0 %v900
        %2072 = vmatpush.msra.mxu0 %v899
        %2073 = vmatmul.f32.gmra.mxu0 %v2055
        %v2074 = vpop.f32.mrf.mxu0
        %v2075 = vadd.f32 %v2050, %v2074
        %2076 = vdwg.mxu0
        %v2077 = vadd.f32 %v2075, %v907
        %v2078 = vxor.u32 %v2077, 2147483648
        %v2079 = vmul.f32 %v2078, 1.442695
        %v2080 = vpow.pop %v2079
        %v2081 = vadd.f32 %v2080, 1.0
        %v2082 = vrcp.pop %v2081
        %v2083 = vmul.f32 %v2081, %v2082
        %v2084 = vsub.f32 1.0, %v2083
        %v2085 = vmul.f32 %v2082, %v2084
        %v2086 = vadd.f32 %v2082, %v2085
        %vm2087 = vweird.f32 %v2081
        %vm2088 = vweird.f32 %v2082
        %vm2089 = vmor %vm2087, %vm2088
        %v2090 = vsel %vm2089, %v2082, %v2086
        %v2091 = vand.u32 2147483647, %v2081
        %vm2092 = vcmp.eq.f32.partialorder %v2091, 8.507059e+37
        %v2093 = vand.u32 %v2081, 2147483648
        %v2094 = vor.u32 1.1754944e-38, %v2093
        %v2095 = vsel %vm2092, %v2094, %v2090
        %v2096 = vmul.f32 1.0, %v2095
        %v2097 = vtanh.pop %v2077
        %v2098 = vmul.f32 %v2096, %v1959
        %2100 = vrot.lane.b32.xlu0 %v2097, 64
        %v2101 = vpop.permute.xlu0 %2100
        %v2103 = vmul.f32 %v2096, %v2101
        %2105 = vrot.lane.b32.xlu0 %v2103, 32
        %v2106 = vpop.permute.xlu0 %2105
        %v2108 = vadd.f32 %v2098, %v2106
        %v2109 = vtanh.pop %v2108
        %2111 = vrot.lane.b32.xlu0 %v2109, 64
        %v2112 = vpop.permute.xlu0 %2111
        %v2114 = vmul.f32 %v2096, %v2112
        %2116 = vrot.lane.b32.xlu0 %v2114, 32
        %v2117 = vpop.permute.xlu0 %2116
        %2119 = vst.msk [vmem:[#allocation7 + $0x7] sm:$0x1] %vm1075, %v2117
        %v2120 = vld [vmem:[#allocation6 + $0x8] sm:$0x1]
        %2121 = vmatpush.msra.mxu0 0.0
        %2122 = vmatpush.msra.mxu0 0.0
        %2123 = vmatpush.msra.mxu0 0.0
        %2124 = vmatpush.msra.mxu0 0.0
        %2125 = vmatpush.msra.mxu0 0.0
        %2126 = vmatpush.msra.mxu0 0.0
        %2127 = vmatpush.msra.mxu0 0.0
        %2128 = vmatpush.msra.mxu0 0.0
        %2129 = vmatpush.msra.mxu0 0.0
        %2130 = vmatpush.msra.mxu0 0.0
        %2131 = vmatpush.msra.mxu0 0.0
        %2132 = vmatpush.msra.mxu0 0.0
        %2133 = vmatpush.msra.mxu0 %v898
        %2134 = vmatpush.msra.mxu0 %v897
        %2135 = vmatpush.msra.mxu0 %v896
        %2136 = vmatpush.msra.mxu0 %v895
        %2137 = vmatmul.f32.gmra.mxu0 %v2055
        %v2138 = vpop.f32.mrf.mxu0
        %v2139 = vadd.f32 0.0, %v2138
        %2140 = vdwg.mxu0
        %v2141 = vadd.f32 %v2120, %v2139
        %v2142 = vxor.u32 %v2141, 2147483648
        %v2143 = vmul.f32 %v2142, 1.442695
        %v2144 = vpow.pop %v2143
        %v2145 = vadd.f32 %v2144, 1.0
        %v2146 = vrcp.pop %v2145
        %v2147 = vmul.f32 %v2145, %v2146
        %v2148 = vsub.f32 1.0, %v2147
        %v2149 = vmul.f32 %v2146, %v2148
        %v2150 = vadd.f32 %v2146, %v2149
        %vm2151 = vweird.f32 %v2145
        %vm2152 = vweird.f32 %v2146
        %vm2153 = vmor %vm2151, %vm2152
        %v2154 = vsel %vm2153, %v2146, %v2150
        %v2155 = vand.u32 2147483647, %v2145
        %vm2156 = vcmp.eq.f32.partialorder %v2155, 8.507059e+37
        %v2157 = vand.u32 %v2145, 2147483648
        %v2158 = vor.u32 1.1754944e-38, %v2157
        %v2159 = vsel %vm2156, %v2158, %v2154
        %v2160 = vmul.f32 1.0, %v2159
        %v2161 = vtanh.pop %v2141
        %v2162 = vmul.f32 %v2160, %v2023
        %2164 = vrot.lane.b32.xlu0 %v2161, 64
        %v2165 = vpop.permute.xlu0 %2164
        %v2167 = vmul.f32 %v2160, %v2165
        %2169 = vrot.lane.b32.xlu0 %v2167, 32
        %v2170 = vpop.permute.xlu0 %2169
        %v2172 = vadd.f32 %v2162, %v2170
        %v2173 = vtanh.pop %v2172
        %2175 = vrot.lane.b32.xlu0 %v2173, 64
        %v2176 = vpop.permute.xlu0 %2175
        %v2178 = vmul.f32 %v2160, %v2176
        %v2179 = vsel %vm913, %v2117, 0
        %2181 = vmatpush.msra.mxu0 0.0
        %2182 = vmatpush.msra.mxu0 0.0
        %2183 = vmatpush.msra.mxu0 0.0
        %2184 = vmatpush.msra.mxu0 0.0
        %2185 = vmatpush.msra.mxu0 0.0
        %2186 = vmatpush.msra.mxu0 0.0
        %2187 = vmatpush.msra.mxu0 0.0
        %2188 = vmatpush.msra.mxu0 0.0
        %2189 = vmatpush.msra.mxu0 0.0
        %2190 = vmatpush.msra.mxu0 0.0
        %2191 = vmatpush.msra.mxu0 0.0
        %2192 = vmatpush.msra.mxu0 0.0
        %2193 = vmatpush.msra.mxu0 %v906
        %2194 = vmatpush.msra.mxu0 %v905
        %2195 = vmatpush.msra.mxu0 %v904
        %2196 = vmatpush.msra.mxu0 %v903
        %2197 = vmatmul.f32.gmra.mxu0 %v2179
        %v2198 = vpop.f32.mrf.mxu0
        %v2199 = vadd.f32 0.0, %v2198
        %2200 = vdwg.mxu0
        %2202 = vrot.lane.b32.xlu0 %v2178, 32
        %v2203 = vpop.permute.xlu0 %2202
        %v2204 = vsel %vm913, %v2203, 0
        %2206 = vmatpush.msra.mxu0 0.0
        %2207 = vmatpush.msra.mxu0 0.0
        %2208 = vmatpush.msra.mxu0 0.0
        %2209 = vmatpush.msra.mxu0 0.0
        %2210 = vmatpush.msra.mxu0 0.0
        %2211 = vmatpush.msra.mxu0 0.0
        %2212 = vmatpush.msra.mxu0 0.0
        %2213 = vmatpush.msra.mxu0 0.0
        %2214 = vmatpush.msra.mxu0 0.0
        %2215 = vmatpush.msra.mxu0 0.0
        %2216 = vmatpush.msra.mxu0 0.0
        %2217 = vmatpush.msra.mxu0 0.0
        %2218 = vmatpush.msra.mxu0 %v902
        %2219 = vmatpush.msra.mxu0 %v901
        %2220 = vmatpush.msra.mxu0 %v900
        %2221 = vmatpush.msra.mxu0 %v899
        %2222 = vmatmul.f32.gmra.mxu0 %v2204
        %v2223 = vpop.f32.mrf.mxu0
        %v2224 = vadd.f32 %v2199, %v2223
        %2225 = vdwg.mxu0
        %v2226 = vadd.f32 %v2224, %v907
        %v2227 = vxor.u32 %v2226, 2147483648
        %v2228 = vmul.f32 %v2227, 1.442695
        %v2229 = vpow.pop %v2228
        %v2230 = vadd.f32 %v2229, 1.0
        %v2231 = vrcp.pop %v2230
        %v2232 = vmul.f32 %v2230, %v2231
        %v2233 = vsub.f32 1.0, %v2232
        %v2234 = vmul.f32 %v2231, %v2233
        %v2235 = vadd.f32 %v2231, %v2234
        %vm2236 = vweird.f32 %v2230
        %vm2237 = vweird.f32 %v2231
        %vm2238 = vmor %vm2236, %vm2237
        %v2239 = vsel %vm2238, %v2231, %v2235
        %v2240 = vand.u32 2147483647, %v2230
        %vm2241 = vcmp.eq.f32.partialorder %v2240, 8.507059e+37
        %v2242 = vand.u32 %v2230, 2147483648
        %v2243 = vor.u32 1.1754944e-38, %v2242
        %v2244 = vsel %vm2241, %v2243, %v2239
        %v2245 = vmul.f32 1.0, %v2244
        %v2246 = vtanh.pop %v2226
        %v2247 = vmul.f32 %v2245, %v2108
        %2249 = vrot.lane.b32.xlu0 %v2246, 64
        %v2250 = vpop.permute.xlu0 %2249
        %v2252 = vmul.f32 %v2245, %v2250
        %2254 = vrot.lane.b32.xlu0 %v2252, 32
        %v2255 = vpop.permute.xlu0 %2254
        %v2257 = vadd.f32 %v2247, %v2255
        %v2258 = vtanh.pop %v2257
        %2260 = vrot.lane.b32.xlu0 %v2258, 64
        %v2261 = vpop.permute.xlu0 %2260
        %v2263 = vmul.f32 %v2245, %v2261
        %2265 = vrot.lane.b32.xlu0 %v2263, 32
        %v2266 = vpop.permute.xlu0 %2265
        %2268 = vst.msk [vmem:[#allocation7 + $0x8] sm:$0x1] %vm1075, %v2266
        %v2269 = vld [vmem:[#allocation6 + $0x9] sm:$0x1]
        %2270 = vmatpush.msra.mxu0 0.0
        %2271 = vmatpush.msra.mxu0 0.0
        %2272 = vmatpush.msra.mxu0 0.0
        %2273 = vmatpush.msra.mxu0 0.0
        %2274 = vmatpush.msra.mxu0 0.0
        %2275 = vmatpush.msra.mxu0 0.0
        %2276 = vmatpush.msra.mxu0 0.0
        %2277 = vmatpush.msra.mxu0 0.0
        %2278 = vmatpush.msra.mxu0 0.0
        %2279 = vmatpush.msra.mxu0 0.0
        %2280 = vmatpush.msra.mxu0 0.0
        %2281 = vmatpush.msra.mxu0 0.0
        %2282 = vmatpush.msra.mxu0 %v898
        %2283 = vmatpush.msra.mxu0 %v897
        %2284 = vmatpush.msra.mxu0 %v896
        %2285 = vmatpush.msra.mxu0 %v895
        %2286 = vmatmul.f32.gmra.mxu0 %v2204
        %v2287 = vpop.f32.mrf.mxu0
        %v2288 = vadd.f32 0.0, %v2287
        %2289 = vdwg.mxu0
        %v2290 = vadd.f32 %v2269, %v2288
        %v2291 = vxor.u32 %v2290, 2147483648
        %v2292 = vmul.f32 %v2291, 1.442695
        %v2293 = vpow.pop %v2292
        %v2294 = vadd.f32 %v2293, 1.0
        %v2295 = vrcp.pop %v2294
        %v2296 = vmul.f32 %v2294, %v2295
        %v2297 = vsub.f32 1.0, %v2296
        %v2298 = vmul.f32 %v2295, %v2297
        %v2299 = vadd.f32 %v2295, %v2298
        %vm2300 = vweird.f32 %v2294
        %vm2301 = vweird.f32 %v2295
        %vm2302 = vmor %vm2300, %vm2301
        %v2303 = vsel %vm2302, %v2295, %v2299
        %v2304 = vand.u32 2147483647, %v2294
        %vm2305 = vcmp.eq.f32.partialorder %v2304, 8.507059e+37
        %v2306 = vand.u32 %v2294, 2147483648
        %v2307 = vor.u32 1.1754944e-38, %v2306
        %v2308 = vsel %vm2305, %v2307, %v2303
        %v2309 = vmul.f32 1.0, %v2308
        %v2310 = vtanh.pop %v2290
        %v2311 = vmul.f32 %v2309, %v2172
        %2313 = vrot.lane.b32.xlu0 %v2310, 64
        %v2314 = vpop.permute.xlu0 %2313
        %v2316 = vmul.f32 %v2309, %v2314
        %2318 = vrot.lane.b32.xlu0 %v2316, 32
        %v2319 = vpop.permute.xlu0 %2318
        %v2321 = vadd.f32 %v2311, %v2319
        %v2322 = vtanh.pop %v2321
        %2324 = vrot.lane.b32.xlu0 %v2322, 64
        %v2325 = vpop.permute.xlu0 %2324
        %v2327 = vmul.f32 %v2309, %v2325
        %v2328 = vsel %vm913, %v2266, 0
        %2330 = vmatpush.msra.mxu0 0.0
        %2331 = vmatpush.msra.mxu0 0.0
        %2332 = vmatpush.msra.mxu0 0.0
        %2333 = vmatpush.msra.mxu0 0.0
        %2334 = vmatpush.msra.mxu0 0.0
        %2335 = vmatpush.msra.mxu0 0.0
        %2336 = vmatpush.msra.mxu0 0.0
        %2337 = vmatpush.msra.mxu0 0.0
        %2338 = vmatpush.msra.mxu0 0.0
        %2339 = vmatpush.msra.mxu0 0.0
        %2340 = vmatpush.msra.mxu0 0.0
        %2341 = vmatpush.msra.mxu0 0.0
        %2342 = vmatpush.msra.mxu0 %v906
        %2343 = vmatpush.msra.mxu0 %v905
        %2344 = vmatpush.msra.mxu0 %v904
        %2345 = vmatpush.msra.mxu0 %v903
        %2346 = vmatmul.f32.gmra.mxu0 %v2328
        %v2347 = vpop.f32.mrf.mxu0
        %v2348 = vadd.f32 0.0, %v2347
        %2349 = vdwg.mxu0
        %2351 = vrot.lane.b32.xlu0 %v2327, 32
        %v2352 = vpop.permute.xlu0 %2351
        %v2353 = vsel %vm913, %v2352, 0
        %2355 = vmatpush.msra.mxu0 0.0
        %2356 = vmatpush.msra.mxu0 0.0
        %2357 = vmatpush.msra.mxu0 0.0
        %2358 = vmatpush.msra.mxu0 0.0
        %2359 = vmatpush.msra.mxu0 0.0
        %2360 = vmatpush.msra.mxu0 0.0
        %2361 = vmatpush.msra.mxu0 0.0
        %2362 = vmatpush.msra.mxu0 0.0
        %2363 = vmatpush.msra.mxu0 0.0
        %2364 = vmatpush.msra.mxu0 0.0
        %2365 = vmatpush.msra.mxu0 0.0
        %2366 = vmatpush.msra.mxu0 0.0
        %2367 = vmatpush.msra.mxu0 %v902
        %2368 = vmatpush.msra.mxu0 %v901
        %2369 = vmatpush.msra.mxu0 %v900
        %2370 = vmatpush.msra.mxu0 %v899
        %2371 = vmatmul.f32.gmra.mxu0 %v2353
        %v2372 = vpop.f32.mrf.mxu0
        %v2373 = vadd.f32 %v2348, %v2372
        %2374 = vdwg.mxu0
        %v2375 = vadd.f32 %v2373, %v907
        %v2376 = vxor.u32 %v2375, 2147483648
        %v2377 = vmul.f32 %v2376, 1.442695
        %v2378 = vpow.pop %v2377
        %v2379 = vadd.f32 %v2378, 1.0
        %v2380 = vrcp.pop %v2379
        %v2381 = vmul.f32 %v2379, %v2380
        %v2382 = vsub.f32 1.0, %v2381
        %v2383 = vmul.f32 %v2380, %v2382
        %v2384 = vadd.f32 %v2380, %v2383
        %vm2385 = vweird.f32 %v2379
        %vm2386 = vweird.f32 %v2380
        %vm2387 = vmor %vm2385, %vm2386
        %v2388 = vsel %vm2387, %v2380, %v2384
        %v2389 = vand.u32 2147483647, %v2379
        %vm2390 = vcmp.eq.f32.partialorder %v2389, 8.507059e+37
        %v2391 = vand.u32 %v2379, 2147483648
        %v2392 = vor.u32 1.1754944e-38, %v2391
        %v2393 = vsel %vm2390, %v2392, %v2388
        %v2394 = vmul.f32 1.0, %v2393
        %v2395 = vtanh.pop %v2375
        %v2396 = vmul.f32 %v2394, %v2257
        %2398 = vrot.lane.b32.xlu0 %v2395, 64
        %v2399 = vpop.permute.xlu0 %2398
        %v2401 = vmul.f32 %v2394, %v2399
        %2403 = vrot.lane.b32.xlu0 %v2401, 32
        %v2404 = vpop.permute.xlu0 %2403
        %v2406 = vadd.f32 %v2396, %v2404
        %v2407 = vtanh.pop %v2406
        %2409 = vrot.lane.b32.xlu0 %v2407, 64
        %v2410 = vpop.permute.xlu0 %2409
        %v2412 = vmul.f32 %v2394, %v2410
        %2414 = vrot.lane.b32.xlu0 %v2412, 32
        %v2415 = vpop.permute.xlu0 %2414
        %2417 = vst.msk [vmem:[#allocation7 + $0x9] sm:$0x1] %vm1075, %v2415
        %v2418 = vld [vmem:[#allocation6 + $0xa] sm:$0x1]
        %2419 = vmatpush.msra.mxu0 0.0
        %2420 = vmatpush.msra.mxu0 0.0
        %2421 = vmatpush.msra.mxu0 0.0
        %2422 = vmatpush.msra.mxu0 0.0
        %2423 = vmatpush.msra.mxu0 0.0
        %2424 = vmatpush.msra.mxu0 0.0
        %2425 = vmatpush.msra.mxu0 0.0
        %2426 = vmatpush.msra.mxu0 0.0
        %2427 = vmatpush.msra.mxu0 0.0
        %2428 = vmatpush.msra.mxu0 0.0
        %2429 = vmatpush.msra.mxu0 0.0
        %2430 = vmatpush.msra.mxu0 0.0
        %2431 = vmatpush.msra.mxu0 %v898
        %2432 = vmatpush.msra.mxu0 %v897
        %2433 = vmatpush.msra.mxu0 %v896
        %2434 = vmatpush.msra.mxu0 %v895
        %2435 = vmatmul.f32.gmra.mxu0 %v2353
        %v2436 = vpop.f32.mrf.mxu0
        %v2437 = vadd.f32 0.0, %v2436
        %2438 = vdwg.mxu0
        %v2439 = vadd.f32 %v2418, %v2437
        %v2440 = vxor.u32 %v2439, 2147483648
        %v2441 = vmul.f32 %v2440, 1.442695
        %v2442 = vpow.pop %v2441
        %v2443 = vadd.f32 %v2442, 1.0
        %v2444 = vrcp.pop %v2443
        %v2445 = vmul.f32 %v2443, %v2444
        %v2446 = vsub.f32 1.0, %v2445
        %v2447 = vmul.f32 %v2444, %v2446
        %v2448 = vadd.f32 %v2444, %v2447
        %vm2449 = vweird.f32 %v2443
        %vm2450 = vweird.f32 %v2444
        %vm2451 = vmor %vm2449, %vm2450
        %v2452 = vsel %vm2451, %v2444, %v2448
        %v2453 = vand.u32 2147483647, %v2443
        %vm2454 = vcmp.eq.f32.partialorder %v2453, 8.507059e+37
        %v2455 = vand.u32 %v2443, 2147483648
        %v2456 = vor.u32 1.1754944e-38, %v2455
        %v2457 = vsel %vm2454, %v2456, %v2452
        %v2458 = vmul.f32 1.0, %v2457
        %v2459 = vtanh.pop %v2439
        %v2460 = vmul.f32 %v2458, %v2321
        %2462 = vrot.lane.b32.xlu0 %v2459, 64
        %v2463 = vpop.permute.xlu0 %2462
        %v2465 = vmul.f32 %v2458, %v2463
        %2467 = vrot.lane.b32.xlu0 %v2465, 32
        %v2468 = vpop.permute.xlu0 %2467
        %v2470 = vadd.f32 %v2460, %v2468
        %v2471 = vtanh.pop %v2470
        %2473 = vrot.lane.b32.xlu0 %v2471, 64
        %v2474 = vpop.permute.xlu0 %2473
        %v2476 = vmul.f32 %v2458, %v2474
        %v2477 = vsel %vm913, %v2415, 0
        %2479 = vmatpush.msra.mxu0 0.0
        %2480 = vmatpush.msra.mxu0 0.0
        %2481 = vmatpush.msra.mxu0 0.0
        %2482 = vmatpush.msra.mxu0 0.0
        %2483 = vmatpush.msra.mxu0 0.0
        %2484 = vmatpush.msra.mxu0 0.0
        %2485 = vmatpush.msra.mxu0 0.0
        %2486 = vmatpush.msra.mxu0 0.0
        %2487 = vmatpush.msra.mxu0 0.0
        %2488 = vmatpush.msra.mxu0 0.0
        %2489 = vmatpush.msra.mxu0 0.0
        %2490 = vmatpush.msra.mxu0 0.0
        %2491 = vmatpush.msra.mxu0 %v906
        %2492 = vmatpush.msra.mxu0 %v905
        %2493 = vmatpush.msra.mxu0 %v904
        %2494 = vmatpush.msra.mxu0 %v903
        %2495 = vmatmul.f32.gmra.mxu0 %v2477
        %v2496 = vpop.f32.mrf.mxu0
        %v2497 = vadd.f32 0.0, %v2496
        %2498 = vdwg.mxu0
        %2500 = vrot.lane.b32.xlu0 %v2476, 32
        %v2501 = vpop.permute.xlu0 %2500
        %v2502 = vsel %vm913, %v2501, 0
        %2504 = vmatpush.msra.mxu0 0.0
        %2505 = vmatpush.msra.mxu0 0.0
        %2506 = vmatpush.msra.mxu0 0.0
        %2507 = vmatpush.msra.mxu0 0.0
        %2508 = vmatpush.msra.mxu0 0.0
        %2509 = vmatpush.msra.mxu0 0.0
        %2510 = vmatpush.msra.mxu0 0.0
        %2511 = vmatpush.msra.mxu0 0.0
        %2512 = vmatpush.msra.mxu0 0.0
        %2513 = vmatpush.msra.mxu0 0.0
        %2514 = vmatpush.msra.mxu0 0.0
        %2515 = vmatpush.msra.mxu0 0.0
        %2516 = vmatpush.msra.mxu0 %v902
        %2517 = vmatpush.msra.mxu0 %v901
        %2518 = vmatpush.msra.mxu0 %v900
        %2519 = vmatpush.msra.mxu0 %v899
        %2520 = vmatmul.f32.gmra.mxu0 %v2502
        %v2521 = vpop.f32.mrf.mxu0
        %v2522 = vadd.f32 %v2497, %v2521
        %2523 = vdwg.mxu0
        %v2524 = vadd.f32 %v2522, %v907
        %v2525 = vxor.u32 %v2524, 2147483648
        %v2526 = vmul.f32 %v2525, 1.442695
        %v2527 = vpow.pop %v2526
        %v2528 = vadd.f32 %v2527, 1.0
        %v2529 = vrcp.pop %v2528
        %v2530 = vmul.f32 %v2528, %v2529
        %v2531 = vsub.f32 1.0, %v2530
        %v2532 = vmul.f32 %v2529, %v2531
        %v2533 = vadd.f32 %v2529, %v2532
        %vm2534 = vweird.f32 %v2528
        %vm2535 = vweird.f32 %v2529
        %vm2536 = vmor %vm2534, %vm2535
        %v2537 = vsel %vm2536, %v2529, %v2533
        %v2538 = vand.u32 2147483647, %v2528
        %vm2539 = vcmp.eq.f32.partialorder %v2538, 8.507059e+37
        %v2540 = vand.u32 %v2528, 2147483648
        %v2541 = vor.u32 1.1754944e-38, %v2540
        %v2542 = vsel %vm2539, %v2541, %v2537
        %v2543 = vmul.f32 1.0, %v2542
        %v2544 = vtanh.pop %v2524
        %v2545 = vmul.f32 %v2543, %v2406
        %2547 = vrot.lane.b32.xlu0 %v2544, 64
        %v2548 = vpop.permute.xlu0 %2547
        %v2550 = vmul.f32 %v2543, %v2548
        %2552 = vrot.lane.b32.xlu0 %v2550, 32
        %v2553 = vpop.permute.xlu0 %2552
        %v2555 = vadd.f32 %v2545, %v2553
        %v2556 = vtanh.pop %v2555
        %2558 = vrot.lane.b32.xlu0 %v2556, 64
        %v2559 = vpop.permute.xlu0 %2558
        %v2561 = vmul.f32 %v2543, %v2559
        %2563 = vrot.lane.b32.xlu0 %v2561, 32
        %v2564 = vpop.permute.xlu0 %2563
        %2566 = vst.msk [vmem:[#allocation7 + $0xa] sm:$0x1] %vm1075, %v2564
        %v2567 = vld [vmem:[#allocation6 + $0xb] sm:$0x1]
        %2568 = vmatpush.msra.mxu0 0.0
        %2569 = vmatpush.msra.mxu0 0.0
        %2570 = vmatpush.msra.mxu0 0.0
        %2571 = vmatpush.msra.mxu0 0.0
        %2572 = vmatpush.msra.mxu0 0.0
        %2573 = vmatpush.msra.mxu0 0.0
        %2574 = vmatpush.msra.mxu0 0.0
        %2575 = vmatpush.msra.mxu0 0.0
        %2576 = vmatpush.msra.mxu0 0.0
        %2577 = vmatpush.msra.mxu0 0.0
        %2578 = vmatpush.msra.mxu0 0.0
        %2579 = vmatpush.msra.mxu0 0.0
        %2580 = vmatpush.msra.mxu0 %v898
        %2581 = vmatpush.msra.mxu0 %v897
        %2582 = vmatpush.msra.mxu0 %v896
        %2583 = vmatpush.msra.mxu0 %v895
        %2584 = vmatmul.f32.gmra.mxu0 %v2502
        %v2585 = vpop.f32.mrf.mxu0
        %v2586 = vadd.f32 0.0, %v2585
        %2587 = vdwg.mxu0
        %v2588 = vadd.f32 %v2567, %v2586
        %v2589 = vxor.u32 %v2588, 2147483648
        %v2590 = vmul.f32 %v2589, 1.442695
        %v2591 = vpow.pop %v2590
        %v2592 = vadd.f32 %v2591, 1.0
        %v2593 = vrcp.pop %v2592
        %v2594 = vmul.f32 %v2592, %v2593
        %v2595 = vsub.f32 1.0, %v2594
        %v2596 = vmul.f32 %v2593, %v2595
        %v2597 = vadd.f32 %v2593, %v2596
        %vm2598 = vweird.f32 %v2592
        %vm2599 = vweird.f32 %v2593
        %vm2600 = vmor %vm2598, %vm2599
        %v2601 = vsel %vm2600, %v2593, %v2597
        %v2602 = vand.u32 2147483647, %v2592
        %vm2603 = vcmp.eq.f32.partialorder %v2602, 8.507059e+37
        %v2604 = vand.u32 %v2592, 2147483648
        %v2605 = vor.u32 1.1754944e-38, %v2604
        %v2606 = vsel %vm2603, %v2605, %v2601
        %v2607 = vmul.f32 1.0, %v2606
        %v2608 = vtanh.pop %v2588
        %v2609 = vmul.f32 %v2607, %v2470
        %2611 = vrot.lane.b32.xlu0 %v2608, 64
        %v2612 = vpop.permute.xlu0 %2611
        %v2614 = vmul.f32 %v2607, %v2612
        %2616 = vrot.lane.b32.xlu0 %v2614, 32
        %v2617 = vpop.permute.xlu0 %2616
        %v2619 = vadd.f32 %v2609, %v2617
        %v2620 = vtanh.pop %v2619
        %2622 = vrot.lane.b32.xlu0 %v2620, 64
        %v2623 = vpop.permute.xlu0 %2622
        %v2625 = vmul.f32 %v2607, %v2623
        %v2626 = vsel %vm913, %v2564, 0
        %2628 = vmatpush.msra.mxu0 0.0
        %2629 = vmatpush.msra.mxu0 0.0
        %2630 = vmatpush.msra.mxu0 0.0
        %2631 = vmatpush.msra.mxu0 0.0
        %2632 = vmatpush.msra.mxu0 0.0
        %2633 = vmatpush.msra.mxu0 0.0
        %2634 = vmatpush.msra.mxu0 0.0
        %2635 = vmatpush.msra.mxu0 0.0
        %2636 = vmatpush.msra.mxu0 0.0
        %2637 = vmatpush.msra.mxu0 0.0
        %2638 = vmatpush.msra.mxu0 0.0
        %2639 = vmatpush.msra.mxu0 0.0
        %2640 = vmatpush.msra.mxu0 %v906
        %2641 = vmatpush.msra.mxu0 %v905
        %2642 = vmatpush.msra.mxu0 %v904
        %2643 = vmatpush.msra.mxu0 %v903
        %2644 = vmatmul.f32.gmra.mxu0 %v2626
        %v2645 = vpop.f32.mrf.mxu0
        %v2646 = vadd.f32 0.0, %v2645
        %2647 = vdwg.mxu0
        %2649 = vrot.lane.b32.xlu0 %v2625, 32
        %v2650 = vpop.permute.xlu0 %2649
        %v2651 = vsel %vm913, %v2650, 0
        %2653 = vmatpush.msra.mxu0 0.0
        %2654 = vmatpush.msra.mxu0 0.0
        %2655 = vmatpush.msra.mxu0 0.0
        %2656 = vmatpush.msra.mxu0 0.0
        %2657 = vmatpush.msra.mxu0 0.0
        %2658 = vmatpush.msra.mxu0 0.0
        %2659 = vmatpush.msra.mxu0 0.0
        %2660 = vmatpush.msra.mxu0 0.0
        %2661 = vmatpush.msra.mxu0 0.0
        %2662 = vmatpush.msra.mxu0 0.0
        %2663 = vmatpush.msra.mxu0 0.0
        %2664 = vmatpush.msra.mxu0 0.0
        %2665 = vmatpush.msra.mxu0 %v902
        %2666 = vmatpush.msra.mxu0 %v901
        %2667 = vmatpush.msra.mxu0 %v900
        %2668 = vmatpush.msra.mxu0 %v899
        %2669 = vmatmul.f32.gmra.mxu0 %v2651
        %v2670 = vpop.f32.mrf.mxu0
        %v2671 = vadd.f32 %v2646, %v2670
        %2672 = vdwg.mxu0
        %v2673 = vadd.f32 %v2671, %v907
        %v2674 = vxor.u32 %v2673, 2147483648
        %v2675 = vmul.f32 %v2674, 1.442695
        %v2676 = vpow.pop %v2675
        %v2677 = vadd.f32 %v2676, 1.0
        %v2678 = vrcp.pop %v2677
        %v2679 = vmul.f32 %v2677, %v2678
        %v2680 = vsub.f32 1.0, %v2679
        %v2681 = vmul.f32 %v2678, %v2680
        %v2682 = vadd.f32 %v2678, %v2681
        %vm2683 = vweird.f32 %v2677
        %vm2684 = vweird.f32 %v2678
        %vm2685 = vmor %vm2683, %vm2684
        %v2686 = vsel %vm2685, %v2678, %v2682
        %v2687 = vand.u32 2147483647, %v2677
        %vm2688 = vcmp.eq.f32.partialorder %v2687, 8.507059e+37
        %v2689 = vand.u32 %v2677, 2147483648
        %v2690 = vor.u32 1.1754944e-38, %v2689
        %v2691 = vsel %vm2688, %v2690, %v2686
        %v2692 = vmul.f32 1.0, %v2691
        %v2693 = vtanh.pop %v2673
        %v2694 = vmul.f32 %v2692, %v2555
        %2696 = vrot.lane.b32.xlu0 %v2693, 64
        %v2697 = vpop.permute.xlu0 %2696
        %v2699 = vmul.f32 %v2692, %v2697
        %2701 = vrot.lane.b32.xlu0 %v2699, 32
        %v2702 = vpop.permute.xlu0 %2701
        %v2704 = vadd.f32 %v2694, %v2702
        %v2705 = vtanh.pop %v2704
        %2707 = vrot.lane.b32.xlu0 %v2705, 64
        %v2708 = vpop.permute.xlu0 %2707
        %v2710 = vmul.f32 %v2692, %v2708
        %2712 = vrot.lane.b32.xlu0 %v2710, 32
        %v2713 = vpop.permute.xlu0 %2712
        %2715 = vst.msk [vmem:[#allocation7 + $0xb] sm:$0x1] %vm1075, %v2713
        %v2716 = vld [vmem:[#allocation6 + $0xc] sm:$0x1]
        %2717 = vmatpush.msra.mxu0 0.0
        %2718 = vmatpush.msra.mxu0 0.0
        %2719 = vmatpush.msra.mxu0 0.0
        %2720 = vmatpush.msra.mxu0 0.0
        %2721 = vmatpush.msra.mxu0 0.0
        %2722 = vmatpush.msra.mxu0 0.0
        %2723 = vmatpush.msra.mxu0 0.0
        %2724 = vmatpush.msra.mxu0 0.0
        %2725 = vmatpush.msra.mxu0 0.0
        %2726 = vmatpush.msra.mxu0 0.0
        %2727 = vmatpush.msra.mxu0 0.0
        %2728 = vmatpush.msra.mxu0 0.0
        %2729 = vmatpush.msra.mxu0 %v898
        %2730 = vmatpush.msra.mxu0 %v897
        %2731 = vmatpush.msra.mxu0 %v896
        %2732 = vmatpush.msra.mxu0 %v895
        %2733 = vmatmul.f32.gmra.mxu0 %v2651
        %v2734 = vpop.f32.mrf.mxu0
        %v2735 = vadd.f32 0.0, %v2734
        %2736 = vdwg.mxu0
        %v2737 = vadd.f32 %v2716, %v2735
        %v2738 = vxor.u32 %v2737, 2147483648
        %v2739 = vmul.f32 %v2738, 1.442695
        %v2740 = vpow.pop %v2739
        %v2741 = vadd.f32 %v2740, 1.0
        %v2742 = vrcp.pop %v2741
        %v2743 = vmul.f32 %v2741, %v2742
        %v2744 = vsub.f32 1.0, %v2743
        %v2745 = vmul.f32 %v2742, %v2744
        %v2746 = vadd.f32 %v2742, %v2745
        %vm2747 = vweird.f32 %v2741
        %vm2748 = vweird.f32 %v2742
        %vm2749 = vmor %vm2747, %vm2748
        %v2750 = vsel %vm2749, %v2742, %v2746
        %v2751 = vand.u32 2147483647, %v2741
        %vm2752 = vcmp.eq.f32.partialorder %v2751, 8.507059e+37
        %v2753 = vand.u32 %v2741, 2147483648
        %v2754 = vor.u32 1.1754944e-38, %v2753
        %v2755 = vsel %vm2752, %v2754, %v2750
        %v2756 = vmul.f32 1.0, %v2755
        %v2757 = vtanh.pop %v2737
        %v2758 = vmul.f32 %v2756, %v2619
        %2760 = vrot.lane.b32.xlu0 %v2757, 64
        %v2761 = vpop.permute.xlu0 %2760
        %v2763 = vmul.f32 %v2756, %v2761
        %2765 = vrot.lane.b32.xlu0 %v2763, 32
        %v2766 = vpop.permute.xlu0 %2765
        %v2768 = vadd.f32 %v2758, %v2766
        %v2769 = vtanh.pop %v2768
        %2771 = vrot.lane.b32.xlu0 %v2769, 64
        %v2772 = vpop.permute.xlu0 %2771
        %v2774 = vmul.f32 %v2756, %v2772
        %v2775 = vsel %vm913, %v2713, 0
        %2777 = vmatpush.msra.mxu0 0.0
        %2778 = vmatpush.msra.mxu0 0.0
        %2779 = vmatpush.msra.mxu0 0.0
        %2780 = vmatpush.msra.mxu0 0.0
        %2781 = vmatpush.msra.mxu0 0.0
        %2782 = vmatpush.msra.mxu0 0.0
        %2783 = vmatpush.msra.mxu0 0.0
        %2784 = vmatpush.msra.mxu0 0.0
        %2785 = vmatpush.msra.mxu0 0.0
        %2786 = vmatpush.msra.mxu0 0.0
        %2787 = vmatpush.msra.mxu0 0.0
        %2788 = vmatpush.msra.mxu0 0.0
        %2789 = vmatpush.msra.mxu0 %v906
        %2790 = vmatpush.msra.mxu0 %v905
        %2791 = vmatpush.msra.mxu0 %v904
        %2792 = vmatpush.msra.mxu0 %v903
        %2793 = vmatmul.f32.gmra.mxu0 %v2775
        %v2794 = vpop.f32.mrf.mxu0
        %v2795 = vadd.f32 0.0, %v2794
        %2796 = vdwg.mxu0
        %2798 = vrot.lane.b32.xlu0 %v2774, 32
        %v2799 = vpop.permute.xlu0 %2798
        %v2800 = vsel %vm913, %v2799, 0
        %2802 = vmatpush.msra.mxu0 0.0
        %2803 = vmatpush.msra.mxu0 0.0
        %2804 = vmatpush.msra.mxu0 0.0
        %2805 = vmatpush.msra.mxu0 0.0
        %2806 = vmatpush.msra.mxu0 0.0
        %2807 = vmatpush.msra.mxu0 0.0
        %2808 = vmatpush.msra.mxu0 0.0
        %2809 = vmatpush.msra.mxu0 0.0
        %2810 = vmatpush.msra.mxu0 0.0
        %2811 = vmatpush.msra.mxu0 0.0
        %2812 = vmatpush.msra.mxu0 0.0
        %2813 = vmatpush.msra.mxu0 0.0
        %2814 = vmatpush.msra.mxu0 %v902
        %2815 = vmatpush.msra.mxu0 %v901
        %2816 = vmatpush.msra.mxu0 %v900
        %2817 = vmatpush.msra.mxu0 %v899
        %2818 = vmatmul.f32.gmra.mxu0 %v2800
        %v2819 = vpop.f32.mrf.mxu0
        %v2820 = vadd.f32 %v2795, %v2819
        %2821 = vdwg.mxu0
        %v2822 = vadd.f32 %v2820, %v907
        %v2823 = vxor.u32 %v2822, 2147483648
        %v2824 = vmul.f32 %v2823, 1.442695
        %v2825 = vpow.pop %v2824
        %v2826 = vadd.f32 %v2825, 1.0
        %v2827 = vrcp.pop %v2826
        %v2828 = vmul.f32 %v2826, %v2827
        %v2829 = vsub.f32 1.0, %v2828
        %v2830 = vmul.f32 %v2827, %v2829
        %v2831 = vadd.f32 %v2827, %v2830
        %vm2832 = vweird.f32 %v2826
        %vm2833 = vweird.f32 %v2827
        %vm2834 = vmor %vm2832, %vm2833
        %v2835 = vsel %vm2834, %v2827, %v2831
        %v2836 = vand.u32 2147483647, %v2826
        %vm2837 = vcmp.eq.f32.partialorder %v2836, 8.507059e+37
        %v2838 = vand.u32 %v2826, 2147483648
        %v2839 = vor.u32 1.1754944e-38, %v2838
        %v2840 = vsel %vm2837, %v2839, %v2835
        %v2841 = vmul.f32 1.0, %v2840
        %v2842 = vtanh.pop %v2822
        %v2843 = vmul.f32 %v2841, %v2704
        %2845 = vrot.lane.b32.xlu0 %v2842, 64
        %v2846 = vpop.permute.xlu0 %2845
        %v2848 = vmul.f32 %v2841, %v2846
        %2850 = vrot.lane.b32.xlu0 %v2848, 32
        %v2851 = vpop.permute.xlu0 %2850
        %v2853 = vadd.f32 %v2843, %v2851
        %v2854 = vtanh.pop %v2853
        %2856 = vrot.lane.b32.xlu0 %v2854, 64
        %v2857 = vpop.permute.xlu0 %2856
        %v2859 = vmul.f32 %v2841, %v2857
        %2861 = vrot.lane.b32.xlu0 %v2859, 32
        %v2862 = vpop.permute.xlu0 %2861
        %2864 = vst.msk [vmem:[#allocation7 + $0xc] sm:$0x1] %vm1075, %v2862
        %v2865 = vld [vmem:[#allocation6 + $0xd] sm:$0x1]
        %2866 = vmatpush.msra.mxu0 0.0
        %2867 = vmatpush.msra.mxu0 0.0
        %2868 = vmatpush.msra.mxu0 0.0
        %2869 = vmatpush.msra.mxu0 0.0
        %2870 = vmatpush.msra.mxu0 0.0
        %2871 = vmatpush.msra.mxu0 0.0
        %2872 = vmatpush.msra.mxu0 0.0
        %2873 = vmatpush.msra.mxu0 0.0
        %2874 = vmatpush.msra.mxu0 0.0
        %2875 = vmatpush.msra.mxu0 0.0
        %2876 = vmatpush.msra.mxu0 0.0
        %2877 = vmatpush.msra.mxu0 0.0
        %2878 = vmatpush.msra.mxu0 %v898
        %2879 = vmatpush.msra.mxu0 %v897
        %2880 = vmatpush.msra.mxu0 %v896
        %2881 = vmatpush.msra.mxu0 %v895
        %2882 = vmatmul.f32.gmra.mxu0 %v2800
        %v2883 = vpop.f32.mrf.mxu0
        %v2884 = vadd.f32 0.0, %v2883
        %2885 = vdwg.mxu0
        %v2886 = vadd.f32 %v2865, %v2884
        %v2887 = vxor.u32 %v2886, 2147483648
        %v2888 = vmul.f32 %v2887, 1.442695
        %v2889 = vpow.pop %v2888
        %v2890 = vadd.f32 %v2889, 1.0
        %v2891 = vrcp.pop %v2890
        %v2892 = vmul.f32 %v2890, %v2891
        %v2893 = vsub.f32 1.0, %v2892
        %v2894 = vmul.f32 %v2891, %v2893
        %v2895 = vadd.f32 %v2891, %v2894
        %vm2896 = vweird.f32 %v2890
        %vm2897 = vweird.f32 %v2891
        %vm2898 = vmor %vm2896, %vm2897
        %v2899 = vsel %vm2898, %v2891, %v2895
        %v2900 = vand.u32 2147483647, %v2890
        %vm2901 = vcmp.eq.f32.partialorder %v2900, 8.507059e+37
        %v2902 = vand.u32 %v2890, 2147483648
        %v2903 = vor.u32 1.1754944e-38, %v2902
        %v2904 = vsel %vm2901, %v2903, %v2899
        %v2905 = vmul.f32 1.0, %v2904
        %v2906 = vtanh.pop %v2886
        %v2907 = vmul.f32 %v2905, %v2768
        %2909 = vrot.lane.b32.xlu0 %v2906, 64
        %v2910 = vpop.permute.xlu0 %2909
        %v2912 = vmul.f32 %v2905, %v2910
        %2914 = vrot.lane.b32.xlu0 %v2912, 32
        %v2915 = vpop.permute.xlu0 %2914
        %v2917 = vadd.f32 %v2907, %v2915
        %v2918 = vtanh.pop %v2917
        %2920 = vrot.lane.b32.xlu0 %v2918, 64
        %v2921 = vpop.permute.xlu0 %2920
        %v2923 = vmul.f32 %v2905, %v2921
        %v2924 = vsel %vm913, %v2862, 0
        %2926 = vmatpush.msra.mxu0 0.0
        %2927 = vmatpush.msra.mxu0 0.0
        %2928 = vmatpush.msra.mxu0 0.0
        %2929 = vmatpush.msra.mxu0 0.0
        %2930 = vmatpush.msra.mxu0 0.0
        %2931 = vmatpush.msra.mxu0 0.0
        %2932 = vmatpush.msra.mxu0 0.0
        %2933 = vmatpush.msra.mxu0 0.0
        %2934 = vmatpush.msra.mxu0 0.0
        %2935 = vmatpush.msra.mxu0 0.0
        %2936 = vmatpush.msra.mxu0 0.0
        %2937 = vmatpush.msra.mxu0 0.0
        %2938 = vmatpush.msra.mxu0 %v906
        %2939 = vmatpush.msra.mxu0 %v905
        %2940 = vmatpush.msra.mxu0 %v904
        %2941 = vmatpush.msra.mxu0 %v903
        %2942 = vmatmul.f32.gmra.mxu0 %v2924
        %v2943 = vpop.f32.mrf.mxu0
        %v2944 = vadd.f32 0.0, %v2943
        %2945 = vdwg.mxu0
        %2947 = vrot.lane.b32.xlu0 %v2923, 32
        %v2948 = vpop.permute.xlu0 %2947
        %v2949 = vsel %vm913, %v2948, 0
        %2951 = vmatpush.msra.mxu0 0.0
        %2952 = vmatpush.msra.mxu0 0.0
        %2953 = vmatpush.msra.mxu0 0.0
        %2954 = vmatpush.msra.mxu0 0.0
        %2955 = vmatpush.msra.mxu0 0.0
        %2956 = vmatpush.msra.mxu0 0.0
        %2957 = vmatpush.msra.mxu0 0.0
        %2958 = vmatpush.msra.mxu0 0.0
        %2959 = vmatpush.msra.mxu0 0.0
        %2960 = vmatpush.msra.mxu0 0.0
        %2961 = vmatpush.msra.mxu0 0.0
        %2962 = vmatpush.msra.mxu0 0.0
        %2963 = vmatpush.msra.mxu0 %v902
        %2964 = vmatpush.msra.mxu0 %v901
        %2965 = vmatpush.msra.mxu0 %v900
        %2966 = vmatpush.msra.mxu0 %v899
        %2967 = vmatmul.f32.gmra.mxu0 %v2949
        %v2968 = vpop.f32.mrf.mxu0
        %v2969 = vadd.f32 %v2944, %v2968
        %2970 = vdwg.mxu0
        %v2971 = vadd.f32 %v2969, %v907
        %v2972 = vxor.u32 %v2971, 2147483648
        %v2973 = vmul.f32 %v2972, 1.442695
        %v2974 = vpow.pop %v2973
        %v2975 = vadd.f32 %v2974, 1.0
        %v2976 = vrcp.pop %v2975
        %v2977 = vmul.f32 %v2975, %v2976
        %v2978 = vsub.f32 1.0, %v2977
        %v2979 = vmul.f32 %v2976, %v2978
        %v2980 = vadd.f32 %v2976, %v2979
        %vm2981 = vweird.f32 %v2975
        %vm2982 = vweird.f32 %v2976
        %vm2983 = vmor %vm2981, %vm2982
        %v2984 = vsel %vm2983, %v2976, %v2980
        %v2985 = vand.u32 2147483647, %v2975
        %vm2986 = vcmp.eq.f32.partialorder %v2985, 8.507059e+37
        %v2987 = vand.u32 %v2975, 2147483648
        %v2988 = vor.u32 1.1754944e-38, %v2987
        %v2989 = vsel %vm2986, %v2988, %v2984
        %v2990 = vmul.f32 1.0, %v2989
        %v2991 = vtanh.pop %v2971
        %v2992 = vmul.f32 %v2990, %v2853
        %2994 = vrot.lane.b32.xlu0 %v2991, 64
        %v2995 = vpop.permute.xlu0 %2994
        %v2997 = vmul.f32 %v2990, %v2995
        %2999 = vrot.lane.b32.xlu0 %v2997, 32
        %v3000 = vpop.permute.xlu0 %2999
        %v3002 = vadd.f32 %v2992, %v3000
        %v3003 = vtanh.pop %v3002
        %3005 = vrot.lane.b32.xlu0 %v3003, 64
        %v3006 = vpop.permute.xlu0 %3005
        %v3008 = vmul.f32 %v2990, %v3006
        %3010 = vrot.lane.b32.xlu0 %v3008, 32
        %v3011 = vpop.permute.xlu0 %3010
        %3013 = vst.msk [vmem:[#allocation7 + $0xd] sm:$0x1] %vm1075, %v3011
        %v3014 = vld [vmem:[#allocation6 + $0xe] sm:$0x1]
        %3015 = vmatpush.msra.mxu0 0.0
        %3016 = vmatpush.msra.mxu0 0.0
        %3017 = vmatpush.msra.mxu0 0.0
        %3018 = vmatpush.msra.mxu0 0.0
        %3019 = vmatpush.msra.mxu0 0.0
        %3020 = vmatpush.msra.mxu0 0.0
        %3021 = vmatpush.msra.mxu0 0.0
        %3022 = vmatpush.msra.mxu0 0.0
        %3023 = vmatpush.msra.mxu0 0.0
        %3024 = vmatpush.msra.mxu0 0.0
        %3025 = vmatpush.msra.mxu0 0.0
        %3026 = vmatpush.msra.mxu0 0.0
        %3027 = vmatpush.msra.mxu0 %v898
        %3028 = vmatpush.msra.mxu0 %v897
        %3029 = vmatpush.msra.mxu0 %v896
        %3030 = vmatpush.msra.mxu0 %v895
        %3031 = vmatmul.f32.gmra.mxu0 %v2949
        %v3032 = vpop.f32.mrf.mxu0
        %v3033 = vadd.f32 0.0, %v3032
        %3034 = vdwg.mxu0
        %v3035 = vadd.f32 %v3014, %v3033
        %v3036 = vxor.u32 %v3035, 2147483648
        %v3037 = vmul.f32 %v3036, 1.442695
        %v3038 = vpow.pop %v3037
        %v3039 = vadd.f32 %v3038, 1.0
        %v3040 = vrcp.pop %v3039
        %v3041 = vmul.f32 %v3039, %v3040
        %v3042 = vsub.f32 1.0, %v3041
        %v3043 = vmul.f32 %v3040, %v3042
        %v3044 = vadd.f32 %v3040, %v3043
        %vm3045 = vweird.f32 %v3039
        %vm3046 = vweird.f32 %v3040
        %vm3047 = vmor %vm3045, %vm3046
        %v3048 = vsel %vm3047, %v3040, %v3044
        %v3049 = vand.u32 2147483647, %v3039
        %vm3050 = vcmp.eq.f32.partialorder %v3049, 8.507059e+37
        %v3051 = vand.u32 %v3039, 2147483648
        %v3052 = vor.u32 1.1754944e-38, %v3051
        %v3053 = vsel %vm3050, %v3052, %v3048
        %v3054 = vmul.f32 1.0, %v3053
        %v3055 = vtanh.pop %v3035
        %v3056 = vmul.f32 %v3054, %v2917
        %3058 = vrot.lane.b32.xlu0 %v3055, 64
        %v3059 = vpop.permute.xlu0 %3058
        %v3061 = vmul.f32 %v3054, %v3059
        %3063 = vrot.lane.b32.xlu0 %v3061, 32
        %v3064 = vpop.permute.xlu0 %3063
        %v3066 = vadd.f32 %v3056, %v3064
        %v3067 = vtanh.pop %v3066
        %3069 = vrot.lane.b32.xlu0 %v3067, 64
        %v3070 = vpop.permute.xlu0 %3069
        %v3072 = vmul.f32 %v3054, %v3070
        %v3073 = vsel %vm913, %v3011, 0
        %3075 = vmatpush.msra.mxu0 0.0
        %3076 = vmatpush.msra.mxu0 0.0
        %3077 = vmatpush.msra.mxu0 0.0
        %3078 = vmatpush.msra.mxu0 0.0
        %3079 = vmatpush.msra.mxu0 0.0
        %3080 = vmatpush.msra.mxu0 0.0
        %3081 = vmatpush.msra.mxu0 0.0
        %3082 = vmatpush.msra.mxu0 0.0
        %3083 = vmatpush.msra.mxu0 0.0
        %3084 = vmatpush.msra.mxu0 0.0
        %3085 = vmatpush.msra.mxu0 0.0
        %3086 = vmatpush.msra.mxu0 0.0
        %3087 = vmatpush.msra.mxu0 %v906
        %3088 = vmatpush.msra.mxu0 %v905
        %3089 = vmatpush.msra.mxu0 %v904
        %3090 = vmatpush.msra.mxu0 %v903
        %3091 = vmatmul.f32.gmra.mxu0 %v3073
        %v3092 = vpop.f32.mrf.mxu0
        %v3093 = vadd.f32 0.0, %v3092
        %3094 = vdwg.mxu0
        %3096 = vrot.lane.b32.xlu0 %v3072, 32
        %v3097 = vpop.permute.xlu0 %3096
        %v3098 = vsel %vm913, %v3097, 0
        %3100 = vmatpush.msra.mxu0 0.0
        %3101 = vmatpush.msra.mxu0 0.0
        %3102 = vmatpush.msra.mxu0 0.0
        %3103 = vmatpush.msra.mxu0 0.0
        %3104 = vmatpush.msra.mxu0 0.0
        %3105 = vmatpush.msra.mxu0 0.0
        %3106 = vmatpush.msra.mxu0 0.0
        %3107 = vmatpush.msra.mxu0 0.0
        %3108 = vmatpush.msra.mxu0 0.0
        %3109 = vmatpush.msra.mxu0 0.0
        %3110 = vmatpush.msra.mxu0 0.0
        %3111 = vmatpush.msra.mxu0 0.0
        %3112 = vmatpush.msra.mxu0 %v902
        %3113 = vmatpush.msra.mxu0 %v901
        %3114 = vmatpush.msra.mxu0 %v900
        %3115 = vmatpush.msra.mxu0 %v899
        %3116 = vmatmul.f32.gmra.mxu0 %v3098
        %v3117 = vpop.f32.mrf.mxu0
        %v3118 = vadd.f32 %v3093, %v3117
        %3119 = vdwg.mxu0
        %v3120 = vadd.f32 %v3118, %v907
        %v3121 = vxor.u32 %v3120, 2147483648
        %v3122 = vmul.f32 %v3121, 1.442695
        %v3123 = vpow.pop %v3122
        %v3124 = vadd.f32 %v3123, 1.0
        %v3125 = vrcp.pop %v3124
        %v3126 = vmul.f32 %v3124, %v3125
        %v3127 = vsub.f32 1.0, %v3126
        %v3128 = vmul.f32 %v3125, %v3127
        %v3129 = vadd.f32 %v3125, %v3128
        %vm3130 = vweird.f32 %v3124
        %vm3131 = vweird.f32 %v3125
        %vm3132 = vmor %vm3130, %vm3131
        %v3133 = vsel %vm3132, %v3125, %v3129
        %v3134 = vand.u32 2147483647, %v3124
        %vm3135 = vcmp.eq.f32.partialorder %v3134, 8.507059e+37
        %v3136 = vand.u32 %v3124, 2147483648
        %v3137 = vor.u32 1.1754944e-38, %v3136
        %v3138 = vsel %vm3135, %v3137, %v3133
        %v3139 = vmul.f32 1.0, %v3138
        %v3140 = vtanh.pop %v3120
        %v3141 = vmul.f32 %v3139, %v3002
        %3143 = vrot.lane.b32.xlu0 %v3140, 64
        %v3144 = vpop.permute.xlu0 %3143
        %v3146 = vmul.f32 %v3139, %v3144
        %3148 = vrot.lane.b32.xlu0 %v3146, 32
        %v3149 = vpop.permute.xlu0 %3148
        %v3151 = vadd.f32 %v3141, %v3149
        %v3152 = vtanh.pop %v3151
        %3154 = vrot.lane.b32.xlu0 %v3152, 64
        %v3155 = vpop.permute.xlu0 %3154
        %v3157 = vmul.f32 %v3139, %v3155
        %3159 = vrot.lane.b32.xlu0 %v3157, 32
        %v3160 = vpop.permute.xlu0 %3159
        %3162 = vst.msk [vmem:[#allocation7 + $0xe] sm:$0x1] %vm1075, %v3160
        %v3163 = vld [vmem:[#allocation6 + $0xf] sm:$0x1]
        %3164 = vmatpush.msra.mxu0 0.0
        %3165 = vmatpush.msra.mxu0 0.0
        %3166 = vmatpush.msra.mxu0 0.0
        %3167 = vmatpush.msra.mxu0 0.0
        %3168 = vmatpush.msra.mxu0 0.0
        %3169 = vmatpush.msra.mxu0 0.0
        %3170 = vmatpush.msra.mxu0 0.0
        %3171 = vmatpush.msra.mxu0 0.0
        %3172 = vmatpush.msra.mxu0 0.0
        %3173 = vmatpush.msra.mxu0 0.0
        %3174 = vmatpush.msra.mxu0 0.0
        %3175 = vmatpush.msra.mxu0 0.0
        %3176 = vmatpush.msra.mxu0 %v898
        %3177 = vmatpush.msra.mxu0 %v897
        %3178 = vmatpush.msra.mxu0 %v896
        %3179 = vmatpush.msra.mxu0 %v895
        %3180 = vmatmul.f32.gmra.mxu0 %v3098
        %v3181 = vpop.f32.mrf.mxu0
        %v3182 = vadd.f32 0.0, %v3181
        %3183 = vdwg.mxu0
        %v3184 = vadd.f32 %v3163, %v3182
        %v3185 = vxor.u32 %v3184, 2147483648
        %v3186 = vmul.f32 %v3185, 1.442695
        %v3187 = vpow.pop %v3186
        %v3188 = vadd.f32 %v3187, 1.0
        %v3189 = vrcp.pop %v3188
        %v3190 = vmul.f32 %v3188, %v3189
        %v3191 = vsub.f32 1.0, %v3190
        %v3192 = vmul.f32 %v3189, %v3191
        %v3193 = vadd.f32 %v3189, %v3192
        %vm3194 = vweird.f32 %v3188
        %vm3195 = vweird.f32 %v3189
        %vm3196 = vmor %vm3194, %vm3195
        %v3197 = vsel %vm3196, %v3189, %v3193
        %v3198 = vand.u32 2147483647, %v3188
        %vm3199 = vcmp.eq.f32.partialorder %v3198, 8.507059e+37
        %v3200 = vand.u32 %v3188, 2147483648
        %v3201 = vor.u32 1.1754944e-38, %v3200
        %v3202 = vsel %vm3199, %v3201, %v3197
        %v3203 = vmul.f32 1.0, %v3202
        %v3204 = vtanh.pop %v3184
        %v3205 = vmul.f32 %v3203, %v3066
        %3207 = vrot.lane.b32.xlu0 %v3204, 64
        %v3208 = vpop.permute.xlu0 %3207
        %v3210 = vmul.f32 %v3203, %v3208
        %3212 = vrot.lane.b32.xlu0 %v3210, 32
        %v3213 = vpop.permute.xlu0 %3212
        %v3215 = vadd.f32 %v3205, %v3213
        %v3216 = vtanh.pop %v3215
        %3218 = vrot.lane.b32.xlu0 %v3216, 64
        %v3219 = vpop.permute.xlu0 %3218
        %v3221 = vmul.f32 %v3203, %v3219
        %v3222 = vsel %vm913, %v3160, 0
        %3224 = vmatpush.msra.mxu0 0.0
        %3225 = vmatpush.msra.mxu0 0.0
        %3226 = vmatpush.msra.mxu0 0.0
        %3227 = vmatpush.msra.mxu0 0.0
        %3228 = vmatpush.msra.mxu0 0.0
        %3229 = vmatpush.msra.mxu0 0.0
        %3230 = vmatpush.msra.mxu0 0.0
        %3231 = vmatpush.msra.mxu0 0.0
        %3232 = vmatpush.msra.mxu0 0.0
        %3233 = vmatpush.msra.mxu0 0.0
        %3234 = vmatpush.msra.mxu0 0.0
        %3235 = vmatpush.msra.mxu0 0.0
        %3236 = vmatpush.msra.mxu0 %v906
        %3237 = vmatpush.msra.mxu0 %v905
        %3238 = vmatpush.msra.mxu0 %v904
        %3239 = vmatpush.msra.mxu0 %v903
        %3240 = vmatmul.f32.gmra.mxu0 %v3222
        %v3241 = vpop.f32.mrf.mxu0
        %v3242 = vadd.f32 0.0, %v3241
        %3243 = vdwg.mxu0
        %3245 = vrot.lane.b32.xlu0 %v3221, 32
        %v3246 = vpop.permute.xlu0 %3245
        %v3247 = vsel %vm913, %v3246, 0
        %3249 = vmatpush.msra.mxu0 0.0
        %3250 = vmatpush.msra.mxu0 0.0
        %3251 = vmatpush.msra.mxu0 0.0
        %3252 = vmatpush.msra.mxu0 0.0
        %3253 = vmatpush.msra.mxu0 0.0
        %3254 = vmatpush.msra.mxu0 0.0
        %3255 = vmatpush.msra.mxu0 0.0
        %3256 = vmatpush.msra.mxu0 0.0
        %3257 = vmatpush.msra.mxu0 0.0
        %3258 = vmatpush.msra.mxu0 0.0
        %3259 = vmatpush.msra.mxu0 0.0
        %3260 = vmatpush.msra.mxu0 0.0
        %3261 = vmatpush.msra.mxu0 %v902
        %3262 = vmatpush.msra.mxu0 %v901
        %3263 = vmatpush.msra.mxu0 %v900
        %3264 = vmatpush.msra.mxu0 %v899
        %3265 = vmatmul.f32.gmra.mxu0 %v3247
        %v3266 = vpop.f32.mrf.mxu0
        %v3267 = vadd.f32 %v3242, %v3266
        %3268 = vdwg.mxu0
        %v3269 = vadd.f32 %v3267, %v907
        %v3270 = vxor.u32 %v3269, 2147483648
        %v3271 = vmul.f32 %v3270, 1.442695
        %v3272 = vpow.pop %v3271
        %v3273 = vadd.f32 %v3272, 1.0
        %v3274 = vrcp.pop %v3273
        %v3275 = vmul.f32 %v3273, %v3274
        %v3276 = vsub.f32 1.0, %v3275
        %v3277 = vmul.f32 %v3274, %v3276
        %v3278 = vadd.f32 %v3274, %v3277
        %vm3279 = vweird.f32 %v3273
        %vm3280 = vweird.f32 %v3274
        %vm3281 = vmor %vm3279, %vm3280
        %v3282 = vsel %vm3281, %v3274, %v3278
        %v3283 = vand.u32 2147483647, %v3273
        %vm3284 = vcmp.eq.f32.partialorder %v3283, 8.507059e+37
        %v3285 = vand.u32 %v3273, 2147483648
        %v3286 = vor.u32 1.1754944e-38, %v3285
        %v3287 = vsel %vm3284, %v3286, %v3282
        %v3288 = vmul.f32 1.0, %v3287
        %v3289 = vtanh.pop %v3269
        %v3290 = vmul.f32 %v3288, %v3151
        %3292 = vrot.lane.b32.xlu0 %v3289, 64
        %v3293 = vpop.permute.xlu0 %3292
        %v3295 = vmul.f32 %v3288, %v3293
        %3297 = vrot.lane.b32.xlu0 %v3295, 32
        %v3298 = vpop.permute.xlu0 %3297
        %v3300 = vadd.f32 %v3290, %v3298
        %v3301 = vtanh.pop %v3300
        %3303 = vrot.lane.b32.xlu0 %v3301, 64
        %v3304 = vpop.permute.xlu0 %3303
        %v3306 = vmul.f32 %v3288, %v3304
        %3308 = vrot.lane.b32.xlu0 %v3306, 32
        %v3309 = vpop.permute.xlu0 %3308
        %3311 = vst.msk [vmem:[#allocation7 + $0xf] sm:$0x1] %vm1075, %v3309
        %3313 = vst.msk [vmem:[#allocation2] sm:$0x1] %vm1075, %v3246
        %3315 = vrot.lane.b32.xlu0 %v3215, 96
        %v3316 = vpop.permute.xlu0 %3315
        %3318 = vst.msk [vmem:[#allocation3] sm:$0x1] %vm1075, %v3316
        %3319 = vst.msk [vmem:[#allocation4] sm:$0x1] %vm1075, %v3309
        %3321 = vrot.lane.b32.xlu0 %v3300, 96
        %v3322 = vpop.permute.xlu0 %3321
        %3324 = vst.msk [vmem:[#allocation5] sm:$0x1] %vm1075, %v3322
        %v3325 = vld [vmem:[#allocation7] sm:$0xff]
        %v3326 = vld [vmem:[#allocation7 + $0x8] sm:$0xff]
        %v3327 = vld [vmem:[%s13] sm:$0xff]
        %v3328 = vld [vmem:[%s13 + $0x8] sm:$0xff]
        %v3329 = vld [vmem:[%s13 + $0x10] sm:$0xff]
        %v3330 = vld [vmem:[%s13 + $0x18] sm:$0xff]
        %v3331 = vld [vmem:[#allocation16] sm:$0x1]
        %v3333 = vperm.slane %v3331, 0
        %v3336 = vsel %vm913, %v3325, 0
        %v3339 = vsel %vm913, %v3326, 0
        %3341 = vmatpush.msra.mxu0 0.0
        %3342 = vmatpush.msra.mxu0 0.0
        %3343 = vmatpush.msra.mxu0 0.0
        %3344 = vmatpush.msra.mxu0 0.0
        %3345 = vmatpush.msra.mxu0 0.0
        %3346 = vmatpush.msra.mxu0 0.0
        %3347 = vmatpush.msra.mxu0 0.0
        %3348 = vmatpush.msra.mxu0 0.0
        %3349 = vmatpush.msra.mxu0 0.0
        %3350 = vmatpush.msra.mxu0 0.0
        %3351 = vmatpush.msra.mxu0 0.0
        %3352 = vmatpush.msra.mxu0 0.0
        %3353 = vmatpush.msra.mxu0 %v3330
        %3354 = vmatpush.msra.mxu0 %v3329
        %3355 = vmatpush.msra.mxu0 %v3328
        %3356 = vmatpush.msra.mxu0 %v3327
        %3357 = vmatmul.f32.gmra.mxu0 %v3336
        %v3358 = vpop.f32.mrf.mxu0
        %v3359 = vadd.f32 %v3333, %v3358
        %3360 = vmatmul.f32.gmra.mxu0 %v3339
        %v3361 = vpop.f32.mrf.mxu0
        %v3362 = vadd.f32 %v3333, %v3361
        %3363 = vdwg.mxu0
        %vm3364 = vcmask 125952
        %3365 = vst.msk [vmem:[%s630] sm:$0xf] %vm3364, %v675
        %3366 = vxpose.xlu0.b32.start [1/16] %v3359, 128
        %3367 = vxpose.xlu0.b32.cont [2/16] %v3362, 128
        %3368 = vxpose.xlu0.b32.cont [3/16] 0.0, 128
        %3369 = vxpose.xlu0.b32.cont [4/16] 0.0, 128
        %3370 = vxpose.xlu0.b32.cont [5/16] 0.0, 128
        %3371 = vxpose.xlu0.b32.cont [6/16] 0.0, 128
        %3372 = vxpose.xlu0.b32.cont [7/16] 0.0, 128
        %3373 = vxpose.xlu0.b32.cont [8/16] 0.0, 128
        %3374 = vxpose.xlu0.b32.cont [9/16] 0.0, 128
        %3375 = vxpose.xlu0.b32.cont [10/16] 0.0, 128
        %3376 = vxpose.xlu0.b32.cont [11/16] 0.0, 128
        %3377 = vxpose.xlu0.b32.cont [12/16] 0.0, 128
        %3378 = vxpose.xlu0.b32.cont [13/16] 0.0, 128
        %3379 = vxpose.xlu0.b32.cont [14/16] 0.0, 128
        %3380 = vxpose.xlu0.b32.cont [15/16] 0.0, 128
        %3381 = vxpose.xlu0.b32.end [16/16] 0.0, 128
        %v3382 = vpop.trf.xlu0
        %v3383 = vpop.trf.xlu0
        %v3384 = vpop.trf.xlu0
        %v3385 = vpop.trf.xlu0
        %v3386 = vpop.trf.xlu0
        %v3387 = vpop.trf.xlu0
        %v3388 = vpop.trf.xlu0
        %v3389 = vpop.trf.xlu0
        %v3390 = vpop.trf.xlu0
        %v3391 = vpop.trf.xlu0
        %v3392 = vpop.trf.xlu0
        %v3393 = vpop.trf.xlu0
        %v3394 = vpop.trf.xlu0
        %v3395 = vpop.trf.xlu0
        %v3396 = vpop.trf.xlu0
        %v3397 = vpop.trf.xlu0
        %v3399 = vrot.slane %v3382, 4
        %v3401 = vadd.f32 %v675, %v3399
        %vm3402 = vcmask 130052
        %3403 = vst.msk [vmem:[%s630] sm:$0xf0] %vm3402, %v3401
        %s3404 = sand.u32 %s392, 1
        %s3405 = scalar_lea.sflag [#allocation10], %s3404
        %s3406 = sand.u32 %s392, 1
        %s3407 = smul.addr %s3406, 8
        %s3408 = scalar_lea.vmem [#allocation17], %s3407
        // Predicated region
        $region105: #{flow_step_forward.1} parent=79 // pred_check
          %p3409 = pneg %p402
        $region106: #{flow_step_forward.1} parent=79 // pred_check_branch
          %3411 = sbr.rel (%p3409) target = $region108
        $region107: #{flow_step_forward.1} parent=79 // pred_region
          %3413 = vsyncadd %s3405, 0
          %s3414 = sadd.s32 %s39, %s38
          %s3415 = smul.addr %s3414, 8
          %s3416 = scalar_lea.hbm %s15, %s3415
          %s3418 = sshll.u32 %s3408, 4
          %s3419 = int_to_ptr.vmem [resolvable:$true] %s3418
          %s3420 = sshll.u32 %s3416, 4
          %s3421 = int_to_ptr.hbm [resolvable:$true] %s3420
          %3423 = dma.vmem_to_hbm [thread:$0]  %s3419, 128, %s3421, %s3405
        $region108: #{flow_step_forward.1} parent=79 // pred_fallthru
          _
      $region80: #{flow_step_forward.1} parent=5 // pred_fallthru
        _
      %p3424 = scmp.le.s32.totalorder 2, %s29
      // Predicated region
      $region109: #{flow_step_forward.1} parent=5 // pred_check
        %p3425 = pneg %p3424
      $region110: #{flow_step_forward.1} parent=5 // pred_check_branch
        %3427 = sbr.rel (%p3425) target = $region112
      $region111: #{flow_step_forward.1} parent=5 // pred_region
        %s3428 = ssub.s32 %s29, 2
        // Predicated region
        $region113: #{flow_step_forward.1} parent=111 // pred_check
          %p3429 = pneg %p408
        $region114: #{flow_step_forward.1} parent=111 // pred_check_branch
          %3431 = sbr.rel (%p3429) target = $region116
        $region115: #{flow_step_forward.1} parent=111 // pred_region
          %s3432 = sand.u32 %s393, 1
          %s3433 = scalar_lea.sflag [#allocation10], %s3432
          %s3434 = sand.u32 %s393, 1
          %s3435 = smul.addr %s3434, 8
          %s3436 = scalar_lea.vmem [#allocation17], %s3435
          %3438 = dma.done %s3433, 128
        $region116: #{flow_step_forward.1} parent=111 // pred_fallthru
          _
      $region112: #{flow_step_forward.1} parent=5 // pred_fallthru
        _
    $region6: #{flow_step_forward.1} parent=1 // loop_footer
      %s33 = sadd.s32 1, %s29
    $region7: #{flow_step_forward.1} parent=1 // loop_footer_branch
      %28 = sbr.rel target = $region3
    $region8: #{flow_step_forward.1} parent=1 // loop_exit
      _
    %3439 = vsyncpa [#allocation9], 1
    %s3440 = scalar_lea.sflag [#allocation9], 1
    %3441 = vsyncpa %s3440, 1
    %3442 = vsyncpa [#allocation12], 1
    %3443 = vsyncpa [#allocation15], 1
    %3444 = vsyncpa [#allocation10], 1
    %s3445 = scalar_lea.sflag [#allocation10], 1
    %3446 = vsyncpa %s3445, 1

</llo_original>
